<compile_context>
chip_gen: v5e
topology: v5e:2x2
jax: 0.10.0
libtpu: 0.0.40
codegen_flags: <defaults>
</compile_context>

<pallas_src>
import math
import functools

import jax
import jax.numpy as jnp
from jax.experimental import pallas as pl
from jax.experimental.pallas import tpu as pltpu

NEG_INF = -1e30


# ----------------------------- hardware-aware budget --------------------------

def _vmem_limit_bytes():
    """~75% of this chip's physical VMEM, clamped to [32 MiB, 100 MiB]."""
    cap = 64 * 1024 * 1024          # conservative fallback (v7x-sized)
    try:
        info = pltpu.get_tpu_info()
        cap = int(getattr(info, "vmem_capacity_bytes", cap))
    except Exception:
        pass
    return max(32 * 1024 * 1024, min((cap * 3) // 4, 100 * 1024 * 1024))


VMEM_LIMIT = _vmem_limit_bytes()


# ----------------------------- tile-size helpers ------------------------------

def _tile_lane(dim, pref=512):
    """Lane-axis tile: prefer 256-multiples (v7x 2x256x256 MXU); 384 only as a
    fallback (needed for the 50304-padded vocab); full extent if nothing divides."""
    for t in (512, 256, 768, 384, 128):
        if t <= pref and dim % t == 0:
            return t
    return dim          # full extent is always a legal block dim


def _tile_sub(dim, pref=256):
    """Sublane-axis tile: prefer multiples of 16 (bf16 packs 2 rows/sublane)."""
    for t in (256, 128, 64, 32, 16, 8):
        if t <= pref and dim % t == 0:
            return t
    return dim


def _attn_tile(T, pref=128):
    """q/kv tile for attention (tq == tk keeps the causal boundary on one tile)."""
    for t in (128, 64, 32, 16, 8):
        if t <= pref and T % t == 0:
            return t
    return T


# ----------------------------- Pallas kernels ---------------------------------

def _ln_matmul_kernel(x_ref, g_ref, b_ref, w_ref, bias_ref, o_ref, xn_ref, *, gelu):
    """Fused LayerNorm -> bf16 matmul -> (+bias) -> optional tanh-GELU.

    LN is hoisted out of the per-(i, j) body: stats are computed once per row
    tile (j == 0) into a bf16 VMEM scratch and reused for every N tile."""
    @pl.when(pl.program_id(1) == 0)
    def _():
        x = x_ref[...].astype(jnp.float32)
        mu = jnp.mean(x, axis=-1, keepdims=True)
        xc = x - mu
        var = jnp.mean(xc * xc, axis=-1, keepdims=True)
        xn = xc * jax.lax.rsqrt(var + 1e-5) * g_ref[...] + b_ref[...]
        xn_ref[...] = xn.astype(jnp.bfloat16)

    h = jnp.dot(xn_ref[...], w_ref[...].astype(jnp.bfloat16),
                preferred_element_type=jnp.float32) + bias_ref[...]
    if gelu:
        c = math.sqrt(2.0 / math.pi)
        h = 0.5 * h * (1.0 + jnp.tanh(c * (h + 0.044715 * h * h * h)))
    o_ref[...] = h.astype(o_ref.dtype)


def _matmul_residual_kernel(x_ref, w_ref, bias_ref, res_ref, o_ref, acc_ref):
    """K-tiled matmul with f32 accumulator; epilogue fuses bias + residual add."""
    @pl.when(pl.program_id(2) == 0)
    def _():
        acc_ref[...] = jnp.zeros_like(acc_ref)

    acc_ref[...] += jnp.dot(x_ref[...].astype(jnp.bfloat16),
                            w_ref[...].astype(jnp.bfloat16),
                            preferred_element_type=jnp.float32)

    @pl.when(pl.program_id(2) == pl.num_programs(2) - 1)
    def _():
        o_ref[...] = (acc_ref[...] + bias_ref[...]
                      + res_ref[...].astype(jnp.float32)).astype(o_ref.dtype)


def _ln_lm_head_kernel(x_ref, g_ref, b_ref, w_ref, o_ref, xn_ref):
    """Final LayerNorm (hoisted, once per row tile) + tied lm_head: contracts the
    bf16 LN output with the (V_pad, C) bf16 embedding directly (no wte.T copy,
    no bias)."""
    @pl.when(pl.program_id(1) == 0)
    def _():
        x = x_ref[...].astype(jnp.float32)
        mu = jnp.mean(x, axis=-1, keepdims=True)
        xc = x - mu
        var = jnp.mean(xc * xc, axis=-1, keepdims=True)
        xn = xc * jax.lax.rsqrt(var + 1e-5) * g_ref[...] + b_ref[...]
        xn_ref[...] = xn.astype(jnp.bfloat16)

    o_ref[...] = jax.lax.dot_general(
        xn_ref[...], w_ref[...],
        dimension_numbers=(((1,), (1,)), ((), ())),
        preferred_element_type=jnp.float32)


def _flash_attn_kernel(q_ref, k_ref, v_ref, o_ref, m_sc, l_sc, acc_sc, *,
                       n_head, scale):
    """Flash-style causal attention over a (batch, q-tile, kv-tile) grid.

    q_ref/o_ref: (1, tq, C); k_ref/v_ref: (1, tk, C) column-blocks of qkv.
    The head split happens in-VMEM via static lane slices (no head-major HBM
    layout, no partial-lane HBM stores). Only the diagonal kv tile pays for the
    causal mask; above-diagonal tiles are skipped (their DMA is also skipped via
    the clamped kv index_map in the wrapper)."""
    qi = pl.program_id(1)
    ki = pl.program_id(2)
    tq = q_ref.shape[1]
    tk = k_ref.shape[1]
    C = q_ref.shape[2]
    hd = C // n_head

    @pl.when(ki == 0)
    def _():
        m_sc[...] = jnp.full(m_sc.shape, NEG_INF, m_sc.dtype)
        l_sc[...] = jnp.zeros(l_sc.shape, l_sc.dtype)
        acc_sc[...] = jnp.zeros(acc_sc.shape, acc_sc.dtype)

    def kv_step(masked):
        if masked:
            # 2-D mask shared by all heads (ki == qi, tq == tk => in-tile tri).
            r = jax.lax.broadcasted_iota(jnp.int32, (tq, tk), 0)
            c = jax.lax.broadcasted_iota(jnp.int32, (tq, tk), 1)
            tri = c <= r
        for h in range(n_head):
            cs = slice(h * hd, (h + 1) * hd)
            hs = slice(h, h + 1)
            # scale folded into the (tq, hd) q slice (power of two -> exact bf16),
            # not the (tq, tk) f32 score tensor.
            qh = q_ref[0, :, cs] * scale
            kh = k_ref[0, :, cs]
            s = jax.lax.dot_general(
                qh, kh, dimension_numbers=(((1,), (1,)), ((), ())),
                preferred_element_type=jnp.float32)
            if masked:
                s = jnp.where(tri, s, NEG_INF)
            m_prev = m_sc[:, hs]
            m_new = jnp.maximum(m_prev, jnp.max(s, axis=-1, keepdims=True))
            alpha = jnp.exp(m_prev - m_new)
            p = jnp.exp(s - m_new)
            l_sc[:, hs] = alpha * l_sc[:, hs] + jnp.sum(p, axis=-1, keepdims=True)
            acc_sc[:, cs] = alpha * acc_sc[:, cs] + jnp.dot(
                p.astype(jnp.bfloat16), v_ref[0, :, cs],
                preferred_element_type=jnp.float32)
            m_sc[:, hs] = m_new

    @pl.when(ki < qi)         # fully below the diagonal: no mask work at all
    def _():
        kv_step(masked=False)

    @pl.when(ki == qi)        # the only tile straddling the causal boundary
    def _():
        kv_step(masked=True)

    @pl.when(ki == pl.num_programs(2) - 1)
    def _():
        for h in range(n_head):
            cs = slice(h * hd, (h + 1) * hd)
            inv = pl.reciprocal(l_sc[:, h:h + 1], approx=True)
            acc_sc[:, cs] = acc_sc[:, cs] * inv
        o_ref[0] = acc_sc[...].astype(o_ref.dtype)   # lane-dense (tq, C) store


# ----------------------------- Pallas wrappers --------------------------------

def ln_linear(x, g, b, w, bias, *, gelu=False, out_dtype=jnp.bfloat16):
    M, K = x.shape
    N = w.shape[1]
    tm = _tile_sub(M)
    tn = _tile_lane(N)
    grid = (M // tm, N // tn)
    return pl.pallas_call(
        functools.partial(_ln_matmul_kernel, gelu=gelu),
        out_shape=jax.ShapeDtypeStruct((M, N), out_dtype),
        grid=grid,
        in_specs=[
            pl.BlockSpec((tm, K), lambda i, j: (i, 0)),
            pl.BlockSpec((1, K), lambda i, j: (0, 0)),
            pl.BlockSpec((1, K), lambda i, j: (0, 0)),
            pl.BlockSpec((K, tn), lambda i, j: (0, j)),
            pl.BlockSpec((1, tn), lambda i, j: (0, j)),
        ],
        out_specs=pl.BlockSpec((tm, tn), lambda i, j: (i, j)),
        scratch_shapes=[pltpu.VMEM((tm, K), jnp.bfloat16)],    # cached LN output
        compiler_params=pltpu.CompilerParams(
            dimension_semantics=("parallel", "arbitrary"),     # j seq: scratch reuse
            vmem_limit_bytes=VMEM_LIMIT),
    )(x, g.reshape(1, K), b.reshape(1, K), w, bias.reshape(1, N))


def linear_residual(x, w, bias, res):
    M, K = x.shape
    N = w.shape[1]
    tm = _tile_sub(M)
    tn = _tile_lane(N)
    tk = _tile_lane(K)
    grid = (M // tm, N // tn, K // tk)
    # TODO(synk): on v5e a bf16 residual writeback (or input_output_aliases on
    # `res`) would halve store traffic; kept f32 to track the PyTorch reference.
    return pl.pallas_call(
        _matmul_residual_kernel,
        out_shape=jax.ShapeDtypeStruct((M, N), jnp.float32),
        grid=grid,
        in_specs=[
            pl.BlockSpec((tm, tk), lambda i, j, k: (i, k)),
            pl.BlockSpec((tk, tn), lambda i, j, k: (k, j)),
            pl.BlockSpec((1, tn), lambda i, j, k: (0, j)),
            pl.BlockSpec((tm, tn), lambda i, j, k: (i, j)),
        ],
        out_specs=pl.BlockSpec((tm, tn), lambda i, j, k: (i, j)),
        scratch_shapes=[pltpu.VMEM((tm, tn), jnp.float32)],
        compiler_params=pltpu.CompilerParams(
            dimension_semantics=("parallel", "parallel", "arbitrary"),
            vmem_limit_bytes=VMEM_LIMIT),
    )(x, w, bias.reshape(1, N), res)


def ln_lm_head(x, g, b, wte_head):
    M, K = x.shape
    Vp = wte_head.shape[0]          # vocab padded to a multiple of 128
    tm = _tile_sub(M)
    tv = _tile_lane(Vp)
    grid = (M // tm, Vp // tv)
    # TODO(synk): when targets are given, fuse log-softmax + label gather here to
    # avoid materializing the f32 (M, V) logits at all.
    return pl.pallas_call(
        _ln_lm_head_kernel,
        out_shape=jax.ShapeDtypeStruct((M, Vp), jnp.float32),
        grid=grid,
        in_specs=[
            pl.BlockSpec((tm, K), lambda i, j: (i, 0)),
            pl.BlockSpec((1, K), lambda i, j: (0, 0)),
            pl.BlockSpec((1, K), lambda i, j: (0, 0)),
            pl.BlockSpec((tv, K), lambda i, j: (j, 0)),
        ],
        out_specs=pl.BlockSpec((tm, tv), lambda i, j: (i, j)),
        scratch_shapes=[pltpu.VMEM((tm, K), jnp.bfloat16)],    # cached LN output
        compiler_params=pltpu.CompilerParams(
            dimension_semantics=("parallel", "arbitrary"),
            vmem_limit_bytes=VMEM_LIMIT),
    )(x, g.reshape(1, K), b.reshape(1, K), wte_head)


def flash_attention(qkv, n_head):
    """qkv: (B, T, 3C) bf16 lane-dense -> output (B, T, C) bf16 lane-dense."""
    B, T, C3 = qkv.shape
    C = C3 // 3
    hd = C // n_head
    tq = _attn_tile(T)
    tk = tq
    scale = 1.0 / math.sqrt(hd)
    grid = (B, T // tq, T // tk)

    q_spec = pl.BlockSpec((1, tq, C), lambda b, qi, ki: (b, qi, 0))
    # Above-diagonal kv tiles are never needed: clamp the kv block index to the
    # diagonal so those steps alias the already-resident block (no DMA); their
    # compute is skipped inside the kernel with pl.when.
    k_spec = pl.BlockSpec((1, tk, C), lambda b, qi, ki: (b, jnp.minimum(ki, qi), 1))
    v_spec = pl.BlockSpec((1, tk, C), lambda b, qi, ki: (b, jnp.minimum(ki, qi), 2))
    o_spec = pl.BlockSpec((1, tq, C), lambda b, qi, ki: (b, qi, 0))

    return pl.pallas_call(
        functools.partial(_flash_attn_kernel, n_head=n_head, scale=scale),
        out_shape=jax.ShapeDtypeStruct((B, T, C), jnp.bfloat16),
        grid=grid,
        in_specs=[q_spec, k_spec, v_spec],
        out_specs=o_spec,
        scratch_shapes=[
            pltpu.VMEM((tq, n_head), jnp.float32),   # running max (per head col)
            pltpu.VMEM((tq, n_head), jnp.float32),   # running denom
            pltpu.VMEM((tq, C), jnp.float32),        # lane-dense output accumulator
        ],
        compiler_params=pltpu.CompilerParams(
            dimension_semantics=("parallel", "parallel", "arbitrary"),
            vmem_limit_bytes=VMEM_LIMIT),
    )(qkv, qkv, qkv)


# ----------------------------- GPT model (glue) -------------------------------

class GPTConfig:
    def __init__(self, block_size=1024, vocab_size=50257, n_layer=12, n_head=12,
                 n_embd=768):
        self.block_size = block_size
        self.vocab_size = vocab_size
        self.n_layer = n_layer
        self.n_head = n_head
        self.n_embd = n_embd


def _pad_vocab(v, multiple=128):
    return ((v + multiple - 1) // multiple) * multiple


def init_params(config, key):
    C = config.n_embd
    std = 0.02
    std_proj = 0.02 * (2 * config.n_layer) ** -0.5     # NANOGPT_SCALE_INIT
    keys = iter(jax.random.split(key, 4 + 4 * config.n_layer))

    def normal(k, shape, s, dtype=jnp.float32):
        return (s * jax.random.normal(k, shape)).astype(dtype)

    wte = normal(next(keys), (config.vocab_size, C), std)       # f32 for the gather
    vp = _pad_vocab(config.vocab_size)
    # bf16, vocab-padded copy of the tied embedding used as the lm_head operand
    # (padded rows are zero -> padded logits are 0 and are sliced off).
    wte_head = jnp.zeros((vp, C), jnp.bfloat16).at[:config.vocab_size].set(
        wte.astype(jnp.bfloat16))

    params = {
        "wte": wte,
        "wte_head": wte_head,
        "wpe": normal(next(keys), (config.block_size, C), std),
        "lnf_g": jnp.ones((C,), jnp.float32),
        "lnf_b": jnp.zeros((C,), jnp.float32),
        "blocks": [],
    }
    for _ in range(config.n_layer):
        blk = {
            "ln1_g": jnp.ones((C,), jnp.float32),
            "ln1_b": jnp.zeros((C,), jnp.float32),
            "attn_w": normal(next(keys), (C, 3 * C), std, jnp.bfloat16),
            "attn_b": jnp.zeros((3 * C,), jnp.float32),
            "proj_w": normal(next(keys), (C, C), std_proj, jnp.bfloat16),
            "proj_b": jnp.zeros((C,), jnp.float32),
            "ln2_g": jnp.ones((C,), jnp.float32),
            "ln2_b": jnp.zeros((C,), jnp.float32),
            "fc_w": normal(next(keys), (C, 4 * C), std, jnp.bfloat16),
            "fc_b": jnp.zeros((4 * C,), jnp.float32),
            "mlp_proj_w": normal(next(keys), (4 * C, C), std_proj, jnp.bfloat16),
            "mlp_proj_b": jnp.zeros((C,), jnp.float32),
        }
        params["blocks"].append(blk)
    return params


def gpt_forward(params, idx, config, targets=None):
    B, T = idx.shape
    C = config.n_embd
    assert T <= config.block_size

    # embedding gather + positional add stay in plain JAX (glue)
    tok_emb = params["wte"][idx]                      # (B, T, C)
    pos_emb = params["wpe"][:T]                       # (T, C)
    x = (tok_emb + pos_emb[None, :, :]).astype(jnp.float32).reshape(B * T, C)

    for blk in params["blocks"]:
        # attention sub-block: fused LN1+QKV -> flash attention (in-kernel head
        # split, lane-dense output) -> proj + residual
        qkv = ln_linear(x, blk["ln1_g"], blk["ln1_b"], blk["attn_w"], blk["attn_b"])
        y = flash_attention(qkv.reshape(B, T, 3 * C), config.n_head)
        x = linear_residual(y.reshape(B * T, C), blk["proj_w"], blk["proj_b"], x)
        # MLP sub-block: fused LN2+FC+GELU -> proj + residual
        h = ln_linear(x, blk["ln2_g"], blk["ln2_b"], blk["fc_w"], blk["fc_b"],
                      gelu=True)
        x = linear_residual(h, blk["mlp_proj_w"], blk["mlp_proj_b"], x)

    # fused final LayerNorm + tied lm_head against the padded bf16 embedding
    logits = ln_lm_head(x, params["lnf_g"], params["lnf_b"], params["wte_head"])
    V = config.vocab_size
    logits = logits[:, :V].reshape(B, T, V)           # drop vocab padding

    loss = None
    if targets is not None:
        # TODO(synk): cross-entropy kept in plain JAX; fuse into ln_lm_head to
        # avoid materializing the f32 (M, V) logits when training.
        logp = jax.nn.log_softmax(logits.reshape(-1, V), axis=-1)
        loss = -jnp.mean(jnp.take_along_axis(logp, targets.reshape(-1, 1), axis=-1))
    return logits, loss


# ----------------------------------- main -------------------------------------

if __name__ == "__main__":
    # Small shapes (the real model is block_size=1024, vocab=50257, n_embd=768).
    # n_embd=128 keeps every lane-axis block a legal multiple of 128 while
    # staying tiny (hd=64 like GPT-2).
    config = GPTConfig(block_size=16, vocab_size=256, n_layer=2, n_head=2,
                       n_embd=128)
    key = jax.random.PRNGKey(0)
    pkey, ikey = jax.random.split(key)
    params = init_params(config, pkey)

    B, T = 2, 8
    idx = jax.random.randint(ikey, (B, T), 0, config.vocab_size, dtype=jnp.int32)

    logits, loss = jax.jit(
        lambda p, i: gpt_forward(p, i, config, targets=None)
    )(params, idx)
    logits = jax.block_until_ready(logits)

    assert logits.shape == (B, T, config.vocab_size)
    assert bool(jnp.all(jnp.isfinite(logits)))
    assert loss is None
    print("KERNEL_OK")
</pallas_src>

<mosaic_0001>
module attributes {stable_mosaic.version = 11 : i64} {
  func.func @_matmul_residual_kernel(%arg0: i32, %arg1: i32, %arg2: i32, %arg3: memref<16x128xbf16, #tpu.memory_space<vmem>>, %arg4: memref<128x128xbf16, #tpu.memory_space<vmem>>, %arg5: memref<1x128xf32, #tpu.memory_space<vmem>>, %arg6: memref<16x128xf32, #tpu.memory_space<vmem>>, %arg7: memref<16x128xf32, #tpu.memory_space<vmem>>, %arg8: memref<16x128xf32, #tpu.memory_space<vmem>>) attributes {dimension_semantics = [#tpu.dimension_semantics<parallel>, #tpu.dimension_semantics<parallel>, #tpu.dimension_semantics<arbitrary>], iteration_bounds = array<i64: 1, 1, 1>, scalar_prefetch = 0 : i64, scratch_operands = 1 : i64, tpu.core_type = #tpu.core_type<tc>, window_params = [{transform_indices = @transform_0, window_bounds = array<i64: 16, 128>}, {transform_indices = @transform_1, window_bounds = array<i64: 128, 128>}, {transform_indices = @transform_2, window_bounds = array<i64: 1, 128>}, {transform_indices = @transform_3, window_bounds = array<i64: 16, 128>}, {transform_indices = @transform_4, window_bounds = array<i64: 16, 128>}]} {
    %c0_i32 = arith.constant 0 : i32
    %0 = arith.cmpi eq, %arg2, %c0_i32 : i32
    %1 = arith.extui %0 : i1 to i32
    %c0_i32_0 = arith.constant 0 : i32
    %2 = arith.cmpi ne, %1, %c0_i32_0 : i32
    scf.if %2 {
      %cst_10 = arith.constant 0.000000e+00 : f32
      %12 = vector.broadcast %cst_10 : f32 to vector<16x128xf32>
      %c0_11 = arith.constant 0 : index
      %c0_12 = arith.constant 0 : index
      %13 = vector.load %arg8[%c0_11, %c0_12] : memref<16x128xf32, #tpu.memory_space<vmem>>, vector<16x128xf32>
      tpu.vector_store %arg8[%c0_11, %c0_12], %12 {strides = array<i32>} : memref<16x128xf32, #tpu.memory_space<vmem>>, vector<16x128xf32>,
    } else {
    }
    %c0 = arith.constant 0 : index
    %c0_1 = arith.constant 0 : index
    %3 = vector.load %arg8[%c0, %c0_1] : memref<16x128xf32, #tpu.memory_space<vmem>>, vector<16x128xf32>
    %c0_2 = arith.constant 0 : index
    %c0_3 = arith.constant 0 : index
    %4 = vector.load %arg3[%c0_2, %c0_3] : memref<16x128xbf16, #tpu.memory_space<vmem>>, vector<16x128xbf16>
    %c0_4 = arith.constant 0 : index
    %c0_5 = arith.constant 0 : index
    %5 = vector.load %arg4[%c0_4, %c0_5] : memref<128x128xbf16, #tpu.memory_space<vmem>>, vector<128x128xbf16>
    %cst = arith.constant dense<0.000000e+00> : vector<16x128xf32>
    %6 = tpu.matmul %4, %5, %cst {dimension_numbers = #tpu.dot_dimension_numbers<[1], [0], [0], [1], [0, 0, 1, 1], [], []>} : vector<16x128xbf16>, vector<128x128xbf16>, vector<16x128xf32> -> vector<16x128xf32>
    %7 = arith.addf %3, %6 : vector<16x128xf32>
    %c0_6 = arith.constant 0 : index
    %c0_7 = arith.constant 0 : index
    %8 = vector.load %arg8[%c0_6, %c0_7] : memref<16x128xf32, #tpu.memory_space<vmem>>, vector<16x128xf32>
    tpu.vector_store %arg8[%c0_6, %c0_7], %7 {strides = array<i32>} : memref<16x128xf32, #tpu.memory_space<vmem>>, vector<16x128xf32>,
    %c0_i32_8 = arith.constant 0 : i32
    %9 = arith.cmpi eq, %arg2, %c0_i32_8 : i32
    %10 = arith.extui %9 : i1 to i32
    %c0_i32_9 = arith.constant 0 : i32
    %11 = arith.cmpi ne, %10, %c0_i32_9 : i32
    scf.if %11 {
      %c0_10 = arith.constant 0 : index
      %c0_11 = arith.constant 0 : index
      %12 = vector.load %arg8[%c0_10, %c0_11] : memref<16x128xf32, #tpu.memory_space<vmem>>, vector<16x128xf32>
      %c0_12 = arith.constant 0 : index
      %c0_13 = arith.constant 0 : index
      %13 = vector.load %arg5[%c0_12, %c0_13] : memref<1x128xf32, #tpu.memory_space<vmem>>, vector<1x128xf32>
      %14 = vector.broadcast %13 : vector<1x128xf32> to vector<16x128xf32>
      %15 = arith.addf %12, %14 : vector<16x128xf32>
      %c0_14 = arith.constant 0 : index
      %c0_15 = arith.constant 0 : index
      %16 = vector.load %arg6[%c0_14, %c0_15] : memref<16x128xf32, #tpu.memory_space<vmem>>, vector<16x128xf32>
      %17 = arith.addf %15, %16 : vector<16x128xf32>
      %c0_16 = arith.constant 0 : index
      %c0_17 = arith.constant 0 : index
      %18 = vector.load %arg7[%c0_16, %c0_17] : memref<16x128xf32, #tpu.memory_space<vmem>>, vector<16x128xf32>
      tpu.vector_store %arg7[%c0_16, %c0_17], %17 {strides = array<i32>} : memref<16x128xf32, #tpu.memory_space<vmem>>, vector<16x128xf32>,
    } else {
    }
    return
  }
  func.func @transform_0(%arg0: i32, %arg1: i32, %arg2: i32) -> (i32, i32) {
    %c0_i32 = arith.constant 0 : i32
    return %arg0, %arg2 : i32, i32
  }
  func.func @transform_1(%arg0: i32, %arg1: i32, %arg2: i32) -> (i32, i32) {
    %c0_i32 = arith.constant 0 : i32
    return %arg2, %arg1 : i32, i32
  }
  func.func @transform_2(%arg0: i32, %arg1: i32, %arg2: i32) -> (i32, i32) {
    %c0_i32 = arith.constant 0 : i32
    %c0_i32_0 = arith.constant 0 : i32
    return %c0_i32, %arg1 : i32, i32
  }
  func.func @transform_3(%arg0: i32, %arg1: i32, %arg2: i32) -> (i32, i32) {
    %c0_i32 = arith.constant 0 : i32
    return %arg0, %arg1 : i32, i32
  }
  func.func @transform_4(%arg0: i32, %arg1: i32, %arg2: i32) -> (i32, i32) {
    %c0_i32 = arith.constant 0 : i32
    return %arg0, %arg1 : i32, i32
  }
}

module attributes {stable_mosaic.version = 11 : i64} {
  func.func @_ln_matmul_kernel(%arg0: i32, %arg1: i32, %arg2: memref<16x128xf32, #tpu.memory_space<vmem>>, %arg3: memref<1x128xf32, #tpu.memory_space<vmem>>, %arg4: memref<1x128xf32, #tpu.memory_space<vmem>>, %arg5: memref<128x384xbf16, #tpu.memory_space<vmem>>, %arg6: memref<1x384xf32, #tpu.memory_space<vmem>>, %arg7: memref<16x384xbf16, #tpu.memory_space<vmem>>, %arg8: memref<16x128xbf16, #tpu.memory_space<vmem>>) attributes {dimension_semantics = [#tpu.dimension_semantics<parallel>, #tpu.dimension_semantics<arbitrary>], iteration_bounds = array<i64: 1, 1>, scalar_prefetch = 0 : i64, scratch_operands = 1 : i64, tpu.core_type = #tpu.core_type<tc>, window_params = [{transform_indices = @transform_0, window_bounds = array<i64: 16, 128>}, {pipeline_mode = #tpu.pipeline_mode<synchronous>, transform_indices = @transform_1, window_bounds = array<i64: 1, 128>}, {pipeline_mode = #tpu.pipeline_mode<synchronous>, transform_indices = @transform_2, window_bounds = array<i64: 1, 128>}, {transform_indices = @transform_3, window_bounds = array<i64: 128, 384>}, {transform_indices = @transform_4, window_bounds = array<i64: 1, 384>}, {transform_indices = @transform_5, window_bounds = array<i64: 16, 384>}]} {
    %c0_i32 = arith.constant 0 : i32
    %0 = arith.cmpi eq, %arg1, %c0_i32 : i32
    %1 = arith.extui %0 : i1 to i32
    %c0_i32_0 = arith.constant 0 : i32
    %2 = arith.cmpi ne, %1, %c0_i32_0 : i32
    scf.if %2 {
      %c0_8 = arith.constant 0 : index
      %c0_9 = arith.constant 0 : index
      %11 = vector.load %arg2[%c0_8, %c0_9] : memref<16x128xf32, #tpu.memory_space<vmem>>, vector<16x128xf32>
      %cst_10 = arith.constant dense<0.000000e+00> : vector<16xf32>
      %12 = vector.multi_reduction <add>, %11, %cst_10 [1] : vector<16x128xf32> to vector<16xf32>
      %13 = vector.shape_cast %12 : vector<16xf32> to vector<16x1xf32>
      %cst_11 = arith.constant 1.280000e+02 : f32
      %14 = vector.broadcast %cst_11 : f32 to vector<16x1xf32>
      %15 = arith.divf %13, %14 : vector<16x1xf32>
      %16 = vector.broadcast %15 : vector<16x1xf32> to vector<16x128xf32>
      %17 = arith.subf %11, %16 : vector<16x128xf32>
      %18 = arith.mulf %17, %17 : vector<16x128xf32>
      %cst_12 = arith.constant dense<0.000000e+00> : vector<16xf32>
      %19 = vector.multi_reduction <add>, %18, %cst_12 [1] : vector<16x128xf32> to vector<16xf32>
      %20 = vector.shape_cast %19 : vector<16xf32> to vector<16x1xf32>
      %cst_13 = arith.constant 1.280000e+02 : f32
      %21 = vector.broadcast %cst_13 : f32 to vector<16x1xf32>
      %22 = arith.divf %20, %21 : vector<16x1xf32>
      %cst_14 = arith.constant 9.99999974E-6 : f32
      %23 = vector.broadcast %cst_14 : f32 to vector<16x1xf32>
      %24 = arith.addf %22, %23 : vector<16x1xf32>
      %25 = math.rsqrt %24 : vector<16x1xf32>
      %26 = vector.broadcast %25 : vector<16x1xf32> to vector<16x128xf32>
      %27 = arith.mulf %17, %26 : vector<16x128xf32>
      %c0_15 = arith.constant 0 : index
      %c0_16 = arith.constant 0 : index
      %28 = vector.load %arg3[%c0_15, %c0_16] : memref<1x128xf32, #tpu.memory_space<vmem>>, vector<1x128xf32>
      %29 = vector.broadcast %28 : vector<1x128xf32> to vector<16x128xf32>
      %30 = arith.mulf %27, %29 : vector<16x128xf32>
      %c0_17 = arith.constant 0 : index
      %c0_18 = arith.constant 0 : index
      %31 = vector.load %arg4[%c0_17, %c0_18] : memref<1x128xf32, #tpu.memory_space<vmem>>, vector<1x128xf32>
      %32 = vector.broadcast %31 : vector<1x128xf32> to vector<16x128xf32>
      %33 = arith.addf %30, %32 : vector<16x128xf32>
      %34 = arith.truncf %33 : vector<16x128xf32> to vector<16x128xbf16>
      %c0_19 = arith.constant 0 : index
      %c0_20 = arith.constant 0 : index
      %35 = vector.load %arg8[%c0_19, %c0_20] : memref<16x128xbf16, #tpu.memory_space<vmem>>, vector<16x128xbf16>
      tpu.vector_store %arg8[%c0_19, %c0_20], %34 {strides = array<i32>} : memref<16x128xbf16, #tpu.memory_space<vmem>>, vector<16x128xbf16>,
    } else {
    }
    %c0 = arith.constant 0 : index
    %c0_1 = arith.constant 0 : index
    %3 = vector.load %arg8[%c0, %c0_1] : memref<16x128xbf16, #tpu.memory_space<vmem>>, vector<16x128xbf16>
    %c0_2 = arith.constant 0 : index
    %c0_3 = arith.constant 0 : index
    %4 = vector.load %arg5[%c0_2, %c0_3] : memref<128x384xbf16, #tpu.memory_space<vmem>>, vector<128x384xbf16>
    %cst = arith.constant dense<0.000000e+00> : vector<16x384xf32>
    %5 = tpu.matmul %3, %4, %cst {dimension_numbers = #tpu.dot_dimension_numbers<[1], [0], [0], [1], [0, 0, 1, 1], [], []>} : vector<16x128xbf16>, vector<128x384xbf16>, vector<16x384xf32> -> vector<16x384xf32>
    %c0_4 = arith.constant 0 : index
    %c0_5 = arith.constant 0 : index
    %6 = vector.load %arg6[%c0_4, %c0_5] : memref<1x384xf32, #tpu.memory_space<vmem>>, vector<1x384xf32>
    %7 = vector.broadcast %6 : vector<1x384xf32> to vector<16x384xf32>
    %8 = arith.addf %5, %7 : vector<16x384xf32>
    %9 = arith.truncf %8 : vector<16x384xf32> to vector<16x384xbf16>
    %c0_6 = arith.constant 0 : index
    %c0_7 = arith.constant 0 : index
    %10 = vector.load %arg7[%c0_6, %c0_7] : memref<16x384xbf16, #tpu.memory_space<vmem>>, vector<16x384xbf16>
    tpu.vector_store %arg7[%c0_6, %c0_7], %9 {strides = array<i32>} : memref<16x384xbf16, #tpu.memory_space<vmem>>, vector<16x384xbf16>,
    return
  }
  func.func @transform_0(%arg0: i32, %arg1: i32) -> (i32, i32) {
    %c0_i32 = arith.constant 0 : i32
    %c0_i32_0 = arith.constant 0 : i32
    return %arg0, %c0_i32 : i32, i32
  }
  func.func @transform_1(%arg0: i32, %arg1: i32) -> (i32, i32) {
    %c0_i32 = arith.constant 0 : i32
    %c0_i32_0 = arith.constant 0 : i32
    %c0_i32_1 = arith.constant 0 : i32
    return %c0_i32, %c0_i32_0 : i32, i32
  }
  func.func @transform_2(%arg0: i32, %arg1: i32) -> (i32, i32) {
    %c0_i32 = arith.constant 0 : i32
    %c0_i32_0 = arith.constant 0 : i32
    %c0_i32_1 = arith.constant 0 : i32
    return %c0_i32, %c0_i32_0 : i32, i32
  }
  func.func @transform_3(%arg0: i32, %arg1: i32) -> (i32, i32) {
    %c0_i32 = arith.constant 0 : i32
    %c0_i32_0 = arith.constant 0 : i32
    return %c0_i32, %arg1 : i32, i32
  }
  func.func @transform_4(%arg0: i32, %arg1: i32) -> (i32, i32) {
    %c0_i32 = arith.constant 0 : i32
    %c0_i32_0 = arith.constant 0 : i32
    return %c0_i32, %arg1 : i32, i32
  }
  func.func @transform_5(%arg0: i32, %arg1: i32) -> (i32, i32) {
    %c0_i32 = arith.constant 0 : i32
    return %arg0, %arg1 : i32, i32
  }
}

module attributes {stable_mosaic.version = 11 : i64} {
  func.func @_ln_matmul_kernel(%arg0: i32, %arg1: i32, %arg2: memref<16x128xf32, #tpu.memory_space<vmem>>, %arg3: memref<1x128xf32, #tpu.memory_space<vmem>>, %arg4: memref<1x128xf32, #tpu.memory_space<vmem>>, %arg5: memref<128x512xbf16, #tpu.memory_space<vmem>>, %arg6: memref<1x512xf32, #tpu.memory_space<vmem>>, %arg7: memref<16x512xbf16, #tpu.memory_space<vmem>>, %arg8: memref<16x128xbf16, #tpu.memory_space<vmem>>) attributes {dimension_semantics = [#tpu.dimension_semantics<parallel>, #tpu.dimension_semantics<arbitrary>], iteration_bounds = array<i64: 1, 1>, scalar_prefetch = 0 : i64, scratch_operands = 1 : i64, tpu.core_type = #tpu.core_type<tc>, window_params = [{transform_indices = @transform_0, window_bounds = array<i64: 16, 128>}, {pipeline_mode = #tpu.pipeline_mode<synchronous>, transform_indices = @transform_1, window_bounds = array<i64: 1, 128>}, {pipeline_mode = #tpu.pipeline_mode<synchronous>, transform_indices = @transform_2, window_bounds = array<i64: 1, 128>}, {transform_indices = @transform_3, window_bounds = array<i64: 128, 512>}, {transform_indices = @transform_4, window_bounds = array<i64: 1, 512>}, {transform_indices = @transform_5, window_bounds = array<i64: 16, 512>}]} {
    %c0_i32 = arith.constant 0 : i32
    %0 = arith.cmpi eq, %arg1, %c0_i32 : i32
    %1 = arith.extui %0 : i1 to i32
    %c0_i32_0 = arith.constant 0 : i32
    %2 = arith.cmpi ne, %1, %c0_i32_0 : i32
    scf.if %2 {
      %c0_12 = arith.constant 0 : index
      %c0_13 = arith.constant 0 : index
      %24 = vector.load %arg2[%c0_12, %c0_13] : memref<16x128xf32, #tpu.memory_space<vmem>>, vector<16x128xf32>
      %cst_14 = arith.constant dense<0.000000e+00> : vector<16xf32>
      %25 = vector.multi_reduction <add>, %24, %cst_14 [1] : vector<16x128xf32> to vector<16xf32>
      %26 = vector.shape_cast %25 : vector<16xf32> to vector<16x1xf32>
      %cst_15 = arith.constant 1.280000e+02 : f32
      %27 = vector.broadcast %cst_15 : f32 to vector<16x1xf32>
      %28 = arith.divf %26, %27 : vector<16x1xf32>
      %29 = vector.broadcast %28 : vector<16x1xf32> to vector<16x128xf32>
      %30 = arith.subf %24, %29 : vector<16x128xf32>
      %31 = arith.mulf %30, %30 : vector<16x128xf32>
      %cst_16 = arith.constant dense<0.000000e+00> : vector<16xf32>
      %32 = vector.multi_reduction <add>, %31, %cst_16 [1] : vector<16x128xf32> to vector<16xf32>
      %33 = vector.shape_cast %32 : vector<16xf32> to vector<16x1xf32>
      %cst_17 = arith.constant 1.280000e+02 : f32
      %34 = vector.broadcast %cst_17 : f32 to vector<16x1xf32>
      %35 = arith.divf %33, %34 : vector<16x1xf32>
      %cst_18 = arith.constant 9.99999974E-6 : f32
      %36 = vector.broadcast %cst_18 : f32 to vector<16x1xf32>
      %37 = arith.addf %35, %36 : vector<16x1xf32>
      %38 = math.rsqrt %37 : vector<16x1xf32>
      %39 = vector.broadcast %38 : vector<16x1xf32> to vector<16x128xf32>
      %40 = arith.mulf %30, %39 : vector<16x128xf32>
      %c0_19 = arith.constant 0 : index
      %c0_20 = arith.constant 0 : index
      %41 = vector.load %arg3[%c0_19, %c0_20] : memref<1x128xf32, #tpu.memory_space<vmem>>, vector<1x128xf32>
      %42 = vector.broadcast %41 : vector<1x128xf32> to vector<16x128xf32>
      %43 = arith.mulf %40, %42 : vector<16x128xf32>
      %c0_21 = arith.constant 0 : index
      %c0_22 = arith.constant 0 : index
      %44 = vector.load %arg4[%c0_21, %c0_22] : memref<1x128xf32, #tpu.memory_space<vmem>>, vector<1x128xf32>
      %45 = vector.broadcast %44 : vector<1x128xf32> to vector<16x128xf32>
      %46 = arith.addf %43, %45 : vector<16x128xf32>
      %47 = arith.truncf %46 : vector<16x128xf32> to vector<16x128xbf16>
      %c0_23 = arith.constant 0 : index
      %c0_24 = arith.constant 0 : index
      %48 = vector.load %arg8[%c0_23, %c0_24] : memref<16x128xbf16, #tpu.memory_space<vmem>>, vector<16x128xbf16>
      tpu.vector_store %arg8[%c0_23, %c0_24], %47 {strides = array<i32>} : memref<16x128xbf16, #tpu.memory_space<vmem>>, vector<16x128xbf16>,
    } else {
    }
    %c0 = arith.constant 0 : index
    %c0_1 = arith.constant 0 : index
    %3 = vector.load %arg8[%c0, %c0_1] : memref<16x128xbf16, #tpu.memory_space<vmem>>, vector<16x128xbf16>
    %c0_2 = arith.constant 0 : index
    %c0_3 = arith.constant 0 : index
    %4 = vector.load %arg5[%c0_2, %c0_3] : memref<128x512xbf16, #tpu.memory_space<vmem>>, vector<128x512xbf16>
    %cst = arith.constant dense<0.000000e+00> : vector<16x512xf32>
    %5 = tpu.matmul %3, %4, %cst {dimension_numbers = #tpu.dot_dimension_numbers<[1], [0], [0], [1], [0, 0, 1, 1], [], []>} : vector<16x128xbf16>, vector<128x512xbf16>, vector<16x512xf32> -> vector<16x512xf32>
    %c0_4 = arith.constant 0 : index
    %c0_5 = arith.constant 0 : index
    %6 = vector.load %arg6[%c0_4, %c0_5] : memref<1x512xf32, #tpu.memory_space<vmem>>, vector<1x512xf32>
    %7 = vector.broadcast %6 : vector<1x512xf32> to vector<16x512xf32>
    %8 = arith.addf %5, %7 : vector<16x512xf32>
    %cst_6 = arith.constant 5.000000e-01 : f32
    %9 = vector.broadcast %cst_6 : f32 to vector<16x512xf32>
    %10 = arith.mulf %9, %8 : vector<16x512xf32>
    %cst_7 = arith.constant 4.471500e-02 : f32
    %11 = vector.broadcast %cst_7 : f32 to vector<16x512xf32>
    %12 = arith.mulf %11, %8 : vector<16x512xf32>
    %13 = arith.mulf %12, %8 : vector<16x512xf32>
    %14 = arith.mulf %13, %8 : vector<16x512xf32>
    %15 = arith.addf %8, %14 : vector<16x512xf32>
    %cst_8 = arith.constant 0.797884583 : f32
    %16 = vector.broadcast %cst_8 : f32 to vector<16x512xf32>
    %17 = arith.mulf %16, %15 : vector<16x512xf32>
    %18 = math.tanh %17 : vector<16x512xf32>
    %cst_9 = arith.constant 1.000000e+00 : f32
    %19 = vector.broadcast %cst_9 : f32 to vector<16x512xf32>
    %20 = arith.addf %19, %18 : vector<16x512xf32>
    %21 = arith.mulf %10, %20 : vector<16x512xf32>
    %22 = arith.truncf %21 : vector<16x512xf32> to vector<16x512xbf16>
    %c0_10 = arith.constant 0 : index
    %c0_11 = arith.constant 0 : index
    %23 = vector.load %arg7[%c0_10, %c0_11] : memref<16x512xbf16, #tpu.memory_space<vmem>>, vector<16x512xbf16>
    tpu.vector_store %arg7[%c0_10, %c0_11], %22 {strides = array<i32>} : memref<16x512xbf16, #tpu.memory_space<vmem>>, vector<16x512xbf16>,
    return
  }
  func.func @transform_0(%arg0: i32, %arg1: i32) -> (i32, i32) {
    %c0_i32 = arith.constant 0 : i32
    %c0_i32_0 = arith.constant 0 : i32
    return %arg0, %c0_i32 : i32, i32
  }
  func.func @transform_1(%arg0: i32, %arg1: i32) -> (i32, i32) {
    %c0_i32 = arith.constant 0 : i32
    %c0_i32_0 = arith.constant 0 : i32
    %c0_i32_1 = arith.constant 0 : i32
    return %c0_i32, %c0_i32_0 : i32, i32
  }
  func.func @transform_2(%arg0: i32, %arg1: i32) -> (i32, i32) {
    %c0_i32 = arith.constant 0 : i32
    %c0_i32_0 = arith.constant 0 : i32
    %c0_i32_1 = arith.constant 0 : i32
    return %c0_i32, %c0_i32_0 : i32, i32
  }
  func.func @transform_3(%arg0: i32, %arg1: i32) -> (i32, i32) {
    %c0_i32 = arith.constant 0 : i32
    %c0_i32_0 = arith.constant 0 : i32
    return %c0_i32, %arg1 : i32, i32
  }
  func.func @transform_4(%arg0: i32, %arg1: i32) -> (i32, i32) {
    %c0_i32 = arith.constant 0 : i32
    %c0_i32_0 = arith.constant 0 : i32
    return %c0_i32, %arg1 : i32, i32
  }
  func.func @transform_5(%arg0: i32, %arg1: i32) -> (i32, i32) {
    %c0_i32 = arith.constant 0 : i32
    return %arg0, %arg1 : i32, i32
  }
}

module attributes {stable_mosaic.version = 11 : i64} {
  func.func @_flash_attn_kernel(%arg0: i32, %arg1: i32, %arg2: i32, %arg3: memref<1x8x128xbf16, #tpu.memory_space<vmem>>, %arg4: memref<1x8x128xbf16, #tpu.memory_space<vmem>>, %arg5: memref<1x8x128xbf16, #tpu.memory_space<vmem>>, %arg6: memref<1x8x128xbf16, #tpu.memory_space<vmem>>, %arg7: memref<8x2xf32, #tpu.memory_space<vmem>>, %arg8: memref<8x2xf32, #tpu.memory_space<vmem>>, %arg9: memref<8x128xf32, #tpu.memory_space<vmem>>) attributes {dimension_semantics = [#tpu.dimension_semantics<parallel>, #tpu.dimension_semantics<parallel>, #tpu.dimension_semantics<arbitrary>], iteration_bounds = array<i64: 2, 1, 1>, scalar_prefetch = 0 : i64, scratch_operands = 3 : i64, tpu.core_type = #tpu.core_type<tc>, window_params = [{transform_indices = @transform_0, window_bounds = array<i64: 1, 8, 128>}, {transform_indices = @transform_1, window_bounds = array<i64: 1, 8, 128>}, {transform_indices = @transform_2, window_bounds = array<i64: 1, 8, 128>}, {transform_indices = @transform_3, window_bounds = array<i64: 1, 8, 128>}]} {
    %c0_i32 = arith.constant 0 : i32
    %0 = arith.cmpi eq, %arg2, %c0_i32 : i32
    %1 = arith.extui %0 : i1 to i32
    %c0_i32_0 = arith.constant 0 : i32
    %2 = arith.cmpi ne, %1, %c0_i32_0 : i32
    scf.if %2 {
      %cst = arith.constant -1.000000e+30 : f32
      %12 = vector.broadcast %cst : f32 to vector<8x2xf32>
      %c0 = arith.constant 0 : index
      %c0_5 = arith.constant 0 : index
      %13 = vector.load %arg7[%c0, %c0_5] : memref<8x2xf32, #tpu.memory_space<vmem>>, vector<8x2xf32>
      tpu.vector_store %arg7[%c0, %c0_5], %12 {strides = array<i32>} : memref<8x2xf32, #tpu.memory_space<vmem>>, vector<8x2xf32>,
      %cst_6 = arith.constant 0.000000e+00 : f32
      %14 = vector.broadcast %cst_6 : f32 to vector<8x2xf32>
      %c0_7 = arith.constant 0 : index
      %c0_8 = arith.constant 0 : index
      %15 = vector.load %arg8[%c0_7, %c0_8] : memref<8x2xf32, #tpu.memory_space<vmem>>, vector<8x2xf32>
      tpu.vector_store %arg8[%c0_7, %c0_8], %14 {strides = array<i32>} : memref<8x2xf32, #tpu.memory_space<vmem>>, vector<8x2xf32>,
      %cst_9 = arith.constant 0.000000e+00 : f32
      %16 = vector.broadcast %cst_9 : f32 to vector<8x128xf32>
      %c0_10 = arith.constant 0 : index
      %c0_11 = arith.constant 0 : index
      %17 = vector.load %arg9[%c0_10, %c0_11] : memref<8x128xf32, #tpu.memory_space<vmem>>, vector<8x128xf32>
      tpu.vector_store %arg9[%c0_10, %c0_11], %16 {strides = array<i32>} : memref<8x128xf32, #tpu.memory_space<vmem>>, vector<8x128xf32>,
    } else {
    }
    %3 = arith.cmpi slt, %arg2, %arg1 : i32
    %4 = arith.extui %3 : i1 to i32
    %c0_i32_1 = arith.constant 0 : i32
    %5 = arith.cmpi ne, %4, %c0_i32_1 : i32
    scf.if %5 {
      %c0 = arith.constant 0 : index
      %c0_5 = arith.constant 0 : index
      %c0_6 = arith.constant 0 : index
      %12 = vector.load %arg3[%c0, %c0_5, %c0_6] : memref<1x8x128xbf16, #tpu.memory_space<vmem>>, vector<1x8x64xbf16>
      %13 = vector.shape_cast %12 : vector<1x8x64xbf16> to vector<8x64xbf16>
      %cst = arith.constant 1.250000e-01 : bf16
      %14 = vector.broadcast %cst : bf16 to vector<8x64xbf16>
      %15 = arith.mulf %13, %14 : vector<8x64xbf16>
      %c0_7 = arith.constant 0 : index
      %c0_8 = arith.constant 0 : index
      %c0_9 = arith.constant 0 : index
      %16 = vector.load %arg4[%c0_7, %c0_8, %c0_9] : memref<1x8x128xbf16, #tpu.memory_space<vmem>>, vector<1x8x64xbf16>
      %17 = vector.shape_cast %16 : vector<1x8x64xbf16> to vector<8x64xbf16>
      %cst_10 = arith.constant dense<0.000000e+00> : vector<8x8xf32>
      %18 = tpu.matmul %15, %17, %cst_10 {dimension_numbers = #tpu.dot_dimension_numbers<[1], [1], [0], [0], [0, 0, 1, 0], [], []>} : vector<8x64xbf16>, vector<8x64xbf16>, vector<8x8xf32> -> vector<8x8xf32>
      %c0_11 = arith.constant 0 : index
      %c0_12 = arith.constant 0 : index
      %19 = vector.load %arg7[%c0_11, %c0_12] : memref<8x2xf32, #tpu.memory_space<vmem>>, vector<8x1xf32>
      %cst_13 = arith.constant dense<0xFF800000> : vector<8xf32>
      %20 = vector.multi_reduction <maximumf>, %18, %cst_13 [1] : vector<8x8xf32> to vector<8xf32>
      %21 = vector.shape_cast %20 : vector<8xf32> to vector<8x1xf32>
      %22 = arith.maximumf %19, %21 : vector<8x1xf32>
      %23 = arith.subf %19, %22 : vector<8x1xf32>
      %24 = math.exp %23 : vector<8x1xf32>
      %25 = vector.broadcast %22 : vector<8x1xf32> to vector<8x8xf32>
      %26 = arith.subf %18, %25 : vector<8x8xf32>
      %27 = math.exp %26 : vector<8x8xf32>
      %c0_14 = arith.constant 0 : index
      %c0_15 = arith.constant 0 : index
      %28 = vector.load %arg8[%c0_14, %c0_15] : memref<8x2xf32, #tpu.memory_space<vmem>>, vector<8x1xf32>
      %29 = arith.mulf %24, %28 : vector<8x1xf32>
      %cst_16 = arith.constant dense<0.000000e+00> : vector<8xf32>
      %30 = vector.multi_reduction <add>, %27, %cst_16 [1] : vector<8x8xf32> to vector<8xf32>
      %31 = vector.shape_cast %30 : vector<8xf32> to vector<8x1xf32>
      %32 = arith.addf %29, %31 : vector<8x1xf32>
      %c0_17 = arith.constant 0 : index
      %c0_18 = arith.constant 0 : index
      %33 = vector.load %arg8[%c0_17, %c0_18] : memref<8x2xf32, #tpu.memory_space<vmem>>, vector<8x1xf32>
      tpu.vector_store %arg8[%c0_17, %c0_18], %32 {strides = array<i32>} : memref<8x2xf32, #tpu.memory_space<vmem>>, vector<8x1xf32>,
      %c0_19 = arith.constant 0 : index
      %c0_20 = arith.constant 0 : index
      %34 = vector.load %arg9[%c0_19, %c0_20] : memref<8x128xf32, #tpu.memory_space<vmem>>, vector<8x64xf32>
      %35 = vector.broadcast %24 : vector<8x1xf32> to vector<8x64xf32>
      %36 = arith.mulf %35, %34 : vector<8x64xf32>
      %37 = arith.truncf %27 : vector<8x8xf32> to vector<8x8xbf16>
      %c0_21 = arith.constant 0 : index
      %c0_22 = arith.constant 0 : index
      %c0_23 = arith.constant 0 : index
      %38 = vector.load %arg5[%c0_21, %c0_22, %c0_23] : memref<1x8x128xbf16, #tpu.memory_space<vmem>>, vector<1x8x64xbf16>
      %39 = vector.shape_cast %38 : vector<1x8x64xbf16> to vector<8x64xbf16>
      %cst_24 = arith.constant dense<0.000000e+00> : vector<8x64xf32>
      %40 = tpu.matmul %37, %39, %cst_24 {dimension_numbers = #tpu.dot_dimension_numbers<[1], [0], [0], [1], [0, 0, 1, 1], [], []>} : vector<8x8xbf16>, vector<8x64xbf16>, vector<8x64xf32> -> vector<8x64xf32>
      %41 = arith.addf %36, %40 : vector<8x64xf32>
      %c0_25 = arith.constant 0 : index
      %c0_26 = arith.constant 0 : index
      %42 = vector.load %arg9[%c0_25, %c0_26] : memref<8x128xf32, #tpu.memory_space<vmem>>, vector<8x64xf32>
      tpu.vector_store %arg9[%c0_25, %c0_26], %41 {strides = array<i32>} : memref<8x128xf32, #tpu.memory_space<vmem>>, vector<8x64xf32>,
      %c0_27 = arith.constant 0 : index
      %c0_28 = arith.constant 0 : index
      %43 = vector.load %arg7[%c0_27, %c0_28] : memref<8x2xf32, #tpu.memory_space<vmem>>, vector<8x1xf32>
      tpu.vector_store %arg7[%c0_27, %c0_28], %22 {strides = array<i32>} : memref<8x2xf32, #tpu.memory_space<vmem>>, vector<8x1xf32>,
      %c0_29 = arith.constant 0 : index
      %c0_30 = arith.constant 0 : index
      %c64 = arith.constant 64 : index
      %44 = vector.load %arg3[%c0_29, %c0_30, %c64] : memref<1x8x128xbf16, #tpu.memory_space<vmem>>, vector<1x8x64xbf16>
      %45 = vector.shape_cast %44 : vector<1x8x64xbf16> to vector<8x64xbf16>
      %cst_31 = arith.constant 1.250000e-01 : bf16
      %46 = vector.broadcast %cst_31 : bf16 to vector<8x64xbf16>
      %47 = arith.mulf %45, %46 : vector<8x64xbf16>
      %c0_32 = arith.constant 0 : index
      %c0_33 = arith.constant 0 : index
      %c64_34 = arith.constant 64 : index
      %48 = vector.load %arg4[%c0_32, %c0_33, %c64_34] : memref<1x8x128xbf16, #tpu.memory_space<vmem>>, vector<1x8x64xbf16>
      %49 = vector.shape_cast %48 : vector<1x8x64xbf16> to vector<8x64xbf16>
      %cst_35 = arith.constant dense<0.000000e+00> : vector<8x8xf32>
      %50 = tpu.matmul %47, %49, %cst_35 {dimension_numbers = #tpu.dot_dimension_numbers<[1], [1], [0], [0], [0, 0, 1, 0], [], []>} : vector<8x64xbf16>, vector<8x64xbf16>, vector<8x8xf32> -> vector<8x8xf32>
      %c0_36 = arith.constant 0 : index
      %c1 = arith.constant 1 : index
      %51 = vector.load %arg7[%c0_36, %c1] : memref<8x2xf32, #tpu.memory_space<vmem>>, vector<8x1xf32>
      %cst_37 = arith.constant dense<0xFF800000> : vector<8xf32>
      %52 = vector.multi_reduction <maximumf>, %50, %cst_37 [1] : vector<8x8xf32> to vector<8xf32>
      %53 = vector.shape_cast %52 : vector<8xf32> to vector<8x1xf32>
      %54 = arith.maximumf %51, %53 : vector<8x1xf32>
      %55 = arith.subf %51, %54 : vector<8x1xf32>
      %56 = math.exp %55 : vector<8x1xf32>
      %57 = vector.broadcast %54 : vector<8x1xf32> to vector<8x8xf32>
      %58 = arith.subf %50, %57 : vector<8x8xf32>
      %59 = math.exp %58 : vector<8x8xf32>
      %c0_38 = arith.constant 0 : index
      %c1_39 = arith.constant 1 : index
      %60 = vector.load %arg8[%c0_38, %c1_39] : memref<8x2xf32, #tpu.memory_space<vmem>>, vector<8x1xf32>
      %61 = arith.mulf %56, %60 : vector<8x1xf32>
      %cst_40 = arith.constant dense<0.000000e+00> : vector<8xf32>
      %62 = vector.multi_reduction <add>, %59, %cst_40 [1] : vector<8x8xf32> to vector<8xf32>
      %63 = vector.shape_cast %62 : vector<8xf32> to vector<8x1xf32>
      %64 = arith.addf %61, %63 : vector<8x1xf32>
      %c0_41 = arith.constant 0 : index
      %c1_42 = arith.constant 1 : index
      %65 = vector.load %arg8[%c0_41, %c1_42] : memref<8x2xf32, #tpu.memory_space<vmem>>, vector<8x1xf32>
      tpu.vector_store %arg8[%c0_41, %c1_42], %64 {strides = array<i32>} : memref<8x2xf32, #tpu.memory_space<vmem>>, vector<8x1xf32>,
      %c0_43 = arith.constant 0 : index
      %c64_44 = arith.constant 64 : index
      %66 = vector.load %arg9[%c0_43, %c64_44] : memref<8x128xf32, #tpu.memory_space<vmem>>, vector<8x64xf32>
      %67 = vector.broadcast %56 : vector<8x1xf32> to vector<8x64xf32>
      %68 = arith.mulf %67, %66 : vector<8x64xf32>
      %69 = arith.truncf %59 : vector<8x8xf32> to vector<8x8xbf16>
      %c0_45 = arith.constant 0 : index
      %c0_46 = arith.constant 0 : index
      %c64_47 = arith.constant 64 : index
      %70 = vector.load %arg5[%c0_45, %c0_46, %c64_47] : memref<1x8x128xbf16, #tpu.memory_space<vmem>>, vector<1x8x64xbf16>
      %71 = vector.shape_cast %70 : vector<1x8x64xbf16> to vector<8x64xbf16>
      %cst_48 = arith.constant dense<0.000000e+00> : vector<8x64xf32>
      %72 = tpu.matmul %69, %71, %cst_48 {dimension_numbers = #tpu.dot_dimension_numbers<[1], [0], [0], [1], [0, 0, 1, 1], [], []>} : vector<8x8xbf16>, vector<8x64xbf16>, vector<8x64xf32> -> vector<8x64xf32>
      %73 = arith.addf %68, %72 : vector<8x64xf32>
      %c0_49 = arith.constant 0 : index
      %c64_50 = arith.constant 64 : index
      %74 = vector.load %arg9[%c0_49, %c64_50] : memref<8x128xf32, #tpu.memory_space<vmem>>, vector<8x64xf32>
      tpu.vector_store %arg9[%c0_49, %c64_50], %73 {strides = array<i32>} : memref<8x128xf32, #tpu.memory_space<vmem>>, vector<8x64xf32>,
      %c0_51 = arith.constant 0 : index
      %c1_52 = arith.constant 1 : index
      %75 = vector.load %arg7[%c0_51, %c1_52] : memref<8x2xf32, #tpu.memory_space<vmem>>, vector<8x1xf32>
      tpu.vector_store %arg7[%c0_51, %c1_52], %54 {strides = array<i32>} : memref<8x2xf32, #tpu.memory_space<vmem>>, vector<8x1xf32>,
    } else {
    }
    %6 = arith.cmpi eq, %arg2, %arg1 : i32
    %7 = arith.extui %6 : i1 to i32
    %c0_i32_2 = arith.constant 0 : i32
    %8 = arith.cmpi ne, %7, %c0_i32_2 : i32
    scf.if %8 {
      %12 = tpu.iota {dimensions = array<i32: 0>} : vector<8x8xi32>
      %13 = tpu.iota {dimensions = array<i32: 1>} : vector<8x8xi32>
      %14 = arith.cmpi sle, %13, %12 : vector<8x8xi32>
      %c0 = arith.constant 0 : index
      %c0_5 = arith.constant 0 : index
      %c0_6 = arith.constant 0 : index
      %15 = vector.load %arg3[%c0, %c0_5, %c0_6] : memref<1x8x128xbf16, #tpu.memory_space<vmem>>, vector<1x8x64xbf16>
      %16 = vector.shape_cast %15 : vector<1x8x64xbf16> to vector<8x64xbf16>
      %cst = arith.constant 1.250000e-01 : bf16
      %17 = vector.broadcast %cst : bf16 to vector<8x64xbf16>
      %18 = arith.mulf %16, %17 : vector<8x64xbf16>
      %c0_7 = arith.constant 0 : index
      %c0_8 = arith.constant 0 : index
      %c0_9 = arith.constant 0 : index
      %19 = vector.load %arg4[%c0_7, %c0_8, %c0_9] : memref<1x8x128xbf16, #tpu.memory_space<vmem>>, vector<1x8x64xbf16>
      %20 = vector.shape_cast %19 : vector<1x8x64xbf16> to vector<8x64xbf16>
      %cst_10 = arith.constant dense<0.000000e+00> : vector<8x8xf32>
      %21 = tpu.matmul %18, %20, %cst_10 {dimension_numbers = #tpu.dot_dimension_numbers<[1], [1], [0], [0], [0, 0, 1, 0], [], []>} : vector<8x64xbf16>, vector<8x64xbf16>, vector<8x8xf32> -> vector<8x8xf32>
      %cst_11 = arith.constant -1.000000e+30 : f32
      %22 = vector.broadcast %cst_11 : f32 to vector<8x8xf32>
      %23 = arith.select %14, %21, %22 : vector<8x8xi1>, vector<8x8xf32>
      %c0_12 = arith.constant 0 : index
      %c0_13 = arith.constant 0 : index
      %24 = vector.load %arg7[%c0_12, %c0_13] : memref<8x2xf32, #tpu.memory_space<vmem>>, vector<8x1xf32>
      %cst_14 = arith.constant dense<0xFF800000> : vector<8xf32>
      %25 = vector.multi_reduction <maximumf>, %23, %cst_14 [1] : vector<8x8xf32> to vector<8xf32>
      %26 = vector.shape_cast %25 : vector<8xf32> to vector<8x1xf32>
      %27 = arith.maximumf %24, %26 : vector<8x1xf32>
      %28 = arith.subf %24, %27 : vector<8x1xf32>
      %29 = math.exp %28 : vector<8x1xf32>
      %30 = vector.broadcast %27 : vector<8x1xf32> to vector<8x8xf32>
      %31 = arith.subf %23, %30 : vector<8x8xf32>
      %32 = math.exp %31 : vector<8x8xf32>
      %c0_15 = arith.constant 0 : index
      %c0_16 = arith.constant 0 : index
      %33 = vector.load %arg8[%c0_15, %c0_16] : memref<8x2xf32, #tpu.memory_space<vmem>>, vector<8x1xf32>
      %34 = arith.mulf %29, %33 : vector<8x1xf32>
      %cst_17 = arith.constant dense<0.000000e+00> : vector<8xf32>
      %35 = vector.multi_reduction <add>, %32, %cst_17 [1] : vector<8x8xf32> to vector<8xf32>
      %36 = vector.shape_cast %35 : vector<8xf32> to vector<8x1xf32>
      %37 = arith.addf %34, %36 : vector<8x1xf32>
      %c0_18 = arith.constant 0 : index
      %c0_19 = arith.constant 0 : index
      %38 = vector.load %arg8[%c0_18, %c0_19] : memref<8x2xf32, #tpu.memory_space<vmem>>, vector<8x1xf32>
      tpu.vector_store %arg8[%c0_18, %c0_19], %37 {strides = array<i32>} : memref<8x2xf32, #tpu.memory_space<vmem>>, vector<8x1xf32>,
      %c0_20 = arith.constant 0 : index
      %c0_21 = arith.constant 0 : index
      %39 = vector.load %arg9[%c0_20, %c0_21] : memref<8x128xf32, #tpu.memory_space<vmem>>, vector<8x64xf32>
      %40 = vector.broadcast %29 : vector<8x1xf32> to vector<8x64xf32>
      %41 = arith.mulf %40, %39 : vector<8x64xf32>
      %42 = arith.truncf %32 : vector<8x8xf32> to vector<8x8xbf16>
      %c0_22 = arith.constant 0 : index
      %c0_23 = arith.constant 0 : index
      %c0_24 = arith.constant 0 : index
      %43 = vector.load %arg5[%c0_22, %c0_23, %c0_24] : memref<1x8x128xbf16, #tpu.memory_space<vmem>>, vector<1x8x64xbf16>
      %44 = vector.shape_cast %43 : vector<1x8x64xbf16> to vector<8x64xbf16>
      %cst_25 = arith.constant dense<0.000000e+00> : vector<8x64xf32>
      %45 = tpu.matmul %42, %44, %cst_25 {dimension_numbers = #tpu.dot_dimension_numbers<[1], [0], [0], [1], [0, 0, 1, 1], [], []>} : vector<8x8xbf16>, vector<8x64xbf16>, vector<8x64xf32> -> vector<8x64xf32>
      %46 = arith.addf %41, %45 : vector<8x64xf32>
      %c0_26 = arith.constant 0 : index
      %c0_27 = arith.constant 0 : index
      %47 = vector.load %arg9[%c0_26, %c0_27] : memref<8x128xf32, #tpu.memory_space<vmem>>, vector<8x64xf32>
      tpu.vector_store %arg9[%c0_26, %c0_27], %46 {strides = array<i32>} : memref<8x128xf32, #tpu.memory_space<vmem>>, vector<8x64xf32>,
      %c0_28 = arith.constant 0 : index
      %c0_29 = arith.constant 0 : index
      %48 = vector.load %arg7[%c0_28, %c0_29] : memref<8x2xf32, #tpu.memory_space<vmem>>, vector<8x1xf32>
      tpu.vector_store %arg7[%c0_28, %c0_29], %27 {strides = array<i32>} : memref<8x2xf32, #tpu.memory_space<vmem>>, vector<8x1xf32>,
      %c0_30 = arith.constant 0 : index
      %c0_31 = arith.constant 0 : index
      %c64 = arith.constant 64 : index
      %49 = vector.load %arg3[%c0_30, %c0_31, %c64] : memref<1x8x128xbf16, #tpu.memory_space<vmem>>, vector<1x8x64xbf16>
      %50 = vector.shape_cast %49 : vector<1x8x64xbf16> to vector<8x64xbf16>
      %cst_32 = arith.constant 1.250000e-01 : bf16
      %51 = vector.broadcast %cst_32 : bf16 to vector<8x64xbf16>
      %52 = arith.mulf %50, %51 : vector<8x64xbf16>
      %c0_33 = arith.constant 0 : index
      %c0_34 = arith.constant 0 : index
      %c64_35 = arith.constant 64 : index
      %53 = vector.load %arg4[%c0_33, %c0_34, %c64_35] : memref<1x8x128xbf16, #tpu.memory_space<vmem>>, vector<1x8x64xbf16>
      %54 = vector.shape_cast %53 : vector<1x8x64xbf16> to vector<8x64xbf16>
      %cst_36 = arith.constant dense<0.000000e+00> : vector<8x8xf32>
      %55 = tpu.matmul %52, %54, %cst_36 {dimension_numbers = #tpu.dot_dimension_numbers<[1], [1], [0], [0], [0, 0, 1, 0], [], []>} : vector<8x64xbf16>, vector<8x64xbf16>, vector<8x8xf32> -> vector<8x8xf32>
      %cst_37 = arith.constant -1.000000e+30 : f32
      %56 = vector.broadcast %cst_37 : f32 to vector<8x8xf32>
      %57 = arith.select %14, %55, %56 : vector<8x8xi1>, vector<8x8xf32>
      %c0_38 = arith.constant 0 : index
      %c1 = arith.constant 1 : index
      %58 = vector.load %arg7[%c0_38, %c1] : memref<8x2xf32, #tpu.memory_space<vmem>>, vector<8x1xf32>
      %cst_39 = arith.constant dense<0xFF800000> : vector<8xf32>
      %59 = vector.multi_reduction <maximumf>, %57, %cst_39 [1] : vector<8x8xf32> to vector<8xf32>
      %60 = vector.shape_cast %59 : vector<8xf32> to vector<8x1xf32>
      %61 = arith.maximumf %58, %60 : vector<8x1xf32>
      %62 = arith.subf %58, %61 : vector<8x1xf32>
      %63 = math.exp %62 : vector<8x1xf32>
      %64 = vector.broadcast %61 : vector<8x1xf32> to vector<8x8xf32>
      %65 = arith.subf %57, %64 : vector<8x8xf32>
      %66 = math.exp %65 : vector<8x8xf32>
      %c0_40 = arith.constant 0 : index
      %c1_41 = arith.constant 1 : index
      %67 = vector.load %arg8[%c0_40, %c1_41] : memref<8x2xf32, #tpu.memory_space<vmem>>, vector<8x1xf32>
      %68 = arith.mulf %63, %67 : vector<8x1xf32>
      %cst_42 = arith.constant dense<0.000000e+00> : vector<8xf32>
      %69 = vector.multi_reduction <add>, %66, %cst_42 [1] : vector<8x8xf32> to vector<8xf32>
      %70 = vector.shape_cast %69 : vector<8xf32> to vector<8x1xf32>
      %71 = arith.addf %68, %70 : vector<8x1xf32>
      %c0_43 = arith.constant 0 : index
      %c1_44 = arith.constant 1 : index
      %72 = vector.load %arg8[%c0_43, %c1_44] : memref<8x2xf32, #tpu.memory_space<vmem>>, vector<8x1xf32>
      tpu.vector_store %arg8[%c0_43, %c1_44], %71 {strides = array<i32>} : memref<8x2xf32, #tpu.memory_space<vmem>>, vector<8x1xf32>,
      %c0_45 = arith.constant 0 : index
      %c64_46 = arith.constant 64 : index
      %73 = vector.load %arg9[%c0_45, %c64_46] : memref<8x128xf32, #tpu.memory_space<vmem>>, vector<8x64xf32>
      %74 = vector.broadcast %63 : vector<8x1xf32> to vector<8x64xf32>
      %75 = arith.mulf %74, %73 : vector<8x64xf32>
      %76 = arith.truncf %66 : vector<8x8xf32> to vector<8x8xbf16>
      %c0_47 = arith.constant 0 : index
      %c0_48 = arith.constant 0 : index
      %c64_49 = arith.constant 64 : index
      %77 = vector.load %arg5[%c0_47, %c0_48, %c64_49] : memref<1x8x128xbf16, #tpu.memory_space<vmem>>, vector<1x8x64xbf16>
      %78 = vector.shape_cast %77 : vector<1x8x64xbf16> to vector<8x64xbf16>
      %cst_50 = arith.constant dense<0.000000e+00> : vector<8x64xf32>
      %79 = tpu.matmul %76, %78, %cst_50 {dimension_numbers = #tpu.dot_dimension_numbers<[1], [0], [0], [1], [0, 0, 1, 1], [], []>} : vector<8x8xbf16>, vector<8x64xbf16>, vector<8x64xf32> -> vector<8x64xf32>
      %80 = arith.addf %75, %79 : vector<8x64xf32>
      %c0_51 = arith.constant 0 : index
      %c64_52 = arith.constant 64 : index
      %81 = vector.load %arg9[%c0_51, %c64_52] : memref<8x128xf32, #tpu.memory_space<vmem>>, vector<8x64xf32>
      tpu.vector_store %arg9[%c0_51, %c64_52], %80 {strides = array<i32>} : memref<8x128xf32, #tpu.memory_space<vmem>>, vector<8x64xf32>,
      %c0_53 = arith.constant 0 : index
      %c1_54 = arith.constant 1 : index
      %82 = vector.load %arg7[%c0_53, %c1_54] : memref<8x2xf32, #tpu.memory_space<vmem>>, vector<8x1xf32>
      tpu.vector_store %arg7[%c0_53, %c1_54], %61 {strides = array<i32>} : memref<8x2xf32, #tpu.memory_space<vmem>>, vector<8x1xf32>,
    } else {
    }
    %c0_i32_3 = arith.constant 0 : i32
    %9 = arith.cmpi eq, %arg2, %c0_i32_3 : i32
    %10 = arith.extui %9 : i1 to i32
    %c0_i32_4 = arith.constant 0 : i32
    %11 = arith.cmpi ne, %10, %c0_i32_4 : i32
    scf.if %11 {
      %c0 = arith.constant 0 : index
      %c0_5 = arith.constant 0 : index
      %12 = vector.load %arg8[%c0, %c0_5] : memref<8x2xf32, #tpu.memory_space<vmem>>, vector<8x1xf32>
      %13 = tpu.reciprocal %12 {approx = true} : vector<8x1xf32> -> vector<8x1xf32>
      %c0_6 = arith.constant 0 : index
      %c0_7 = arith.constant 0 : index
      %14 = vector.load %arg9[%c0_6, %c0_7] : memref<8x128xf32, #tpu.memory_space<vmem>>, vector<8x64xf32>
      %15 = vector.broadcast %13 : vector<8x1xf32> to vector<8x64xf32>
      %16 = arith.mulf %14, %15 : vector<8x64xf32>
      %c0_8 = arith.constant 0 : index
      %c0_9 = arith.constant 0 : index
      %17 = vector.load %arg9[%c0_8, %c0_9] : memref<8x128xf32, #tpu.memory_space<vmem>>, vector<8x64xf32>
      tpu.vector_store %arg9[%c0_8, %c0_9], %16 {strides = array<i32>} : memref<8x128xf32, #tpu.memory_space<vmem>>, vector<8x64xf32>,
      %c0_10 = arith.constant 0 : index
      %c1 = arith.constant 1 : index
      %18 = vector.load %arg8[%c0_10, %c1] : memref<8x2xf32, #tpu.memory_space<vmem>>, vector<8x1xf32>
      %19 = tpu.reciprocal %18 {approx = true} : vector<8x1xf32> -> vector<8x1xf32>
      %c0_11 = arith.constant 0 : index
      %c64 = arith.constant 64 : index
      %20 = vector.load %arg9[%c0_11, %c64] : memref<8x128xf32, #tpu.memory_space<vmem>>, vector<8x64xf32>
      %21 = vector.broadcast %19 : vector<8x1xf32> to vector<8x64xf32>
      %22 = arith.mulf %20, %21 : vector<8x64xf32>
      %c0_12 = arith.constant 0 : index
      %c64_13 = arith.constant 64 : index
      %23 = vector.load %arg9[%c0_12, %c64_13] : memref<8x128xf32, #tpu.memory_space<vmem>>, vector<8x64xf32>
      tpu.vector_store %arg9[%c0_12, %c64_13], %22 {strides = array<i32>} : memref<8x128xf32, #tpu.memory_space<vmem>>, vector<8x64xf32>,
      %c0_14 = arith.constant 0 : index
      %c0_15 = arith.constant 0 : index
      %24 = vector.load %arg9[%c0_14, %c0_15] : memref<8x128xf32, #tpu.memory_space<vmem>>, vector<8x128xf32>
      %25 = arith.truncf %24 : vector<8x128xf32> to vector<8x128xbf16>
      %c0_16 = arith.constant 0 : index
      %c0_17 = arith.constant 0 : index
      %c0_18 = arith.constant 0 : index
      %26 = vector.load %arg6[%c0_16, %c0_17, %c0_18] : memref<1x8x128xbf16, #tpu.memory_space<vmem>>, vector<1x8x128xbf16>
      %27 = vector.shape_cast %26 : vector<1x8x128xbf16> to vector<8x128xbf16>
      %28 = vector.shape_cast %25 : vector<8x128xbf16> to vector<1x8x128xbf16>
      tpu.vector_store %arg6[%c0_16, %c0_17, %c0_18], %28 {strides = array<i32>} : memref<1x8x128xbf16, #tpu.memory_space<vmem>>, vector<1x8x128xbf16>,
    } else {
    }
    return
  }
  func.func @transform_0(%arg0: i32, %arg1: i32, %arg2: i32) -> (i32, i32, i32) {
    %c0_i32 = arith.constant 0 : i32
    %c0_i32_0 = arith.constant 0 : i32
    return %arg0, %arg1, %c0_i32 : i32, i32, i32
  }
  func.func @transform_1(%arg0: i32, %arg1: i32, %arg2: i32) -> (i32, i32, i32) {
    %0 = arith.minsi %arg2, %arg1 : i32
    %c1_i32 = arith.constant 1 : i32
    %c0_i32 = arith.constant 0 : i32
    return %arg0, %0, %c1_i32 : i32, i32, i32
  }
  func.func @transform_2(%arg0: i32, %arg1: i32, %arg2: i32) -> (i32, i32, i32) {
    %0 = arith.minsi %arg2, %arg1 : i32
    %c2_i32 = arith.constant 2 : i32
    %c0_i32 = arith.constant 0 : i32
    return %arg0, %0, %c2_i32 : i32, i32, i32
  }
  func.func @transform_3(%arg0: i32, %arg1: i32, %arg2: i32) -> (i32, i32, i32) {
    %c0_i32 = arith.constant 0 : i32
    %c0_i32_0 = arith.constant 0 : i32
    return %arg0, %arg1, %c0_i32 : i32, i32, i32
  }
}

module attributes {stable_mosaic.version = 11 : i64} {
  func.func @_matmul_residual_kernel(%arg0: i32, %arg1: i32, %arg2: i32, %arg3: memref<16x512xbf16, #tpu.memory_space<vmem>>, %arg4: memref<512x128xbf16, #tpu.memory_space<vmem>>, %arg5: memref<1x128xf32, #tpu.memory_space<vmem>>, %arg6: memref<16x128xf32, #tpu.memory_space<vmem>>, %arg7: memref<16x128xf32, #tpu.memory_space<vmem>>, %arg8: memref<16x128xf32, #tpu.memory_space<vmem>>) attributes {dimension_semantics = [#tpu.dimension_semantics<parallel>, #tpu.dimension_semantics<parallel>, #tpu.dimension_semantics<arbitrary>], iteration_bounds = array<i64: 1, 1, 1>, scalar_prefetch = 0 : i64, scratch_operands = 1 : i64, tpu.core_type = #tpu.core_type<tc>, window_params = [{transform_indices = @transform_0, window_bounds = array<i64: 16, 512>}, {transform_indices = @transform_1, window_bounds = array<i64: 512, 128>}, {transform_indices = @transform_2, window_bounds = array<i64: 1, 128>}, {transform_indices = @transform_3, window_bounds = array<i64: 16, 128>}, {transform_indices = @transform_4, window_bounds = array<i64: 16, 128>}]} {
    %c0_i32 = arith.constant 0 : i32
    %0 = arith.cmpi eq, %arg2, %c0_i32 : i32
    %1 = arith.extui %0 : i1 to i32
    %c0_i32_0 = arith.constant 0 : i32
    %2 = arith.cmpi ne, %1, %c0_i32_0 : i32
    scf.if %2 {
      %cst_10 = arith.constant 0.000000e+00 : f32
      %12 = vector.broadcast %cst_10 : f32 to vector<16x128xf32>
      %c0_11 = arith.constant 0 : index
      %c0_12 = arith.constant 0 : index
      %13 = vector.load %arg8[%c0_11, %c0_12] : memref<16x128xf32, #tpu.memory_space<vmem>>, vector<16x128xf32>
      tpu.vector_store %arg8[%c0_11, %c0_12], %12 {strides = array<i32>} : memref<16x128xf32, #tpu.memory_space<vmem>>, vector<16x128xf32>,
    } else {
    }
    %c0 = arith.constant 0 : index
    %c0_1 = arith.constant 0 : index
    %3 = vector.load %arg8[%c0, %c0_1] : memref<16x128xf32, #tpu.memory_space<vmem>>, vector<16x128xf32>
    %c0_2 = arith.constant 0 : index
    %c0_3 = arith.constant 0 : index
    %4 = vector.load %arg3[%c0_2, %c0_3] : memref<16x512xbf16, #tpu.memory_space<vmem>>, vector<16x512xbf16>
    %c0_4 = arith.constant 0 : index
    %c0_5 = arith.constant 0 : index
    %5 = vector.load %arg4[%c0_4, %c0_5] : memref<512x128xbf16, #tpu.memory_space<vmem>>, vector<512x128xbf16>
    %cst = arith.constant dense<0.000000e+00> : vector<16x128xf32>
    %6 = tpu.matmul %4, %5, %cst {dimension_numbers = #tpu.dot_dimension_numbers<[1], [0], [0], [1], [0, 0, 1, 1], [], []>} : vector<16x512xbf16>, vector<512x128xbf16>, vector<16x128xf32> -> vector<16x128xf32>
    %7 = arith.addf %3, %6 : vector<16x128xf32>
    %c0_6 = arith.constant 0 : index
    %c0_7 = arith.constant 0 : index
    %8 = vector.load %arg8[%c0_6, %c0_7] : memref<16x128xf32, #tpu.memory_space<vmem>>, vector<16x128xf32>
    tpu.vector_store %arg8[%c0_6, %c0_7], %7 {strides = array<i32>} : memref<16x128xf32, #tpu.memory_space<vmem>>, vector<16x128xf32>,
    %c0_i32_8 = arith.constant 0 : i32
    %9 = arith.cmpi eq, %arg2, %c0_i32_8 : i32
    %10 = arith.extui %9 : i1 to i32
    %c0_i32_9 = arith.constant 0 : i32
    %11 = arith.cmpi ne, %10, %c0_i32_9 : i32
    scf.if %11 {
      %c0_10 = arith.constant 0 : index
      %c0_11 = arith.constant 0 : index
      %12 = vector.load %arg8[%c0_10, %c0_11] : memref<16x128xf32, #tpu.memory_space<vmem>>, vector<16x128xf32>
      %c0_12 = arith.constant 0 : index
      %c0_13 = arith.constant 0 : index
      %13 = vector.load %arg5[%c0_12, %c0_13] : memref<1x128xf32, #tpu.memory_space<vmem>>, vector<1x128xf32>
      %14 = vector.broadcast %13 : vector<1x128xf32> to vector<16x128xf32>
      %15 = arith.addf %12, %14 : vector<16x128xf32>
      %c0_14 = arith.constant 0 : index
      %c0_15 = arith.constant 0 : index
      %16 = vector.load %arg6[%c0_14, %c0_15] : memref<16x128xf32, #tpu.memory_space<vmem>>, vector<16x128xf32>
      %17 = arith.addf %15, %16 : vector<16x128xf32>
      %c0_16 = arith.constant 0 : index
      %c0_17 = arith.constant 0 : index
      %18 = vector.load %arg7[%c0_16, %c0_17] : memref<16x128xf32, #tpu.memory_space<vmem>>, vector<16x128xf32>
      tpu.vector_store %arg7[%c0_16, %c0_17], %17 {strides = array<i32>} : memref<16x128xf32, #tpu.memory_space<vmem>>, vector<16x128xf32>,
    } else {
    }
    return
  }
  func.func @transform_0(%arg0: i32, %arg1: i32, %arg2: i32) -> (i32, i32) {
    %c0_i32 = arith.constant 0 : i32
    return %arg0, %arg2 : i32, i32
  }
  func.func @transform_1(%arg0: i32, %arg1: i32, %arg2: i32) -> (i32, i32) {
    %c0_i32 = arith.constant 0 : i32
    return %arg2, %arg1 : i32, i32
  }
  func.func @transform_2(%arg0: i32, %arg1: i32, %arg2: i32) -> (i32, i32) {
    %c0_i32 = arith.constant 0 : i32
    %c0_i32_0 = arith.constant 0 : i32
    return %c0_i32, %arg1 : i32, i32
  }
  func.func @transform_3(%arg0: i32, %arg1: i32, %arg2: i32) -> (i32, i32) {
    %c0_i32 = arith.constant 0 : i32
    return %arg0, %arg1 : i32, i32
  }
  func.func @transform_4(%arg0: i32, %arg1: i32, %arg2: i32) -> (i32, i32) {
    %c0_i32 = arith.constant 0 : i32
    return %arg0, %arg1 : i32, i32
  }
}

module attributes {stable_mosaic.version = 11 : i64} {
  func.func @_ln_lm_head_kernel(%arg0: i32, %arg1: i32, %arg2: memref<16x128xf32, #tpu.memory_space<vmem>>, %arg3: memref<1x128xf32, #tpu.memory_space<vmem>>, %arg4: memref<1x128xf32, #tpu.memory_space<vmem>>, %arg5: memref<256x128xbf16, #tpu.memory_space<vmem>>, %arg6: memref<16x256xf32, #tpu.memory_space<vmem>>, %arg7: memref<16x128xbf16, #tpu.memory_space<vmem>>) attributes {dimension_semantics = [#tpu.dimension_semantics<parallel>, #tpu.dimension_semantics<arbitrary>], iteration_bounds = array<i64: 1, 1>, scalar_prefetch = 0 : i64, scratch_operands = 1 : i64, tpu.core_type = #tpu.core_type<tc>, window_params = [{transform_indices = @transform_0, window_bounds = array<i64: 16, 128>}, {pipeline_mode = #tpu.pipeline_mode<synchronous>, transform_indices = @transform_1, window_bounds = array<i64: 1, 128>}, {pipeline_mode = #tpu.pipeline_mode<synchronous>, transform_indices = @transform_2, window_bounds = array<i64: 1, 128>}, {transform_indices = @transform_3, window_bounds = array<i64: 256, 128>}, {transform_indices = @transform_4, window_bounds = array<i64: 16, 256>}]} {
    %c0_i32 = arith.constant 0 : i32
    %0 = arith.cmpi eq, %arg1, %c0_i32 : i32
    %1 = arith.extui %0 : i1 to i32
    %c0_i32_0 = arith.constant 0 : i32
    %2 = arith.cmpi ne, %1, %c0_i32_0 : i32
    scf.if %2 {
      %c0_6 = arith.constant 0 : index
      %c0_7 = arith.constant 0 : index
      %7 = vector.load %arg2[%c0_6, %c0_7] : memref<16x128xf32, #tpu.memory_space<vmem>>, vector<16x128xf32>
      %cst_8 = arith.constant dense<0.000000e+00> : vector<16xf32>
      %8 = vector.multi_reduction <add>, %7, %cst_8 [1] : vector<16x128xf32> to vector<16xf32>
      %9 = vector.shape_cast %8 : vector<16xf32> to vector<16x1xf32>
      %cst_9 = arith.constant 1.280000e+02 : f32
      %10 = vector.broadcast %cst_9 : f32 to vector<16x1xf32>
      %11 = arith.divf %9, %10 : vector<16x1xf32>
      %12 = vector.broadcast %11 : vector<16x1xf32> to vector<16x128xf32>
      %13 = arith.subf %7, %12 : vector<16x128xf32>
      %14 = arith.mulf %13, %13 : vector<16x128xf32>
      %cst_10 = arith.constant dense<0.000000e+00> : vector<16xf32>
      %15 = vector.multi_reduction <add>, %14, %cst_10 [1] : vector<16x128xf32> to vector<16xf32>
      %16 = vector.shape_cast %15 : vector<16xf32> to vector<16x1xf32>
      %cst_11 = arith.constant 1.280000e+02 : f32
      %17 = vector.broadcast %cst_11 : f32 to vector<16x1xf32>
      %18 = arith.divf %16, %17 : vector<16x1xf32>
      %cst_12 = arith.constant 9.99999974E-6 : f32
      %19 = vector.broadcast %cst_12 : f32 to vector<16x1xf32>
      %20 = arith.addf %18, %19 : vector<16x1xf32>
      %21 = math.rsqrt %20 : vector<16x1xf32>
      %22 = vector.broadcast %21 : vector<16x1xf32> to vector<16x128xf32>
      %23 = arith.mulf %13, %22 : vector<16x128xf32>
      %c0_13 = arith.constant 0 : index
      %c0_14 = arith.constant 0 : index
      %24 = vector.load %arg3[%c0_13, %c0_14] : memref<1x128xf32, #tpu.memory_space<vmem>>, vector<1x128xf32>
      %25 = vector.broadcast %24 : vector<1x128xf32> to vector<16x128xf32>
      %26 = arith.mulf %23, %25 : vector<16x128xf32>
      %c0_15 = arith.constant 0 : index
      %c0_16 = arith.constant 0 : index
      %27 = vector.load %arg4[%c0_15, %c0_16] : memref<1x128xf32, #tpu.memory_space<vmem>>, vector<1x128xf32>
      %28 = vector.broadcast %27 : vector<1x128xf32> to vector<16x128xf32>
      %29 = arith.addf %26, %28 : vector<16x128xf32>
      %30 = arith.truncf %29 : vector<16x128xf32> to vector<16x128xbf16>
      %c0_17 = arith.constant 0 : index
      %c0_18 = arith.constant 0 : index
      %31 = vector.load %arg7[%c0_17, %c0_18] : memref<16x128xbf16, #tpu.memory_space<vmem>>, vector<16x128xbf16>
      tpu.vector_store %arg7[%c0_17, %c0_18], %30 {strides = array<i32>} : memref<16x128xbf16, #tpu.memory_space<vmem>>, vector<16x128xbf16>,
    } else {
    }
    %c0 = arith.constant 0 : index
    %c0_1 = arith.constant 0 : index
    %3 = vector.load %arg7[%c0, %c0_1] : memref<16x128xbf16, #tpu.memory_space<vmem>>, vector<16x128xbf16>
    %c0_2 = arith.constant 0 : index
    %c0_3 = arith.constant 0 : index
    %4 = vector.load %arg5[%c0_2, %c0_3] : memref<256x128xbf16, #tpu.memory_space<vmem>>, vector<256x128xbf16>
    %cst = arith.constant dense<0.000000e+00> : vector<16x256xf32>
    %5 = tpu.matmul %3, %4, %cst {dimension_numbers = #tpu.dot_dimension_numbers<[1], [1], [0], [0], [0, 0, 1, 0], [], []>} : vector<16x128xbf16>, vector<256x128xbf16>, vector<16x256xf32> -> vector<16x256xf32>
    %c0_4 = arith.constant 0 : index
    %c0_5 = arith.constant 0 : index
    %6 = vector.load %arg6[%c0_4, %c0_5] : memref<16x256xf32, #tpu.memory_space<vmem>>, vector<16x256xf32>
    tpu.vector_store %arg6[%c0_4, %c0_5], %5 {strides = array<i32>} : memref<16x256xf32, #tpu.memory_space<vmem>>, vector<16x256xf32>,
    return
  }
  func.func @transform_0(%arg0: i32, %arg1: i32) -> (i32, i32) {
    %c0_i32 = arith.constant 0 : i32
    %c0_i32_0 = arith.constant 0 : i32
    return %arg0, %c0_i32 : i32, i32
  }
  func.func @transform_1(%arg0: i32, %arg1: i32) -> (i32, i32) {
    %c0_i32 = arith.constant 0 : i32
    %c0_i32_0 = arith.constant 0 : i32
    %c0_i32_1 = arith.constant 0 : i32
    return %c0_i32, %c0_i32_0 : i32, i32
  }
  func.func @transform_2(%arg0: i32, %arg1: i32) -> (i32, i32) {
    %c0_i32 = arith.constant 0 : i32
    %c0_i32_0 = arith.constant 0 : i32
    %c0_i32_1 = arith.constant 0 : i32
    return %c0_i32, %c0_i32_0 : i32, i32
  }
  func.func @transform_3(%arg0: i32, %arg1: i32) -> (i32, i32) {
    %c0_i32 = arith.constant 0 : i32
    %c0_i32_0 = arith.constant 0 : i32
    return %arg1, %c0_i32 : i32, i32
  }
  func.func @transform_4(%arg0: i32, %arg1: i32) -> (i32, i32) {
    %c0_i32 = arith.constant 0 : i32
    return %arg0, %arg1 : i32, i32
  }
}

</mosaic_0001>

<llo_original>
// kernel: _lambda_.13
$region0: #{_lambda_.13}
  #allocation0 [shape = 'u32[]', space=smem, size = 0x4, offset = 0x4, fixed_abs, tag = 'smem constant byte address 0x4 - core index']
  #allocation1 [shape = 'u32[72,128]{1,0:T(1,128)}', space=vmem, size = 0x9000, scoped, tag = 'internal scratch']
  #allocation2 [shape = 'f32[16,128]{1,0:T(8,128)}', space=vmem, size = 0x2000, scoped, tag = 'scratch operand']
  %s0 = inlined_call_operand.vmem [shape: bf16[16,128], index: 0, kind: input, shape index: {}]
  %s1 = inlined_call_operand.hbm [shape: bf16[128,128], index: 1, kind: input, shape index: {}]
  %s2 = inlined_call_operand.vmem [shape: f32[1,128], index: 2, kind: input, shape index: {}]
  %s3 = inlined_call_operand.vmem [shape: f32[16,128], index: 3, kind: input, shape index: {}]
  %s4 = inlined_call_operand.vmem [shape: f32[16,128], index: 4, kind: output, shape index: {}]
  %s5 = sld [smem:[#allocation0]]
  $region38: #{_lambda_.13} parent=0
    _
  %s7 = ssub.s32 1, %s5
  %s8 = scalar_select 0, %s7, %s5
  $region1: #{_lambda_.13} parent=0
    #allocation3 [shape = 'u8[32768]{0}', space=vmem, size = 0x8000, scoped, tag = 'input window, operand 1, single buffered']
    #allocation4 [shape = 's32[1]{0}', space=sflag, size = 0x4, scoped, tag = 'scoped memory for _lambda_.13']
    %9 = vsyncpa [#allocation4], 0
    // Predicated region
    $region2: #{_lambda_.13} parent=1 // pred_check
      _
    $region3: #{_lambda_.13} parent=1 // pred_check_branch
      %11 = sbr.rel (0) target = $region5
    $region4: #{_lambda_.13} parent=1 // pred_region
      _
    $region5: #{_lambda_.13} parent=1 // pred_fallthru
      _
    // Predicated region
    $region6: #{_lambda_.13} parent=1 // pred_check
      _
    $region7: #{_lambda_.13} parent=1 // pred_check_branch
      %13 = sbr.rel (0) target = $region9
    $region8: #{_lambda_.13} parent=1 // pred_region
      %15 = vsyncadd [#allocation4], 0
      %s16 = sshll.u32 %s1, 4
      %s17 = int_to_ptr.hbm [resolvable:$true] %s16
      %s18 = sshll.u32 [#allocation3], 4
      %s19 = int_to_ptr.vmem [resolvable:$true] %s18
      %24 = dma.hbm_to_vmem [thread:$0]  %s17, 1024, %s19, [#allocation4], 64, 64, 4
    $region9: #{_lambda_.13} parent=1 // pred_fallthru
      _
    // Predicated region
    $region10: #{_lambda_.13} parent=1 // pred_check
      _
    $region11: #{_lambda_.13} parent=1 // pred_check_branch
      %26 = sbr.rel (0) target = $region13
    $region12: #{_lambda_.13} parent=1 // pred_region
      _
    $region13: #{_lambda_.13} parent=1 // pred_fallthru
      _
    // Predicated region
    $region14: #{_lambda_.13} parent=1 // pred_check
      _
    $region15: #{_lambda_.13} parent=1 // pred_check_branch
      %28 = sbr.rel (0) target = $region17
    $region16: #{_lambda_.13} parent=1 // pred_region
      _
    $region17: #{_lambda_.13} parent=1 // pred_fallthru
      _
    // Predicated region
    $region18: #{_lambda_.13} parent=1 // pred_check
      _
    $region19: #{_lambda_.13} parent=1 // pred_check_branch
      %30 = sbr.rel (0) target = $region21
    $region20: #{_lambda_.13} parent=1 // pred_region
      %32 = dma.done [#allocation4], 1024
    $region21: #{_lambda_.13} parent=1 // pred_fallthru
      _
    %p33 = scmp.eq.s32.totalorder 0, 0
    // Predicated region
    $region22: #{_lambda_.13} parent=1 // pred_check
      %p34 = pneg %p33
    $region23: #{_lambda_.13} parent=1 // pred_check_branch
      %36 = sbr.rel (%p34) target = $region25
    $region24: #{_lambda_.13} parent=1 // pred_region
      %37 = vst [vmem:[#allocation2] sm:$0xff] 0.0
      %38 = vst [vmem:[#allocation2 + $0x8] sm:$0xff] 0.0
    $region25: #{_lambda_.13} parent=1 // pred_fallthru
      _
    %v39 = vld [vmem:[#allocation2] sm:$0xff]
    %v40 = vld [vmem:[#allocation2 + $0x8] sm:$0xff]
    %v41 = vld [vmem:[%s0] sm:$0xf]
    %v42 = vld [vmem:[%s0 + $0x4] sm:$0xf]
    %v43 = vld [vmem:[#allocation3] sm:$0xf]
    %v44 = vld [vmem:[#allocation3 + $0x4] sm:$0xf]
    %v45 = vld [vmem:[#allocation3 + $0x8] sm:$0xf]
    %v46 = vld [vmem:[#allocation3 + $0xc] sm:$0xf]
    %v47 = vld [vmem:[#allocation3 + $0x10] sm:$0xf]
    %v48 = vld [vmem:[#allocation3 + $0x14] sm:$0xf]
    %v49 = vld [vmem:[#allocation3 + $0x18] sm:$0xf]
    %v50 = vld [vmem:[#allocation3 + $0x1c] sm:$0xf]
    %v51 = vld [vmem:[#allocation3 + $0x20] sm:$0xf]
    %v52 = vld [vmem:[#allocation3 + $0x24] sm:$0xf]
    %v53 = vld [vmem:[#allocation3 + $0x28] sm:$0xf]
    %v54 = vld [vmem:[#allocation3 + $0x2c] sm:$0xf]
    %v55 = vld [vmem:[#allocation3 + $0x30] sm:$0xf]
    %v56 = vld [vmem:[#allocation3 + $0x34] sm:$0xf]
    %v57 = vld [vmem:[#allocation3 + $0x38] sm:$0xf]
    %v58 = vld [vmem:[#allocation3 + $0x3c] sm:$0xf]
    %v61 = vunpack.c.l.b16 %v41
    %v62 = vunpack.c.l.b16 %v42
    %v63 = vpack.c.b16 %v62, %v61
    %v81 = vunpack.c.l.b16 %v43
    %v82 = vunpack.c.l.b16 %v44
    %v83 = vunpack.c.l.b16 %v45
    %v84 = vunpack.c.l.b16 %v46
    %v85 = vunpack.c.l.b16 %v47
    %v86 = vunpack.c.l.b16 %v48
    %v87 = vunpack.c.l.b16 %v49
    %v88 = vunpack.c.l.b16 %v50
    %v89 = vunpack.c.l.b16 %v51
    %v90 = vunpack.c.l.b16 %v52
    %v91 = vunpack.c.l.b16 %v53
    %v92 = vunpack.c.l.b16 %v54
    %v93 = vunpack.c.l.b16 %v55
    %v94 = vunpack.c.l.b16 %v56
    %v95 = vunpack.c.l.b16 %v57
    %v96 = vunpack.c.l.b16 %v58
    %v97 = vpack.c.b16 %v82, %v81
    %v98 = vpack.c.b16 %v84, %v83
    %v99 = vpack.c.b16 %v86, %v85
    %v100 = vpack.c.b16 %v88, %v87
    %v101 = vpack.c.b16 %v90, %v89
    %v102 = vpack.c.b16 %v92, %v91
    %v103 = vpack.c.b16 %v94, %v93
    %v104 = vpack.c.b16 %v96, %v95
    %113 = vmatpush.bf16.msra.mxu0 %v104
    %114 = vmatpush.bf16.msra.mxu0 %v103
    %115 = vmatpush.bf16.msra.mxu0 %v102
    %116 = vmatpush.bf16.msra.mxu0 %v101
    %117 = vmatpush.bf16.msra.mxu0 %v100
    %118 = vmatpush.bf16.msra.mxu0 %v99
    %119 = vmatpush.bf16.msra.mxu0 %v98
    %120 = vmatpush.bf16.msra.mxu0 %v97
    %121 = vmatmul.bf16.gmra.mxu0 %v63
    %v122 = vpop.f32.mrf.mxu0
    %v123 = vadd.f32 0.0, %v122
    %v124 = vpop.f32.mrf.mxu0
    %v125 = vadd.f32 0.0, %v124
    %126 = vdwg.mxu0
    %v127 = vadd.f32 %v39, %v123
    %v128 = vadd.f32 %v40, %v125
    %129 = vst [vmem:[#allocation2] sm:$0xff] %v127
    %130 = vst [vmem:[#allocation2 + $0x8] sm:$0xff] %v128
    // Predicated region
    $region26: #{_lambda_.13} parent=1 // pred_check
      %p131 = pneg %p33
    $region27: #{_lambda_.13} parent=1 // pred_check_branch
      %133 = sbr.rel (%p131) target = $region29
    $region28: #{_lambda_.13} parent=1 // pred_region
      %v134 = vld [vmem:[#allocation2] sm:$0xff]
      %v135 = vld [vmem:[#allocation2 + $0x8] sm:$0xff]
      %v136 = vld [vmem:[%s2] sm:$0x1]
      %v138 = vperm.slane %v136, 0
      %v140 = vadd.f32 %v134, %v138
      %v141 = vadd.f32 %v135, %v138
      %v142 = vld [vmem:[%s3] sm:$0xff]
      %v143 = vld [vmem:[%s3 + $0x8] sm:$0xff]
      %v144 = vadd.f32 %v140, %v142
      %v145 = vadd.f32 %v141, %v143
      %146 = vst [vmem:[%s4] sm:$0xff] %v144
      %147 = vst [vmem:[%s4 + $0x8] sm:$0xff] %v145
    $region29: #{_lambda_.13} parent=1 // pred_fallthru
      _
    // Predicated region
    $region30: #{_lambda_.13} parent=1 // pred_check
      _
    $region31: #{_lambda_.13} parent=1 // pred_check_branch
      %149 = sbr.rel (0) target = $region33
    $region32: #{_lambda_.13} parent=1 // pred_region
      _
    $region33: #{_lambda_.13} parent=1 // pred_fallthru
      _
    // Predicated region
    $region34: #{_lambda_.13} parent=1 // pred_check
      _
    $region35: #{_lambda_.13} parent=1 // pred_check_branch
      %151 = sbr.rel (0) target = $region37
    $region36: #{_lambda_.13} parent=1 // pred_region
      _
    $region37: #{_lambda_.13} parent=1 // pred_fallthru
      _
    %152 = vsyncpa [#allocation4], 1

// kernel: _lambda_.11
$region0: #{_lambda_.11}
  #allocation0 [shape = 'u32[]', space=smem, size = 0x4, offset = 0x4, fixed_abs, tag = 'smem constant byte address 0x4 - core index']
  #allocation1 [shape = 'u32[72,128]{1,0:T(1,128)}', space=vmem, size = 0x9000, scoped, tag = 'internal scratch']
  #allocation2 [shape = 'bf16[16,128]{1,0:T(8,128)(2,1)}', space=vmem, size = 0x1000, scoped, tag = 'scratch operand']
  %s0 = inlined_call_operand.vmem [shape: f32[16,128], index: 0, kind: input, shape index: {}]
  %s1 = inlined_call_operand.vmem [shape: f32[1,128], index: 1, kind: input, shape index: {}]
  %s2 = inlined_call_operand.vmem [shape: f32[1,128], index: 2, kind: input, shape index: {}]
  %s3 = inlined_call_operand.hbm [shape: bf16[128,384], index: 3, kind: input, shape index: {}]
  %s4 = inlined_call_operand.vmem [shape: f32[1,384], index: 4, kind: input, shape index: {}]
  %s5 = inlined_call_operand.vmem [shape: bf16[16,384], index: 5, kind: output, shape index: {}]
  %s6 = sld [smem:[#allocation0]]
  $region38: #{_lambda_.11} parent=0
    _
  %s8 = ssub.s32 1, %s6
  %s9 = scalar_select 0, %s8, %s6
  $region1: #{_lambda_.11} parent=0
    #allocation3 [shape = 'u8[98304]{0}', space=vmem, size = 0x18000, scoped, tag = 'input window, operand 3, single buffered']
    #allocation4 [shape = 's32[1]{0}', space=sflag, size = 0x4, scoped, tag = 'scoped memory for _lambda_.11']
    %10 = vsyncpa [#allocation4], 0
    // Predicated region
    $region2: #{_lambda_.11} parent=1 // pred_check
      _
    $region3: #{_lambda_.11} parent=1 // pred_check_branch
      %12 = sbr.rel (0) target = $region5
    $region4: #{_lambda_.11} parent=1 // pred_region
      _
    $region5: #{_lambda_.11} parent=1 // pred_fallthru
      _
    // Predicated region
    $region6: #{_lambda_.11} parent=1 // pred_check
      _
    $region7: #{_lambda_.11} parent=1 // pred_check_branch
      %14 = sbr.rel (0) target = $region9
    $region8: #{_lambda_.11} parent=1 // pred_region
      _
    $region9: #{_lambda_.11} parent=1 // pred_fallthru
      _
    // Predicated region
    $region10: #{_lambda_.11} parent=1 // pred_check
      _
    $region11: #{_lambda_.11} parent=1 // pred_check_branch
      %16 = sbr.rel (0) target = $region13
    $region12: #{_lambda_.11} parent=1 // pred_region
      _
    $region13: #{_lambda_.11} parent=1 // pred_fallthru
      _
    // Predicated region
    $region14: #{_lambda_.11} parent=1 // pred_check
      _
    $region15: #{_lambda_.11} parent=1 // pred_check_branch
      %18 = sbr.rel (0) target = $region17
    $region16: #{_lambda_.11} parent=1 // pred_region
      %20 = vsyncadd [#allocation4], 0
      %s21 = sshll.u32 %s3, 4
      %s22 = int_to_ptr.hbm [resolvable:$true] %s21
      %s23 = sshll.u32 [#allocation3], 4
      %s24 = int_to_ptr.vmem [resolvable:$true] %s23
      %29 = dma.hbm_to_vmem [thread:$0]  %s22, 3072, %s24, [#allocation4], 192, 192, 12
    $region17: #{_lambda_.11} parent=1 // pred_fallthru
      _
    // Predicated region
    $region18: #{_lambda_.11} parent=1 // pred_check
      _
    $region19: #{_lambda_.11} parent=1 // pred_check_branch
      %31 = sbr.rel (0) target = $region21
    $region20: #{_lambda_.11} parent=1 // pred_region
      _
    $region21: #{_lambda_.11} parent=1 // pred_fallthru
      _
    // Predicated region
    $region22: #{_lambda_.11} parent=1 // pred_check
      _
    $region23: #{_lambda_.11} parent=1 // pred_check_branch
      %33 = sbr.rel (0) target = $region25
    $region24: #{_lambda_.11} parent=1 // pred_region
      %35 = dma.done [#allocation4], 3072
    $region25: #{_lambda_.11} parent=1 // pred_fallthru
      _
    %p36 = scmp.eq.s32.totalorder 0, 0
    // Predicated region
    $region26: #{_lambda_.11} parent=1 // pred_check
      %p37 = pneg %p36
    $region27: #{_lambda_.11} parent=1 // pred_check_branch
      %39 = sbr.rel (%p37) target = $region29
    $region28: #{_lambda_.11} parent=1 // pred_region
      %v40 = vld [vmem:[%s0] sm:$0xff]
      %v41 = vld [vmem:[%s0 + $0x8] sm:$0xff]
      %42 = vadd.xlane.f32.xlu0 %v40
      %v43 = vpop.xlane.xlu0 %42
      %44 = vadd.xlane.f32.xlu0 %v41
      %v45 = vpop.xlane.xlu0 %44
      %v46 = vrcp.pop 128.0
      %v47 = vmul.f32 128.0, %v46
      %v48 = vsub.f32 1.0, %v47
      %v49 = vmul.f32 %v46, %v48
      %v50 = vadd.f32 %v46, %v49
      %vm51 = vweird.f32 %v46
      %v52 = vsel %vm51, %v46, %v50
      %v53 = vmul.f32 %v43, %v52
      %v54 = vmul.f32 %v45, %v52
      %v55 = vsub.f32 %v40, %v53
      %v56 = vsub.f32 %v41, %v54
      %v57 = vmul.f32 %v55, %v55
      %v58 = vmul.f32 %v56, %v56
      %59 = vadd.xlane.f32.xlu0 %v57
      %v60 = vpop.xlane.xlu0 %59
      %61 = vadd.xlane.f32.xlu0 %v58
      %v62 = vpop.xlane.xlu0 %61
      %v63 = vmul.f32 %v60, %v52
      %v64 = vmul.f32 %v62, %v52
      %v65 = vadd.f32 %v63, 1e-05
      %v66 = vadd.f32 %v64, 1e-05
      %v67 = vrsqrt.pop %v65
      %v68 = vmul.f32 %v67, %v65
      %v69 = vmul.f32 %v68, %v67
      %v70 = vmul.f32 0.5, %v69
      %v71 = vsub.f32 1.5, %v70
      %v72 = vmul.f32 %v67, %v71
      %vm73 = vweird.f32 %v65
      %vm74 = vweird.f32 %v67
      %vm75 = vmor %vm73, %vm74
      %v76 = vsel %vm75, %v67, %v72
      %v77 = vrsqrt.pop %v66
      %v78 = vmul.f32 %v77, %v66
      %v79 = vmul.f32 %v78, %v77
      %v80 = vmul.f32 0.5, %v79
      %v81 = vsub.f32 1.5, %v80
      %v82 = vmul.f32 %v77, %v81
      %vm83 = vweird.f32 %v66
      %vm84 = vweird.f32 %v77
      %vm85 = vmor %vm83, %vm84
      %v86 = vsel %vm85, %v77, %v82
      %v87 = vmul.f32 %v55, %v76
      %v88 = vmul.f32 %v56, %v86
      %v89 = vld [vmem:[%s1] sm:$0x1]
      %v91 = vperm.slane %v89, 0
      %v93 = vmul.f32 %v87, %v91
      %v94 = vmul.f32 %v88, %v91
      %v95 = vld [vmem:[%s2] sm:$0x1]
      %v97 = vperm.slane %v95, 0
      %v99 = vadd.f32 %v93, %v97
      %v100 = vadd.f32 %v94, %v97
      %v101 = vpack.c.bf16 %v99, %v99
      %v102 = vpack.c.bf16 %v100, %v100
      %103 = vst [vmem:[#allocation2] sm:$0xf] %v101
      %104 = vst [vmem:[#allocation2 + $0x4] sm:$0xf] %v102
    $region29: #{_lambda_.11} parent=1 // pred_fallthru
      _
    %v105 = vld [vmem:[#allocation2] sm:$0xf]
    %v106 = vld [vmem:[#allocation2 + $0x4] sm:$0xf]
    %v107 = vld [vmem:[#allocation3] sm:$0xff]
    %v108 = vld [vmem:[#allocation3 + $0x8] sm:$0xf]
    %v109 = vld [vmem:[#allocation3 + $0xc] sm:$0xff]
    %v110 = vld [vmem:[#allocation3 + $0x14] sm:$0xf]
    %v111 = vld [vmem:[#allocation3 + $0x18] sm:$0xff]
    %v112 = vld [vmem:[#allocation3 + $0x20] sm:$0xf]
    %v113 = vld [vmem:[#allocation3 + $0x24] sm:$0xff]
    %v114 = vld [vmem:[#allocation3 + $0x2c] sm:$0xf]
    %v115 = vld [vmem:[#allocation3 + $0x30] sm:$0xff]
    %v116 = vld [vmem:[#allocation3 + $0x38] sm:$0xf]
    %v117 = vld [vmem:[#allocation3 + $0x3c] sm:$0xff]
    %v118 = vld [vmem:[#allocation3 + $0x44] sm:$0xf]
    %v119 = vld [vmem:[#allocation3 + $0x48] sm:$0xff]
    %v120 = vld [vmem:[#allocation3 + $0x50] sm:$0xf]
    %v121 = vld [vmem:[#allocation3 + $0x54] sm:$0xff]
    %v122 = vld [vmem:[#allocation3 + $0x5c] sm:$0xf]
    %v123 = vld [vmem:[#allocation3 + $0x60] sm:$0xff]
    %v124 = vld [vmem:[#allocation3 + $0x68] sm:$0xf]
    %v125 = vld [vmem:[#allocation3 + $0x6c] sm:$0xff]
    %v126 = vld [vmem:[#allocation3 + $0x74] sm:$0xf]
    %v127 = vld [vmem:[#allocation3 + $0x78] sm:$0xff]
    %v128 = vld [vmem:[#allocation3 + $0x80] sm:$0xf]
    %v129 = vld [vmem:[#allocation3 + $0x84] sm:$0xff]
    %v130 = vld [vmem:[#allocation3 + $0x8c] sm:$0xf]
    %v131 = vld [vmem:[#allocation3 + $0x90] sm:$0xff]
    %v132 = vld [vmem:[#allocation3 + $0x98] sm:$0xf]
    %v133 = vld [vmem:[#allocation3 + $0x9c] sm:$0xff]
    %v134 = vld [vmem:[#allocation3 + $0xa4] sm:$0xf]
    %v135 = vld [vmem:[#allocation3 + $0xa8] sm:$0xff]
    %v136 = vld [vmem:[#allocation3 + $0xb0] sm:$0xf]
    %v137 = vld [vmem:[#allocation3 + $0xb4] sm:$0xff]
    %v138 = vld [vmem:[#allocation3 + $0xbc] sm:$0xf]
    %v139 = vld [vmem:[%s4] sm:$0x7]
    %v141 = vperm.slane %v139, 0
    %v142 = vperm.slane %v139, 1
    %v143 = vperm.slane %v139, 2
    %v149 = vunpack.c.l.b16 %v105
    %v150 = vunpack.c.l.b16 %v106
    %v151 = vpack.c.b16 %v150, %v149
    %v185 = vunpack.c.l.b16 %v107
    %v186 = vunpack.c.h.b16 %v107
    %v187 = vunpack.c.l.b16 %v108
    %v188 = vunpack.c.l.b16 %v109
    %v189 = vunpack.c.h.b16 %v109
    %v190 = vunpack.c.l.b16 %v110
    %v191 = vunpack.c.l.b16 %v111
    %v192 = vunpack.c.h.b16 %v111
    %v193 = vunpack.c.l.b16 %v112
    %v194 = vunpack.c.l.b16 %v113
    %v195 = vunpack.c.h.b16 %v113
    %v196 = vunpack.c.l.b16 %v114
    %v197 = vunpack.c.l.b16 %v115
    %v198 = vunpack.c.h.b16 %v115
    %v199 = vunpack.c.l.b16 %v116
    %v200 = vunpack.c.l.b16 %v117
    %v201 = vunpack.c.h.b16 %v117
    %v202 = vunpack.c.l.b16 %v118
    %v203 = vunpack.c.l.b16 %v119
    %v204 = vunpack.c.h.b16 %v119
    %v205 = vunpack.c.l.b16 %v120
    %v206 = vunpack.c.l.b16 %v121
    %v207 = vunpack.c.h.b16 %v121
    %v208 = vunpack.c.l.b16 %v122
    %v209 = vunpack.c.l.b16 %v123
    %v210 = vunpack.c.h.b16 %v123
    %v211 = vunpack.c.l.b16 %v124
    %v212 = vunpack.c.l.b16 %v125
    %v213 = vunpack.c.h.b16 %v125
    %v214 = vunpack.c.l.b16 %v126
    %v215 = vunpack.c.l.b16 %v127
    %v216 = vunpack.c.h.b16 %v127
    %v217 = vunpack.c.l.b16 %v128
    %v218 = vunpack.c.l.b16 %v129
    %v219 = vunpack.c.h.b16 %v129
    %v220 = vunpack.c.l.b16 %v130
    %v221 = vunpack.c.l.b16 %v131
    %v222 = vunpack.c.h.b16 %v131
    %v223 = vunpack.c.l.b16 %v132
    %v224 = vunpack.c.l.b16 %v133
    %v225 = vunpack.c.h.b16 %v133
    %v226 = vunpack.c.l.b16 %v134
    %v227 = vunpack.c.l.b16 %v135
    %v228 = vunpack.c.h.b16 %v135
    %v229 = vunpack.c.l.b16 %v136
    %v230 = vunpack.c.l.b16 %v137
    %v231 = vunpack.c.h.b16 %v137
    %v232 = vunpack.c.l.b16 %v138
    %v233 = vpack.c.b16 %v188, %v185
    %v234 = vpack.c.b16 %v189, %v186
    %v235 = vpack.c.b16 %v190, %v187
    %v236 = vpack.c.b16 %v194, %v191
    %v237 = vpack.c.b16 %v195, %v192
    %v238 = vpack.c.b16 %v196, %v193
    %v239 = vpack.c.b16 %v200, %v197
    %v240 = vpack.c.b16 %v201, %v198
    %v241 = vpack.c.b16 %v202, %v199
    %v242 = vpack.c.b16 %v206, %v203
    %v243 = vpack.c.b16 %v207, %v204
    %v244 = vpack.c.b16 %v208, %v205
    %v245 = vpack.c.b16 %v212, %v209
    %v246 = vpack.c.b16 %v213, %v210
    %v247 = vpack.c.b16 %v214, %v211
    %v248 = vpack.c.b16 %v218, %v215
    %v249 = vpack.c.b16 %v219, %v216
    %v250 = vpack.c.b16 %v220, %v217
    %v251 = vpack.c.b16 %v224, %v221
    %v252 = vpack.c.b16 %v225, %v222
    %v253 = vpack.c.b16 %v226, %v223
    %v254 = vpack.c.b16 %v230, %v227
    %v255 = vpack.c.b16 %v231, %v228
    %v256 = vpack.c.b16 %v232, %v229
    %281 = vmatpush.bf16.msra.mxu0 %v254
    %282 = vmatpush.bf16.msra.mxu0 %v251
    %283 = vmatpush.bf16.msra.mxu0 %v248
    %284 = vmatpush.bf16.msra.mxu0 %v245
    %285 = vmatpush.bf16.msra.mxu0 %v242
    %286 = vmatpush.bf16.msra.mxu0 %v239
    %287 = vmatpush.bf16.msra.mxu0 %v236
    %288 = vmatpush.bf16.msra.mxu0 %v233
    %289 = vmatmul.bf16.gmra.mxu0 %v151
    %v290 = vpop.f32.mrf.mxu0
    %v291 = vadd.f32 %v141, %v290
    %v292 = vpop.f32.mrf.mxu0
    %v293 = vadd.f32 %v141, %v292
    %294 = vdwg.mxu0
    %295 = vmatpush.bf16.msra.mxu0 %v255
    %296 = vmatpush.bf16.msra.mxu0 %v252
    %297 = vmatpush.bf16.msra.mxu0 %v249
    %298 = vmatpush.bf16.msra.mxu0 %v246
    %299 = vmatpush.bf16.msra.mxu0 %v243
    %300 = vmatpush.bf16.msra.mxu0 %v240
    %301 = vmatpush.bf16.msra.mxu0 %v237
    %302 = vmatpush.bf16.msra.mxu0 %v234
    %303 = vmatmul.bf16.gmra.mxu0 %v151
    %v304 = vpop.f32.mrf.mxu0
    %v305 = vadd.f32 %v142, %v304
    %v306 = vpop.f32.mrf.mxu0
    %v307 = vadd.f32 %v142, %v306
    %308 = vdwg.mxu0
    %309 = vmatpush.bf16.msra.mxu0 %v256
    %310 = vmatpush.bf16.msra.mxu0 %v253
    %311 = vmatpush.bf16.msra.mxu0 %v250
    %312 = vmatpush.bf16.msra.mxu0 %v247
    %313 = vmatpush.bf16.msra.mxu0 %v244
    %314 = vmatpush.bf16.msra.mxu0 %v241
    %315 = vmatpush.bf16.msra.mxu0 %v238
    %316 = vmatpush.bf16.msra.mxu0 %v235
    %317 = vmatmul.bf16.gmra.mxu0 %v151
    %v318 = vpop.f32.mrf.mxu0
    %v319 = vadd.f32 %v143, %v318
    %v320 = vpop.f32.mrf.mxu0
    %v321 = vadd.f32 %v143, %v320
    %322 = vdwg.mxu0
    %v323 = vpack.c.bf16 %v305, %v291
    %v324 = vpack.c.bf16 %v319, %v319
    %v325 = vpack.c.bf16 %v307, %v293
    %v326 = vpack.c.bf16 %v321, %v321
    %327 = vst [vmem:[%s5] sm:$0xff] %v323
    %328 = vst [vmem:[%s5 + $0x8] sm:$0xf] %v324
    %329 = vst [vmem:[%s5 + $0xc] sm:$0xff] %v325
    %330 = vst [vmem:[%s5 + $0x14] sm:$0xf] %v326
    // Predicated region
    $region30: #{_lambda_.11} parent=1 // pred_check
      _
    $region31: #{_lambda_.11} parent=1 // pred_check_branch
      %332 = sbr.rel (0) target = $region33
    $region32: #{_lambda_.11} parent=1 // pred_region
      _
    $region33: #{_lambda_.11} parent=1 // pred_fallthru
      _
    // Predicated region
    $region34: #{_lambda_.11} parent=1 // pred_check
      _
    $region35: #{_lambda_.11} parent=1 // pred_check_branch
      %334 = sbr.rel (0) target = $region37
    $region36: #{_lambda_.11} parent=1 // pred_region
      _
    $region37: #{_lambda_.11} parent=1 // pred_fallthru
      _
    %335 = vsyncpa [#allocation4], 1

// kernel: _lambda_.14
$region0: #{_lambda_.14}
  #allocation0 [shape = 'u32[]', space=smem, size = 0x4, offset = 0x4, fixed_abs, tag = 'smem constant byte address 0x4 - core index']
  #allocation1 [shape = 'u32[72,128]{1,0:T(1,128)}', space=vmem, size = 0x9000, scoped, tag = 'internal scratch']
  #allocation2 [shape = 'bf16[16,128]{1,0:T(8,128)(2,1)}', space=vmem, size = 0x1000, scoped, tag = 'scratch operand']
  %s0 = inlined_call_operand.vmem [shape: f32[16,128], index: 0, kind: input, shape index: {}]
  %s1 = inlined_call_operand.vmem [shape: f32[1,128], index: 1, kind: input, shape index: {}]
  %s2 = inlined_call_operand.vmem [shape: f32[1,128], index: 2, kind: input, shape index: {}]
  %s3 = inlined_call_operand.hbm [shape: bf16[128,512], index: 3, kind: input, shape index: {}]
  %s4 = inlined_call_operand.vmem [shape: f32[1,512], index: 4, kind: input, shape index: {}]
  %s5 = inlined_call_operand.vmem [shape: bf16[16,512], index: 5, kind: output, shape index: {}]
  %s6 = sld [smem:[#allocation0]]
  $region38: #{_lambda_.14} parent=0
    _
  %s8 = ssub.s32 1, %s6
  %s9 = scalar_select 0, %s8, %s6
  $region1: #{_lambda_.14} parent=0
    #allocation3 [shape = 'u8[131072]{0}', space=vmem, size = 0x20000, scoped, tag = 'input window, operand 3, single buffered']
    #allocation4 [shape = 's32[1]{0}', space=sflag, size = 0x4, scoped, tag = 'scoped memory for _lambda_.14']
    %10 = vsyncpa [#allocation4], 0
    // Predicated region
    $region2: #{_lambda_.14} parent=1 // pred_check
      _
    $region3: #{_lambda_.14} parent=1 // pred_check_branch
      %12 = sbr.rel (0) target = $region5
    $region4: #{_lambda_.14} parent=1 // pred_region
      _
    $region5: #{_lambda_.14} parent=1 // pred_fallthru
      _
    // Predicated region
    $region6: #{_lambda_.14} parent=1 // pred_check
      _
    $region7: #{_lambda_.14} parent=1 // pred_check_branch
      %14 = sbr.rel (0) target = $region9
    $region8: #{_lambda_.14} parent=1 // pred_region
      _
    $region9: #{_lambda_.14} parent=1 // pred_fallthru
      _
    // Predicated region
    $region10: #{_lambda_.14} parent=1 // pred_check
      _
    $region11: #{_lambda_.14} parent=1 // pred_check_branch
      %16 = sbr.rel (0) target = $region13
    $region12: #{_lambda_.14} parent=1 // pred_region
      _
    $region13: #{_lambda_.14} parent=1 // pred_fallthru
      _
    // Predicated region
    $region14: #{_lambda_.14} parent=1 // pred_check
      _
    $region15: #{_lambda_.14} parent=1 // pred_check_branch
      %18 = sbr.rel (0) target = $region17
    $region16: #{_lambda_.14} parent=1 // pred_region
      %20 = vsyncadd [#allocation4], 0
      %s21 = sshll.u32 %s3, 4
      %s22 = int_to_ptr.hbm [resolvable:$true] %s21
      %s23 = sshll.u32 [#allocation3], 4
      %s24 = int_to_ptr.vmem [resolvable:$true] %s23
      %29 = dma.hbm_to_vmem [thread:$0]  %s22, 4096, %s24, [#allocation4], 256, 256, 16
    $region17: #{_lambda_.14} parent=1 // pred_fallthru
      _
    // Predicated region
    $region18: #{_lambda_.14} parent=1 // pred_check
      _
    $region19: #{_lambda_.14} parent=1 // pred_check_branch
      %31 = sbr.rel (0) target = $region21
    $region20: #{_lambda_.14} parent=1 // pred_region
      _
    $region21: #{_lambda_.14} parent=1 // pred_fallthru
      _
    // Predicated region
    $region22: #{_lambda_.14} parent=1 // pred_check
      _
    $region23: #{_lambda_.14} parent=1 // pred_check_branch
      %33 = sbr.rel (0) target = $region25
    $region24: #{_lambda_.14} parent=1 // pred_region
      %35 = dma.done [#allocation4], 4096
    $region25: #{_lambda_.14} parent=1 // pred_fallthru
      _
    %p36 = scmp.eq.s32.totalorder 0, 0
    // Predicated region
    $region26: #{_lambda_.14} parent=1 // pred_check
      %p37 = pneg %p36
    $region27: #{_lambda_.14} parent=1 // pred_check_branch
      %39 = sbr.rel (%p37) target = $region29
    $region28: #{_lambda_.14} parent=1 // pred_region
      %v40 = vld [vmem:[%s0] sm:$0xff]
      %v41 = vld [vmem:[%s0 + $0x8] sm:$0xff]
      %42 = vadd.xlane.f32.xlu0 %v40
      %v43 = vpop.xlane.xlu0 %42
      %44 = vadd.xlane.f32.xlu0 %v41
      %v45 = vpop.xlane.xlu0 %44
      %v46 = vrcp.pop 128.0
      %v47 = vmul.f32 128.0, %v46
      %v48 = vsub.f32 1.0, %v47
      %v49 = vmul.f32 %v46, %v48
      %v50 = vadd.f32 %v46, %v49
      %vm51 = vweird.f32 %v46
      %v52 = vsel %vm51, %v46, %v50
      %v53 = vmul.f32 %v43, %v52
      %v54 = vmul.f32 %v45, %v52
      %v55 = vsub.f32 %v40, %v53
      %v56 = vsub.f32 %v41, %v54
      %v57 = vmul.f32 %v55, %v55
      %v58 = vmul.f32 %v56, %v56
      %59 = vadd.xlane.f32.xlu0 %v57
      %v60 = vpop.xlane.xlu0 %59
      %61 = vadd.xlane.f32.xlu0 %v58
      %v62 = vpop.xlane.xlu0 %61
      %v63 = vmul.f32 %v60, %v52
      %v64 = vmul.f32 %v62, %v52
      %v65 = vadd.f32 %v63, 1e-05
      %v66 = vadd.f32 %v64, 1e-05
      %v67 = vrsqrt.pop %v65
      %v68 = vmul.f32 %v67, %v65
      %v69 = vmul.f32 %v68, %v67
      %v70 = vmul.f32 0.5, %v69
      %v71 = vsub.f32 1.5, %v70
      %v72 = vmul.f32 %v67, %v71
      %vm73 = vweird.f32 %v65
      %vm74 = vweird.f32 %v67
      %vm75 = vmor %vm73, %vm74
      %v76 = vsel %vm75, %v67, %v72
      %v77 = vrsqrt.pop %v66
      %v78 = vmul.f32 %v77, %v66
      %v79 = vmul.f32 %v78, %v77
      %v80 = vmul.f32 0.5, %v79
      %v81 = vsub.f32 1.5, %v80
      %v82 = vmul.f32 %v77, %v81
      %vm83 = vweird.f32 %v66
      %vm84 = vweird.f32 %v77
      %vm85 = vmor %vm83, %vm84
      %v86 = vsel %vm85, %v77, %v82
      %v87 = vmul.f32 %v55, %v76
      %v88 = vmul.f32 %v56, %v86
      %v89 = vld [vmem:[%s1] sm:$0x1]
      %v91 = vperm.slane %v89, 0
      %v93 = vmul.f32 %v87, %v91
      %v94 = vmul.f32 %v88, %v91
      %v95 = vld [vmem:[%s2] sm:$0x1]
      %v97 = vperm.slane %v95, 0
      %v99 = vadd.f32 %v93, %v97
      %v100 = vadd.f32 %v94, %v97
      %v101 = vpack.c.bf16 %v99, %v99
      %v102 = vpack.c.bf16 %v100, %v100
      %103 = vst [vmem:[#allocation2] sm:$0xf] %v101
      %104 = vst [vmem:[#allocation2 + $0x4] sm:$0xf] %v102
    $region29: #{_lambda_.14} parent=1 // pred_fallthru
      _
    %v105 = vld [vmem:[#allocation2] sm:$0xf]
    %v106 = vld [vmem:[#allocation2 + $0x4] sm:$0xf]
    %v107 = vld [vmem:[#allocation3] sm:$0xff]
    %v108 = vld [vmem:[#allocation3 + $0x8] sm:$0xff]
    %v109 = vld [vmem:[#allocation3 + $0x10] sm:$0xff]
    %v110 = vld [vmem:[#allocation3 + $0x18] sm:$0xff]
    %v111 = vld [vmem:[#allocation3 + $0x20] sm:$0xff]
    %v112 = vld [vmem:[#allocation3 + $0x28] sm:$0xff]
    %v113 = vld [vmem:[#allocation3 + $0x30] sm:$0xff]
    %v114 = vld [vmem:[#allocation3 + $0x38] sm:$0xff]
    %v115 = vld [vmem:[#allocation3 + $0x40] sm:$0xff]
    %v116 = vld [vmem:[#allocation3 + $0x48] sm:$0xff]
    %v117 = vld [vmem:[#allocation3 + $0x50] sm:$0xff]
    %v118 = vld [vmem:[#allocation3 + $0x58] sm:$0xff]
    %v119 = vld [vmem:[#allocation3 + $0x60] sm:$0xff]
    %v120 = vld [vmem:[#allocation3 + $0x68] sm:$0xff]
    %v121 = vld [vmem:[#allocation3 + $0x70] sm:$0xff]
    %v122 = vld [vmem:[#allocation3 + $0x78] sm:$0xff]
    %v123 = vld [vmem:[#allocation3 + $0x80] sm:$0xff]
    %v124 = vld [vmem:[#allocation3 + $0x88] sm:$0xff]
    %v125 = vld [vmem:[#allocation3 + $0x90] sm:$0xff]
    %v126 = vld [vmem:[#allocation3 + $0x98] sm:$0xff]
    %v127 = vld [vmem:[#allocation3 + $0xa0] sm:$0xff]
    %v128 = vld [vmem:[#allocation3 + $0xa8] sm:$0xff]
    %v129 = vld [vmem:[#allocation3 + $0xb0] sm:$0xff]
    %v130 = vld [vmem:[#allocation3 + $0xb8] sm:$0xff]
    %v131 = vld [vmem:[#allocation3 + $0xc0] sm:$0xff]
    %v132 = vld [vmem:[#allocation3 + $0xc8] sm:$0xff]
    %v133 = vld [vmem:[#allocation3 + $0xd0] sm:$0xff]
    %v134 = vld [vmem:[#allocation3 + $0xd8] sm:$0xff]
    %v135 = vld [vmem:[#allocation3 + $0xe0] sm:$0xff]
    %v136 = vld [vmem:[#allocation3 + $0xe8] sm:$0xff]
    %v137 = vld [vmem:[#allocation3 + $0xf0] sm:$0xff]
    %v138 = vld [vmem:[#allocation3 + $0xf8] sm:$0xff]
    %v139 = vld [vmem:[%s4] sm:$0xf]
    %v141 = vperm.slane %v139, 0
    %v142 = vperm.slane %v139, 1
    %v143 = vperm.slane %v139, 2
    %v144 = vperm.slane %v139, 3
    %v151 = vunpack.c.l.b16 %v105
    %v152 = vunpack.c.l.b16 %v106
    %v153 = vpack.c.b16 %v152, %v151
    %v187 = vunpack.c.l.b16 %v107
    %v188 = vunpack.c.h.b16 %v107
    %v189 = vunpack.c.l.b16 %v108
    %v190 = vunpack.c.h.b16 %v108
    %v191 = vunpack.c.l.b16 %v109
    %v192 = vunpack.c.h.b16 %v109
    %v193 = vunpack.c.l.b16 %v110
    %v194 = vunpack.c.h.b16 %v110
    %v195 = vunpack.c.l.b16 %v111
    %v196 = vunpack.c.h.b16 %v111
    %v197 = vunpack.c.l.b16 %v112
    %v198 = vunpack.c.h.b16 %v112
    %v199 = vunpack.c.l.b16 %v113
    %v200 = vunpack.c.h.b16 %v113
    %v201 = vunpack.c.l.b16 %v114
    %v202 = vunpack.c.h.b16 %v114
    %v203 = vunpack.c.l.b16 %v115
    %v204 = vunpack.c.h.b16 %v115
    %v205 = vunpack.c.l.b16 %v116
    %v206 = vunpack.c.h.b16 %v116
    %v207 = vunpack.c.l.b16 %v117
    %v208 = vunpack.c.h.b16 %v117
    %v209 = vunpack.c.l.b16 %v118
    %v210 = vunpack.c.h.b16 %v118
    %v211 = vunpack.c.l.b16 %v119
    %v212 = vunpack.c.h.b16 %v119
    %v213 = vunpack.c.l.b16 %v120
    %v214 = vunpack.c.h.b16 %v120
    %v215 = vunpack.c.l.b16 %v121
    %v216 = vunpack.c.h.b16 %v121
    %v217 = vunpack.c.l.b16 %v122
    %v218 = vunpack.c.h.b16 %v122
    %v219 = vunpack.c.l.b16 %v123
    %v220 = vunpack.c.h.b16 %v123
    %v221 = vunpack.c.l.b16 %v124
    %v222 = vunpack.c.h.b16 %v124
    %v223 = vunpack.c.l.b16 %v125
    %v224 = vunpack.c.h.b16 %v125
    %v225 = vunpack.c.l.b16 %v126
    %v226 = vunpack.c.h.b16 %v126
    %v227 = vunpack.c.l.b16 %v127
    %v228 = vunpack.c.h.b16 %v127
    %v229 = vunpack.c.l.b16 %v128
    %v230 = vunpack.c.h.b16 %v128
    %v231 = vunpack.c.l.b16 %v129
    %v232 = vunpack.c.h.b16 %v129
    %v233 = vunpack.c.l.b16 %v130
    %v234 = vunpack.c.h.b16 %v130
    %v235 = vunpack.c.l.b16 %v131
    %v236 = vunpack.c.h.b16 %v131
    %v237 = vunpack.c.l.b16 %v132
    %v238 = vunpack.c.h.b16 %v132
    %v239 = vunpack.c.l.b16 %v133
    %v240 = vunpack.c.h.b16 %v133
    %v241 = vunpack.c.l.b16 %v134
    %v242 = vunpack.c.h.b16 %v134
    %v243 = vunpack.c.l.b16 %v135
    %v244 = vunpack.c.h.b16 %v135
    %v245 = vunpack.c.l.b16 %v136
    %v246 = vunpack.c.h.b16 %v136
    %v247 = vunpack.c.l.b16 %v137
    %v248 = vunpack.c.h.b16 %v137
    %v249 = vunpack.c.l.b16 %v138
    %v250 = vunpack.c.h.b16 %v138
    %v251 = vpack.c.b16 %v191, %v187
    %v252 = vpack.c.b16 %v192, %v188
    %v253 = vpack.c.b16 %v193, %v189
    %v254 = vpack.c.b16 %v194, %v190
    %v255 = vpack.c.b16 %v199, %v195
    %v256 = vpack.c.b16 %v200, %v196
    %v257 = vpack.c.b16 %v201, %v197
    %v258 = vpack.c.b16 %v202, %v198
    %v259 = vpack.c.b16 %v207, %v203
    %v260 = vpack.c.b16 %v208, %v204
    %v261 = vpack.c.b16 %v209, %v205
    %v262 = vpack.c.b16 %v210, %v206
    %v263 = vpack.c.b16 %v215, %v211
    %v264 = vpack.c.b16 %v216, %v212
    %v265 = vpack.c.b16 %v217, %v213
    %v266 = vpack.c.b16 %v218, %v214
    %v267 = vpack.c.b16 %v223, %v219
    %v268 = vpack.c.b16 %v224, %v220
    %v269 = vpack.c.b16 %v225, %v221
    %v270 = vpack.c.b16 %v226, %v222
    %v271 = vpack.c.b16 %v231, %v227
    %v272 = vpack.c.b16 %v232, %v228
    %v273 = vpack.c.b16 %v233, %v229
    %v274 = vpack.c.b16 %v234, %v230
    %v275 = vpack.c.b16 %v239, %v235
    %v276 = vpack.c.b16 %v240, %v236
    %v277 = vpack.c.b16 %v241, %v237
    %v278 = vpack.c.b16 %v242, %v238
    %v279 = vpack.c.b16 %v247, %v243
    %v280 = vpack.c.b16 %v248, %v244
    %v281 = vpack.c.b16 %v249, %v245
    %v282 = vpack.c.b16 %v250, %v246
    %315 = vmatpush.bf16.msra.mxu0 %v279
    %316 = vmatpush.bf16.msra.mxu0 %v275
    %317 = vmatpush.bf16.msra.mxu0 %v271
    %318 = vmatpush.bf16.msra.mxu0 %v267
    %319 = vmatpush.bf16.msra.mxu0 %v263
    %320 = vmatpush.bf16.msra.mxu0 %v259
    %321 = vmatpush.bf16.msra.mxu0 %v255
    %322 = vmatpush.bf16.msra.mxu0 %v251
    %323 = vmatmul.bf16.gmra.mxu0 %v153
    %v324 = vpop.f32.mrf.mxu0
    %v325 = vadd.f32 %v141, %v324
    %v326 = vpop.f32.mrf.mxu0
    %v327 = vadd.f32 %v141, %v326
    %328 = vdwg.mxu0
    %329 = vmatpush.bf16.msra.mxu0 %v280
    %330 = vmatpush.bf16.msra.mxu0 %v276
    %331 = vmatpush.bf16.msra.mxu0 %v272
    %332 = vmatpush.bf16.msra.mxu0 %v268
    %333 = vmatpush.bf16.msra.mxu0 %v264
    %334 = vmatpush.bf16.msra.mxu0 %v260
    %335 = vmatpush.bf16.msra.mxu0 %v256
    %336 = vmatpush.bf16.msra.mxu0 %v252
    %337 = vmatmul.bf16.gmra.mxu0 %v153
    %v338 = vpop.f32.mrf.mxu0
    %v339 = vadd.f32 %v142, %v338
    %v340 = vpop.f32.mrf.mxu0
    %v341 = vadd.f32 %v142, %v340
    %342 = vdwg.mxu0
    %343 = vmatpush.bf16.msra.mxu0 %v281
    %344 = vmatpush.bf16.msra.mxu0 %v277
    %345 = vmatpush.bf16.msra.mxu0 %v273
    %346 = vmatpush.bf16.msra.mxu0 %v269
    %347 = vmatpush.bf16.msra.mxu0 %v265
    %348 = vmatpush.bf16.msra.mxu0 %v261
    %349 = vmatpush.bf16.msra.mxu0 %v257
    %350 = vmatpush.bf16.msra.mxu0 %v253
    %351 = vmatmul.bf16.gmra.mxu0 %v153
    %v352 = vpop.f32.mrf.mxu0
    %v353 = vadd.f32 %v143, %v352
    %v354 = vpop.f32.mrf.mxu0
    %v355 = vadd.f32 %v143, %v354
    %356 = vdwg.mxu0
    %357 = vmatpush.bf16.msra.mxu0 %v282
    %358 = vmatpush.bf16.msra.mxu0 %v278
    %359 = vmatpush.bf16.msra.mxu0 %v274
    %360 = vmatpush.bf16.msra.mxu0 %v270
    %361 = vmatpush.bf16.msra.mxu0 %v266
    %362 = vmatpush.bf16.msra.mxu0 %v262
    %363 = vmatpush.bf16.msra.mxu0 %v258
    %364 = vmatpush.bf16.msra.mxu0 %v254
    %365 = vmatmul.bf16.gmra.mxu0 %v153
    %v366 = vpop.f32.mrf.mxu0
    %v367 = vadd.f32 %v144, %v366
    %v368 = vpop.f32.mrf.mxu0
    %v369 = vadd.f32 %v144, %v368
    %370 = vdwg.mxu0
    %v371 = vmul.f32 %v325, 0.5
    %v372 = vmul.f32 %v339, 0.5
    %v373 = vmul.f32 %v353, 0.5
    %v374 = vmul.f32 %v367, 0.5
    %v375 = vmul.f32 %v327, 0.5
    %v376 = vmul.f32 %v341, 0.5
    %v377 = vmul.f32 %v355, 0.5
    %v378 = vmul.f32 %v369, 0.5
    %v379 = vmul.f32 %v325, 0.044715
    %v380 = vmul.f32 %v339, 0.044715
    %v381 = vmul.f32 %v353, 0.044715
    %v382 = vmul.f32 %v367, 0.044715
    %v383 = vmul.f32 %v327, 0.044715
    %v384 = vmul.f32 %v341, 0.044715
    %v385 = vmul.f32 %v355, 0.044715
    %v386 = vmul.f32 %v369, 0.044715
    %v387 = vmul.f32 %v379, %v325
    %v388 = vmul.f32 %v380, %v339
    %v389 = vmul.f32 %v381, %v353
    %v390 = vmul.f32 %v382, %v367
    %v391 = vmul.f32 %v383, %v327
    %v392 = vmul.f32 %v384, %v341
    %v393 = vmul.f32 %v385, %v355
    %v394 = vmul.f32 %v386, %v369
    %v395 = vmul.f32 %v387, %v325
    %v396 = vmul.f32 %v388, %v339
    %v397 = vmul.f32 %v389, %v353
    %v398 = vmul.f32 %v390, %v367
    %v399 = vmul.f32 %v391, %v327
    %v400 = vmul.f32 %v392, %v341
    %v401 = vmul.f32 %v393, %v355
    %v402 = vmul.f32 %v394, %v369
    %v403 = vadd.f32 %v325, %v395
    %v404 = vadd.f32 %v339, %v396
    %v405 = vadd.f32 %v353, %v397
    %v406 = vadd.f32 %v367, %v398
    %v407 = vadd.f32 %v327, %v399
    %v408 = vadd.f32 %v341, %v400
    %v409 = vadd.f32 %v355, %v401
    %v410 = vadd.f32 %v369, %v402
    %v411 = vmul.f32 %v403, 0.7978846
    %v412 = vmul.f32 %v404, 0.7978846
    %v413 = vmul.f32 %v405, 0.7978846
    %v414 = vmul.f32 %v406, 0.7978846
    %v415 = vmul.f32 %v407, 0.7978846
    %v416 = vmul.f32 %v408, 0.7978846
    %v417 = vmul.f32 %v409, 0.7978846
    %v418 = vmul.f32 %v410, 0.7978846
    %v419 = vtanh.pop %v411
    %v420 = vtanh.pop %v412
    %v421 = vtanh.pop %v413
    %v422 = vtanh.pop %v414
    %v423 = vtanh.pop %v415
    %v424 = vtanh.pop %v416
    %v425 = vtanh.pop %v417
    %v426 = vtanh.pop %v418
    %v427 = vadd.f32 %v419, 1.0
    %v428 = vadd.f32 %v420, 1.0
    %v429 = vadd.f32 %v421, 1.0
    %v430 = vadd.f32 %v422, 1.0
    %v431 = vadd.f32 %v423, 1.0
    %v432 = vadd.f32 %v424, 1.0
    %v433 = vadd.f32 %v425, 1.0
    %v434 = vadd.f32 %v426, 1.0
    %v435 = vmul.f32 %v371, %v427
    %v436 = vmul.f32 %v372, %v428
    %v437 = vmul.f32 %v373, %v429
    %v438 = vmul.f32 %v374, %v430
    %v439 = vmul.f32 %v375, %v431
    %v440 = vmul.f32 %v376, %v432
    %v441 = vmul.f32 %v377, %v433
    %v442 = vmul.f32 %v378, %v434
    %v443 = vpack.c.bf16 %v436, %v435
    %v444 = vpack.c.bf16 %v438, %v437
    %v445 = vpack.c.bf16 %v440, %v439
    %v446 = vpack.c.bf16 %v442, %v441
    %447 = vst [vmem:[%s5] sm:$0xff] %v443
    %448 = vst [vmem:[%s5 + $0x8] sm:$0xff] %v444
    %449 = vst [vmem:[%s5 + $0x10] sm:$0xff] %v445
    %450 = vst [vmem:[%s5 + $0x18] sm:$0xff] %v446
    // Predicated region
    $region30: #{_lambda_.14} parent=1 // pred_check
      _
    $region31: #{_lambda_.14} parent=1 // pred_check_branch
      %452 = sbr.rel (0) target = $region33
    $region32: #{_lambda_.14} parent=1 // pred_region
      _
    $region33: #{_lambda_.14} parent=1 // pred_fallthru
      _
    // Predicated region
    $region34: #{_lambda_.14} parent=1 // pred_check
      _
    $region35: #{_lambda_.14} parent=1 // pred_check_branch
      %454 = sbr.rel (0) target = $region37
    $region36: #{_lambda_.14} parent=1 // pred_region
      _
    $region37: #{_lambda_.14} parent=1 // pred_fallthru
      _
    %455 = vsyncpa [#allocation4], 1

// kernel: _lambda_.12
$region0: #{_lambda_.12}
  #allocation0 [shape = 'u32[]', space=smem, size = 0x4, offset = 0x4, fixed_abs, tag = 'smem constant byte address 0x4 - core index']
  #allocation1 [shape = 'u32[72,128]{1,0:T(1,128)}', space=vmem, size = 0x9000, scoped, tag = 'internal scratch']
  #allocation2 [shape = 'f32[8,2]{1,0:T(8,128)}', space=vmem, size = 0x1000, scoped, tag = 'scratch operand']
  #allocation3 [shape = 'f32[8,2]{1,0:T(8,128)}', space=vmem, size = 0x1000, scoped, tag = 'scratch operand']
  #allocation4 [shape = 'f32[8,128]{1,0:T(8,128)}', space=vmem, size = 0x1000, scoped, tag = 'scratch operand']
  %s0 = inlined_call_operand.vmem [shape: bf16[2,8,384], index: 0, kind: input, shape index: {}, may-alias: {0,1,2}]
  %s1 = inlined_call_operand.vmem [shape: bf16[2,8,384], index: 1, kind: input, shape index: {}, may-alias: {0,1,2}]
  %s2 = inlined_call_operand.vmem [shape: bf16[2,8,384], index: 2, kind: input, shape index: {}, may-alias: {0,1,2}]
  %s3 = inlined_call_operand.vmem [shape: bf16[2,8,128], index: 3, kind: output, shape index: {}]
  %s4 = sld [smem:[#allocation0]]
  $region61: #{_lambda_.12} parent=0
    _
  %s6 = ssub.s32 1, %s4
  %s7 = scalar_select 0, %s6, %s4
  loop: start=0, step=1, limit=4
  $region2: #{_lambda_.12} parent=0 // loop_pre_header
    _
  $region3: #{_lambda_.12} parent=0 // loop_header
    %s9 = sphi 0, %s13
    %p10 = scmp.ge.s32.totalorder %s9, 4
    %s16 = sphi 0, %s35
    %s17 = sphi 0, %s31
    %s18 = sphi 0, %s27
    %s19 = sphi 0, %s16
    %s20 = sphi 0, %s17
    %s21 = sphi 0, %s18
    %s22 = sphi 0, %s19
    %s23 = sphi 0, %s20
    %s24 = sphi 0, %s21
    %s40 = sphi 0, %s42
    %s43 = sphi 0, %s40
    %s44 = sphi 0, %s43
    %s60 = sphi 0, %s44
    %s72 = sphi 0, %s74
    %s75 = sphi 0, %s72
    %s76 = sphi 0, %s75
    %s92 = sphi 0, %s76
    %s104 = sphi 0, %s106
    %s107 = sphi 0, %s104
    %s108 = sphi 0, %s107
    %s124 = sphi 0, %s108
    %s132 = sphi 0, %s134
    %s135 = sphi 0, %s132
    %s136 = sphi 0, %s135
    %s152 = sphi 0, %s136
  $region4: #{_lambda_.12} parent=0 // loop_header_branch
    %12 = sbr.rel (%p10) target = $region8
  $region5: #{_lambda_.12} parent=0 // loop_body
    %s14 = ssub.s32 %s9, 1
    %s15 = ssub.s32 %s9, 2
    %s25 = sadd.s32 1, %s18
    %p26 = scmp.ge.s32.totalorder %s25, 1
    %s27 = scalar_select %p26, 0, %s25
    %s28 = sadd.s32 1, %s17
    %s29 = scalar_select %p26, %s28, %s17
    %p30 = scmp.ge.s32.totalorder %s29, 1
    %s31 = scalar_select %p30, 0, %s29
    %s32 = sadd.s32 1, %s16
    %s33 = scalar_select %p30, %s32, %s16
    %p34 = scmp.ge.s32.totalorder %s33, 2
    %s35 = scalar_select %p34, 0, %s33
    %s36 = ssub.s32 %s16, %s35
    %s37 = ssub.s32 %s17, %s31
    %s38 = sor.u32 %s36, %s37
    %p39 = scmp.eq.s32.totalorder %s38, 0
    %s41 = sadd.s32 %s40, 1
    %s42 = scalar_select %p39, %s40, %s41
    %p45 = pneg %p39
    %p46 = scmp.eq.s32.totalorder %s9, 1
    %p47 = por %p45, %p46
    %p48 = scmp.ne.s32.totalorder %s40, %s43
    %p49 = scmp.eq.s32.totalorder %s9, 0
    %p50 = por %p48, %p49
    %p51 = scmp.ne.s32.totalorder %s40, %s43
    %p52 = scmp.eq.s32.totalorder %s14, 1
    %p53 = por %p51, %p52
    %p54 = scmp.ne.s32.totalorder %s43, %s44
    %p55 = scmp.eq.s32.totalorder %s14, 0
    %p56 = por %p54, %p55
    %p57 = scmp.ne.s32.totalorder %s43, %s44
    %p58 = scmp.eq.s32.totalorder %s15, 1
    %p59 = por %p57, %p58
    %p61 = scmp.ne.s32.totalorder %s44, %s60
    %p62 = scmp.eq.s32.totalorder %s15, 0
    %p63 = por %p61, %p62
    %p64 = scmp.lt.s32.totalorder %s18, %s17
    %s65 = scalar_select %p64, %s18, %s17
    %p66 = scmp.lt.s32.totalorder %s27, %s31
    %s67 = scalar_select %p66, %s27, %s31
    %s68 = ssub.s32 %s16, %s35
    %s69 = ssub.s32 %s65, %s67
    %s70 = sor.u32 %s68, %s69
    %p71 = scmp.eq.s32.totalorder %s70, 0
    %s73 = sadd.s32 %s72, 1
    %s74 = scalar_select %p71, %s72, %s73
    %p77 = pneg %p71
    %p78 = scmp.eq.s32.totalorder %s9, 1
    %p79 = por %p77, %p78
    %p80 = scmp.ne.s32.totalorder %s72, %s75
    %p81 = scmp.eq.s32.totalorder %s9, 0
    %p82 = por %p80, %p81
    %p83 = scmp.ne.s32.totalorder %s72, %s75
    %p84 = scmp.eq.s32.totalorder %s14, 1
    %p85 = por %p83, %p84
    %p86 = scmp.ne.s32.totalorder %s75, %s76
    %p87 = scmp.eq.s32.totalorder %s14, 0
    %p88 = por %p86, %p87
    %p89 = scmp.ne.s32.totalorder %s75, %s76
    %p90 = scmp.eq.s32.totalorder %s15, 1
    %p91 = por %p89, %p90
    %p93 = scmp.ne.s32.totalorder %s76, %s92
    %p94 = scmp.eq.s32.totalorder %s15, 0
    %p95 = por %p93, %p94
    %p96 = scmp.lt.s32.totalorder %s18, %s17
    %s97 = scalar_select %p96, %s18, %s17
    %p98 = scmp.lt.s32.totalorder %s27, %s31
    %s99 = scalar_select %p98, %s27, %s31
    %s100 = ssub.s32 %s16, %s35
    %s101 = ssub.s32 %s97, %s99
    %s102 = sor.u32 %s100, %s101
    %p103 = scmp.eq.s32.totalorder %s102, 0
    %s105 = sadd.s32 %s104, 1
    %s106 = scalar_select %p103, %s104, %s105
    %p109 = pneg %p103
    %p110 = scmp.eq.s32.totalorder %s9, 1
    %p111 = por %p109, %p110
    %p112 = scmp.ne.s32.totalorder %s104, %s107
    %p113 = scmp.eq.s32.totalorder %s9, 0
    %p114 = por %p112, %p113
    %p115 = scmp.ne.s32.totalorder %s104, %s107
    %p116 = scmp.eq.s32.totalorder %s14, 1
    %p117 = por %p115, %p116
    %p118 = scmp.ne.s32.totalorder %s107, %s108
    %p119 = scmp.eq.s32.totalorder %s14, 0
    %p120 = por %p118, %p119
    %p121 = scmp.ne.s32.totalorder %s107, %s108
    %p122 = scmp.eq.s32.totalorder %s15, 1
    %p123 = por %p121, %p122
    %p125 = scmp.ne.s32.totalorder %s108, %s124
    %p126 = scmp.eq.s32.totalorder %s15, 0
    %p127 = por %p125, %p126
    %s128 = ssub.s32 %s16, %s35
    %s129 = ssub.s32 %s17, %s31
    %s130 = sor.u32 %s128, %s129
    %p131 = scmp.eq.s32.totalorder %s130, 0
    %s133 = sadd.s32 %s132, 1
    %s134 = scalar_select %p131, %s132, %s133
    %p137 = pneg %p131
    %p138 = scmp.eq.s32.totalorder %s9, 1
    %p139 = por %p137, %p138
    %p140 = scmp.ne.s32.totalorder %s132, %s135
    %p141 = scmp.eq.s32.totalorder %s9, 0
    %p142 = por %p140, %p141
    %p143 = scmp.ne.s32.totalorder %s132, %s135
    %p144 = scmp.eq.s32.totalorder %s14, 1
    %p145 = por %p143, %p144
    %p146 = scmp.ne.s32.totalorder %s135, %s136
    %p147 = scmp.eq.s32.totalorder %s14, 0
    %p148 = por %p146, %p147
    %p149 = scmp.ne.s32.totalorder %s135, %s136
    %p150 = scmp.eq.s32.totalorder %s15, 1
    %p151 = por %p149, %p150
    %p153 = scmp.ne.s32.totalorder %s136, %s152
    %p154 = scmp.eq.s32.totalorder %s15, 0
    %p155 = por %p153, %p154
    %p156 = scmp.le.s32.totalorder 1, %s9
    %p157 = scmp.lt.s32.totalorder %s9, 3
    %p158 = pnand %p156, %p157
    %p159 = pneg %p158
    // Predicated region
    $region9: #{_lambda_.12} parent=5 // pred_check
      _
    $region10: #{_lambda_.12} parent=5 // pred_check_branch
      %161 = sbr.rel (%p158) target = $region12
    $region11: #{_lambda_.12} parent=5 // pred_region
      %s162 = ssub.s32 %s9, 1
    $region12: #{_lambda_.12} parent=5 // pred_fallthru
      _
    %p163 = scmp.lt.s32.totalorder %s9, 2
    // Predicated region
    $region13: #{_lambda_.12} parent=5 // pred_check
      %p164 = pneg %p163
    $region14: #{_lambda_.12} parent=5 // pred_check_branch
      %166 = sbr.rel (%p164) target = $region16
    $region15: #{_lambda_.12} parent=5 // pred_region
      // Predicated region
      $region17: #{_lambda_.12} parent=15 // pred_check
        %p167 = pneg %p50
      $region18: #{_lambda_.12} parent=15 // pred_check_branch
        %169 = sbr.rel (%p167) target = $region20
      $region19: #{_lambda_.12} parent=15 // pred_region
        %p170 = scmp.lt.s32.totalorder %s16, 1
        %s171 = scalar_select %p170, %s16, 1
        %p172 = scmp.lt.s32.totalorder %s17, 0
        %s173 = scalar_select %p172, %s17, 0
        %s174 = smul.addr %s173, 3
        %s175 = smul.addr %s171, 3
        %s176 = sadd.s32 %s174, %s175
        %s177 = smul.addr %s176, 4
        %s178 = scalar_lea.vmem %s0, %s177
      $region20: #{_lambda_.12} parent=15 // pred_fallthru
        _
      // Predicated region
      $region21: #{_lambda_.12} parent=15 // pred_check
        %p179 = pneg %p82
      $region22: #{_lambda_.12} parent=15 // pred_check_branch
        %181 = sbr.rel (%p179) target = $region24
      $region23: #{_lambda_.12} parent=15 // pred_region
        %p182 = scmp.lt.s32.totalorder %s18, %s17
        %s183 = scalar_select %p182, %s18, %s17
        %p184 = scmp.lt.s32.totalorder %s16, 1
        %s185 = scalar_select %p184, %s16, 1
        %p186 = scmp.lt.s32.totalorder %s183, 0
        %s187 = scalar_select %p186, %s183, 0
        %s188 = smul.addr %s187, 3
        %s189 = sadd.s32 1, %s188
        %s190 = smul.addr %s185, 3
        %s191 = sadd.s32 %s189, %s190
        %s192 = smul.addr %s191, 4
        %s193 = scalar_lea.vmem %s1, %s192
        %p194 = scmp.lt.s32.totalorder %s18, %s17
        %s195 = scalar_select %p194, %s18, %s17
      $region24: #{_lambda_.12} parent=15 // pred_fallthru
        _
      // Predicated region
      $region25: #{_lambda_.12} parent=15 // pred_check
        %p196 = pneg %p114
      $region26: #{_lambda_.12} parent=15 // pred_check_branch
        %198 = sbr.rel (%p196) target = $region28
      $region27: #{_lambda_.12} parent=15 // pred_region
        %p199 = scmp.lt.s32.totalorder %s18, %s17
        %s200 = scalar_select %p199, %s18, %s17
        %p201 = scmp.lt.s32.totalorder %s16, 1
        %s202 = scalar_select %p201, %s16, 1
        %p203 = scmp.lt.s32.totalorder %s200, 0
        %s204 = scalar_select %p203, %s200, 0
        %s205 = smul.addr %s204, 3
        %s206 = sadd.s32 2, %s205
        %s207 = smul.addr %s202, 3
        %s208 = sadd.s32 %s206, %s207
        %s209 = smul.addr %s208, 4
        %s210 = scalar_lea.vmem %s2, %s209
        %p211 = scmp.lt.s32.totalorder %s18, %s17
        %s212 = scalar_select %p211, %s18, %s17
      $region28: #{_lambda_.12} parent=15 // pred_fallthru
        _
    $region16: #{_lambda_.12} parent=5 // pred_fallthru
      _
    %p213 = scmp.le.s32.totalorder 1, %s9
    %p214 = scmp.lt.s32.totalorder %s9, 3
    %p215 = pnand %p213, %p214
    %p216 = pneg %p215
    // Predicated region
    $region29: #{_lambda_.12} parent=5 // pred_check
      _
    $region30: #{_lambda_.12} parent=5 // pred_check_branch
      %218 = sbr.rel (%p215) target = $region32
    $region31: #{_lambda_.12} parent=5 // pred_region
      %s219 = ssub.s32 %s9, 1
      %p220 = scmp.lt.s32.totalorder %s19, 1
      %s221 = scalar_select %p220, %s19, 1
      %p222 = scmp.lt.s32.totalorder %s20, 0
      %s223 = scalar_select %p222, %s20, 0
      %s224 = smul.addr %s223, 3
      %s225 = smul.addr %s221, 3
      %s226 = sadd.s32 %s224, %s225
      %s227 = smul.addr %s226, 4
      %s228 = scalar_lea.vmem %s0, %s227
      %p229 = pneg %p56
      %p230 = pneg %p53
      %p231 = scmp.lt.s32.totalorder %s21, %s20
      %s232 = scalar_select %p231, %s21, %s20
      %p233 = scmp.lt.s32.totalorder %s19, 1
      %s234 = scalar_select %p233, %s19, 1
      %p235 = scmp.lt.s32.totalorder %s232, 0
      %s236 = scalar_select %p235, %s232, 0
      %s237 = smul.addr %s236, 3
      %s238 = sadd.s32 1, %s237
      %s239 = smul.addr %s234, 3
      %s240 = sadd.s32 %s238, %s239
      %s241 = smul.addr %s240, 4
      %s242 = scalar_lea.vmem %s1, %s241
      %p243 = pneg %p88
      %p244 = pneg %p85
      %p245 = scmp.lt.s32.totalorder %s21, %s20
      %s246 = scalar_select %p245, %s21, %s20
      %p247 = scmp.lt.s32.totalorder %s19, 1
      %s248 = scalar_select %p247, %s19, 1
      %p249 = scmp.lt.s32.totalorder %s246, 0
      %s250 = scalar_select %p249, %s246, 0
      %s251 = smul.addr %s250, 3
      %s252 = sadd.s32 2, %s251
      %s253 = smul.addr %s248, 3
      %s254 = sadd.s32 %s252, %s253
      %s255 = smul.addr %s254, 4
      %s256 = scalar_lea.vmem %s2, %s255
      %p257 = pneg %p120
      %p258 = pneg %p117
      %p259 = pneg %p148
      %p260 = pneg %p145
      %p261 = scmp.lt.s32.totalorder %s19, 1
      %s262 = scalar_select %p261, %s19, 1
      %p263 = scmp.lt.s32.totalorder %s20, 0
      %s264 = scalar_select %p263, %s20, 0
      %s265 = sadd.s32 %s264, %s262
      %s266 = smul.addr %s265, 4
      %s267 = scalar_lea.vmem %s3, %s266
      %p268 = scmp.lt.s32.totalorder %s19, 1
      %s269 = scalar_select %p268, %s19, 1
      %p270 = scmp.lt.s32.totalorder %s20, 0
      %s271 = scalar_select %p270, %s20, 0
      %s272 = smul.addr %s271, 3
      %s273 = smul.addr %s269, 3
      %s274 = sadd.s32 %s272, %s273
      %s275 = smul.addr %s274, 4
      %s276 = scalar_lea.vmem %s0, %s275
      %p277 = scmp.lt.s32.totalorder %s21, %s20
      %s278 = scalar_select %p277, %s21, %s20
      %p279 = scmp.lt.s32.totalorder %s19, 1
      %s280 = scalar_select %p279, %s19, 1
      %p281 = scmp.lt.s32.totalorder %s278, 0
      %s282 = scalar_select %p281, %s278, 0
      %s283 = smul.addr %s282, 3
      %s284 = sadd.s32 1, %s283
      %s285 = smul.addr %s280, 3
      %s286 = sadd.s32 %s284, %s285
      %s287 = smul.addr %s286, 4
      %s288 = scalar_lea.vmem %s1, %s287
      %p289 = scmp.lt.s32.totalorder %s21, %s20
      %s290 = scalar_select %p289, %s21, %s20
      %p291 = scmp.lt.s32.totalorder %s21, %s20
      %s292 = scalar_select %p291, %s21, %s20
      %p293 = scmp.lt.s32.totalorder %s19, 1
      %s294 = scalar_select %p293, %s19, 1
      %p295 = scmp.lt.s32.totalorder %s292, 0
      %s296 = scalar_select %p295, %s292, 0
      %s297 = smul.addr %s296, 3
      %s298 = sadd.s32 2, %s297
      %s299 = smul.addr %s294, 3
      %s300 = sadd.s32 %s298, %s299
      %s301 = smul.addr %s300, 4
      %s302 = scalar_lea.vmem %s2, %s301
      %p303 = scmp.lt.s32.totalorder %s21, %s20
      %s304 = scalar_select %p303, %s21, %s20
      %p305 = scmp.lt.s32.totalorder %s19, 1
      %s306 = scalar_select %p305, %s19, 1
      %p307 = scmp.lt.s32.totalorder %s20, 0
      %s308 = scalar_select %p307, %s20, 0
      %s309 = sadd.s32 %s308, %s306
      %s310 = smul.addr %s309, 4
      %s311 = scalar_lea.vmem %s3, %s310
      %p313 = scmp.eq.s32.totalorder %s21, 0
      // Predicated region
      $region33: #{_lambda_.12} parent=31 // pred_check
        %p314 = pneg %p313
      $region34: #{_lambda_.12} parent=31 // pred_check_branch
        %316 = sbr.rel (%p314) target = $region36
      $region35: #{_lambda_.12} parent=31 // pred_region
        %vm317 = vcmask 15360
        %318 = vst.msk [vmem:[#allocation2] sm:$0xff] %vm317, -1e+30
        %319 = vst.msk [vmem:[#allocation3] sm:$0xff] %vm317, 0.0
        %320 = vst [vmem:[#allocation4] sm:$0xff] 0.0
      $region36: #{_lambda_.12} parent=31 // pred_fallthru
        _
      %p321 = scmp.lt.s32.totalorder %s21, %s20
      // Predicated region
      $region37: #{_lambda_.12} parent=31 // pred_check
        %p322 = pneg %p321
      $region38: #{_lambda_.12} parent=31 // pred_check_branch
        %324 = sbr.rel (%p322) target = $region40
      $region39: #{_lambda_.12} parent=31 // pred_region
        %v325 = vld [vmem:[%s276] sm:$0xf]
        %v326 = vunpack.c.l.bf16 %v325
        %v327 = vmul.f32 %v326, 0.125
        %v328 = vpack.c.bf16 %v327, %v327
        %v329 = vld [vmem:[%s288] sm:$0xf]
        %vm330 = vcmask 523264
        %v332 = vsel %vm330, %v328, 0
        %v335 = vsel %vm330, %v329, 0
        %337 = vmatpush.bf16.xpose.msra.mxu0 0
        %338 = vmatpush.bf16.xpose.msra.mxu0 0
        %339 = vmatpush.bf16.xpose.msra.mxu0 0
        %340 = vmatpush.bf16.xpose.msra.mxu0 0
        %341 = vmatpush.bf16.xpose.msra.mxu0 0
        %342 = vmatpush.bf16.xpose.msra.mxu0 0
        %343 = vmatpush.bf16.xpose.msra.mxu0 0
        %344 = vmatpush.bf16.xpose.msra.mxu0 %v335
        %345 = vmatmul.bf16.gmra.mxu0 %v332
        %v346 = vpop.f32.mrf.mxu0
        %v347 = vadd.f32 0.0, %v346
        %v348 = vpop.f32.mrf.mxu0
        %349 = vdwg.mxu0
        %v350 = vld [vmem:[#allocation2] sm:$0xff]
        %vm351 = vcmask 64512
        %v352 = vsel %vm351, %v347, -inf
        %353 = vmax.xlane.f32.xlu0 %v352
        %v354 = vpop.xlane.xlu0 %353
        %v355 = vmax.f32 %v350, %v354
        %v356 = vsub.f32 %v350, %v355
        %v357 = vmul.f32 %v356, 1.442695
        %v358 = vpow.pop %v357
        %360 = vset.pattern.permute.xlu0 0
        %361 = vperm.xlu0 %360, %v355
        %v362 = vpop.permute.xlu0 %361
        %v364 = vsub.f32 %v347, %v362
        %v365 = vmul.f32 %v364, 1.442695
        %v366 = vpow.pop %v365
        %v367 = vld [vmem:[#allocation3] sm:$0xff]
        %v368 = vmul.f32 %v358, %v367
        %v369 = vsel %vm351, %v366, 0.0
        %370 = vadd.xlane.f32.xlu0 %v369
        %v371 = vpop.xlane.xlu0 %370
        %v372 = vadd.f32 %v368, %v371
        %vm373 = vcmask 7168
        %374 = vst.msk [vmem:[#allocation3] sm:$0xff] %vm373, %v372
        %v375 = vld [vmem:[#allocation4] sm:$0xff]
        %377 = vset.pattern.permute.xlu0 0
        %378 = vperm.xlu0 %377, %v358
        %v379 = vpop.permute.xlu0 %378
        %v381 = vmul.f32 %v379, %v375
        %v382 = vpack.c.bf16 %v366, %v366
        %v383 = vld [vmem:[%s302] sm:$0xf]
        %v385 = vsel %vm351, %v382, 0
        %vm387 = vcmask 1043456
        %v389 = vsel %vm387, %v383, 0
        %391 = vmatpush.bf16.msra.mxu0 0
        %392 = vmatpush.bf16.msra.mxu0 0
        %393 = vmatpush.bf16.msra.mxu0 0
        %394 = vmatpush.bf16.msra.mxu0 0
        %395 = vmatpush.bf16.msra.mxu0 0
        %396 = vmatpush.bf16.msra.mxu0 0
        %397 = vmatpush.bf16.msra.mxu0 0
        %398 = vmatpush.bf16.msra.mxu0 %v389
        %399 = vmatmul.bf16.gmra.mxu0 %v385
        %v400 = vpop.f32.mrf.mxu0
        %v401 = vadd.f32 0.0, %v400
        %v402 = vpop.f32.mrf.mxu0
        %403 = vdwg.mxu0
        %v404 = vadd.f32 %v381, %v401
        %405 = vst.msk [vmem:[#allocation4] sm:$0xff] %vm330, %v404
        %406 = vst.msk [vmem:[#allocation2] sm:$0xff] %vm373, %v355
        %v407 = vld [vmem:[%s276] sm:$0xf]
        %v408 = vunpack.c.l.bf16 %v407
        %v409 = vmul.f32 %v408, 0.125
        %v410 = vpack.c.bf16 %v409, %v409
        %v411 = vld [vmem:[%s288] sm:$0xf]
        %413 = vrot.lane.b32.xlu0 %v410, 64
        %v414 = vpop.permute.xlu0 %413
        %v416 = vunpack.c.l.b16 %v411
        %v417 = vpack.c.b16 %v416, %v416
        %418 = vrot.lane.b32.xlu0 %v417, 64
        %v419 = vpop.permute.xlu0 %418
        %v421 = vsel %vm330, %v414, 0
        %v424 = vsel %vm330, %v419, 0
        %426 = vmatpush.bf16.xpose.msra.mxu0 0
        %427 = vmatpush.bf16.xpose.msra.mxu0 0
        %428 = vmatpush.bf16.xpose.msra.mxu0 0
        %429 = vmatpush.bf16.xpose.msra.mxu0 0
        %430 = vmatpush.bf16.xpose.msra.mxu0 0
        %431 = vmatpush.bf16.xpose.msra.mxu0 0
        %432 = vmatpush.bf16.xpose.msra.mxu0 0
        %433 = vmatpush.bf16.xpose.msra.mxu0 %v424
        %434 = vmatmul.bf16.gmra.mxu0 %v421
        %v435 = vpop.f32.mrf.mxu0
        %v436 = vadd.f32 0.0, %v435
        %v437 = vpop.f32.mrf.mxu0
        %438 = vdwg.mxu0
        %v439 = vld [vmem:[#allocation2] sm:$0xff]
        %v440 = vsel %vm351, %v436, -inf
        %441 = vmax.xlane.f32.xlu0 %v440
        %v442 = vpop.xlane.xlu0 %441
        %v443 = vmax.f32 %v439, %v442
        %v444 = vsub.f32 %v439, %v443
        %v445 = vmul.f32 %v444, 1.442695
        %v446 = vpow.pop %v445
        %448 = vset.pattern.permute.xlu0 1
        %449 = vperm.xlu0 %448, %v443
        %v450 = vpop.permute.xlu0 %449
        %v452 = vsub.f32 %v436, %v450
        %v453 = vmul.f32 %v452, 1.442695
        %v454 = vpow.pop %v453
        %v455 = vld [vmem:[#allocation3] sm:$0xff]
        %v456 = vmul.f32 %v446, %v455
        %v457 = vsel %vm351, %v454, 0.0
        %458 = vadd.xlane.f32.xlu0 %v457
        %v459 = vpop.xlane.xlu0 %458
        %v460 = vadd.f32 %v456, %v459
        %vm461 = vcmask 15368
        %462 = vst.msk [vmem:[#allocation3] sm:$0xff] %vm461, %v460
        %v463 = vld [vmem:[#allocation4] sm:$0xff]
        %465 = vset.pattern.permute.xlu0 1
        %466 = vperm.xlu0 %465, %v446
        %v467 = vpop.permute.xlu0 %466
        %v469 = vmul.f32 %v467, %v463
        %v470 = vpack.c.bf16 %v454, %v454
        %v471 = vld [vmem:[%s302] sm:$0xf]
        %v473 = vunpack.c.l.b16 %v471
        %v474 = vpack.c.b16 %v473, %v473
        %475 = vrot.lane.b32.xlu0 %v474, 64
        %v476 = vpop.permute.xlu0 %475
        %v478 = vsel %vm351, %v470, 0
        %v481 = vsel %vm387, %v476, 0
        %483 = vmatpush.bf16.msra.mxu0 0
        %484 = vmatpush.bf16.msra.mxu0 0
        %485 = vmatpush.bf16.msra.mxu0 0
        %486 = vmatpush.bf16.msra.mxu0 0
        %487 = vmatpush.bf16.msra.mxu0 0
        %488 = vmatpush.bf16.msra.mxu0 0
        %489 = vmatpush.bf16.msra.mxu0 0
        %490 = vmatpush.bf16.msra.mxu0 %v481
        %491 = vmatmul.bf16.gmra.mxu0 %v478
        %v492 = vpop.f32.mrf.mxu0
        %v493 = vadd.f32 0.0, %v492
        %v494 = vpop.f32.mrf.mxu0
        %495 = vdwg.mxu0
        %497 = vrot.lane.b32.xlu0 %v493, 64
        %v498 = vpop.permute.xlu0 %497
        %v500 = vadd.f32 %v469, %v498
        %vm501 = vcmask 1048064
        %502 = vst.msk [vmem:[#allocation4] sm:$0xff] %vm501, %v500
        %503 = vst.msk [vmem:[#allocation2] sm:$0xff] %vm461, %v443
      $region40: #{_lambda_.12} parent=31 // pred_fallthru
        _
      %p504 = scmp.eq.s32.totalorder %s21, %s20
      // Predicated region
      $region41: #{_lambda_.12} parent=31 // pred_check
        %p505 = pneg %p504
      $region42: #{_lambda_.12} parent=31 // pred_check_branch
        %507 = sbr.rel (%p505) target = $region44
      $region43: #{_lambda_.12} parent=31 // pred_region
        %v508 = vlaneseq
        %v509 = vshrl.u32 %v508, 7
        %v510 = vlaneseq
        %v511 = vand.u32 %v510, 127
        %vm512 = vcmp.le.s32.totalorder %v511, %v509
        %v513 = vld [vmem:[%s276] sm:$0xf]
        %v514 = vunpack.c.l.bf16 %v513
        %v515 = vmul.f32 %v514, 0.125
        %v516 = vpack.c.bf16 %v515, %v515
        %v517 = vld [vmem:[%s288] sm:$0xf]
        %vm518 = vcmask 523264
        %v520 = vsel %vm518, %v516, 0
        %v523 = vsel %vm518, %v517, 0
        %525 = vmatpush.bf16.xpose.msra.mxu0 0
        %526 = vmatpush.bf16.xpose.msra.mxu0 0
        %527 = vmatpush.bf16.xpose.msra.mxu0 0
        %528 = vmatpush.bf16.xpose.msra.mxu0 0
        %529 = vmatpush.bf16.xpose.msra.mxu0 0
        %530 = vmatpush.bf16.xpose.msra.mxu0 0
        %531 = vmatpush.bf16.xpose.msra.mxu0 0
        %532 = vmatpush.bf16.xpose.msra.mxu0 %v523
        %533 = vmatmul.bf16.gmra.mxu0 %v520
        %v534 = vpop.f32.mrf.mxu0
        %v535 = vadd.f32 0.0, %v534
        %v536 = vpop.f32.mrf.mxu0
        %537 = vdwg.mxu0
        %v538 = vsel %vm512, %v535, -1e+30
        %v539 = vld [vmem:[#allocation2] sm:$0xff]
        %vm540 = vcmask 64512
        %v541 = vsel %vm540, %v538, -inf
        %542 = vmax.xlane.f32.xlu0 %v541
        %v543 = vpop.xlane.xlu0 %542
        %v544 = vmax.f32 %v539, %v543
        %v545 = vsub.f32 %v539, %v544
        %v546 = vmul.f32 %v545, 1.442695
        %v547 = vpow.pop %v546
        %549 = vset.pattern.permute.xlu0 0
        %550 = vperm.xlu0 %549, %v544
        %v551 = vpop.permute.xlu0 %550
        %v553 = vsub.f32 %v538, %v551
        %v554 = vmul.f32 %v553, 1.442695
        %v555 = vpow.pop %v554
        %v556 = vld [vmem:[#allocation3] sm:$0xff]
        %v557 = vmul.f32 %v547, %v556
        %v558 = vsel %vm540, %v555, 0.0
        %559 = vadd.xlane.f32.xlu0 %v558
        %v560 = vpop.xlane.xlu0 %559
        %v561 = vadd.f32 %v557, %v560
        %vm562 = vcmask 7168
        %563 = vst.msk [vmem:[#allocation3] sm:$0xff] %vm562, %v561
        %v564 = vld [vmem:[#allocation4] sm:$0xff]
        %566 = vset.pattern.permute.xlu0 0
        %567 = vperm.xlu0 %566, %v547
        %v568 = vpop.permute.xlu0 %567
        %v570 = vmul.f32 %v568, %v564
        %v571 = vpack.c.bf16 %v555, %v555
        %v572 = vld [vmem:[%s302] sm:$0xf]
        %v574 = vsel %vm540, %v571, 0
        %vm576 = vcmask 1043456
        %v578 = vsel %vm576, %v572, 0
        %580 = vmatpush.bf16.msra.mxu0 0
        %581 = vmatpush.bf16.msra.mxu0 0
        %582 = vmatpush.bf16.msra.mxu0 0
        %583 = vmatpush.bf16.msra.mxu0 0
        %584 = vmatpush.bf16.msra.mxu0 0
        %585 = vmatpush.bf16.msra.mxu0 0
        %586 = vmatpush.bf16.msra.mxu0 0
        %587 = vmatpush.bf16.msra.mxu0 %v578
        %588 = vmatmul.bf16.gmra.mxu0 %v574
        %v589 = vpop.f32.mrf.mxu0
        %v590 = vadd.f32 0.0, %v589
        %v591 = vpop.f32.mrf.mxu0
        %592 = vdwg.mxu0
        %v593 = vadd.f32 %v570, %v590
        %594 = vst.msk [vmem:[#allocation4] sm:$0xff] %vm518, %v593
        %595 = vst.msk [vmem:[#allocation2] sm:$0xff] %vm562, %v544
        %v596 = vld [vmem:[%s276] sm:$0xf]
        %v597 = vunpack.c.l.bf16 %v596
        %v598 = vmul.f32 %v597, 0.125
        %v599 = vpack.c.bf16 %v598, %v598
        %v600 = vld [vmem:[%s288] sm:$0xf]
        %602 = vrot.lane.b32.xlu0 %v599, 64
        %v603 = vpop.permute.xlu0 %602
        %v605 = vunpack.c.l.b16 %v600
        %v606 = vpack.c.b16 %v605, %v605
        %607 = vrot.lane.b32.xlu0 %v606, 64
        %v608 = vpop.permute.xlu0 %607
        %v610 = vsel %vm518, %v603, 0
        %v613 = vsel %vm518, %v608, 0
        %615 = vmatpush.bf16.xpose.msra.mxu0 0
        %616 = vmatpush.bf16.xpose.msra.mxu0 0
        %617 = vmatpush.bf16.xpose.msra.mxu0 0
        %618 = vmatpush.bf16.xpose.msra.mxu0 0
        %619 = vmatpush.bf16.xpose.msra.mxu0 0
        %620 = vmatpush.bf16.xpose.msra.mxu0 0
        %621 = vmatpush.bf16.xpose.msra.mxu0 0
        %622 = vmatpush.bf16.xpose.msra.mxu0 %v613
        %623 = vmatmul.bf16.gmra.mxu0 %v610
        %v624 = vpop.f32.mrf.mxu0
        %v625 = vadd.f32 0.0, %v624
        %v626 = vpop.f32.mrf.mxu0
        %627 = vdwg.mxu0
        %v628 = vsel %vm512, %v625, -1e+30
        %v629 = vld [vmem:[#allocation2] sm:$0xff]
        %v630 = vsel %vm540, %v628, -inf
        %631 = vmax.xlane.f32.xlu0 %v630
        %v632 = vpop.xlane.xlu0 %631
        %v633 = vmax.f32 %v629, %v632
        %v634 = vsub.f32 %v629, %v633
        %v635 = vmul.f32 %v634, 1.442695
        %v636 = vpow.pop %v635
        %638 = vset.pattern.permute.xlu0 1
        %639 = vperm.xlu0 %638, %v633
        %v640 = vpop.permute.xlu0 %639
        %v642 = vsub.f32 %v628, %v640
        %v643 = vmul.f32 %v642, 1.442695
        %v644 = vpow.pop %v643
        %v645 = vld [vmem:[#allocation3] sm:$0xff]
        %v646 = vmul.f32 %v636, %v645
        %v647 = vsel %vm540, %v644, 0.0
        %648 = vadd.xlane.f32.xlu0 %v647
        %v649 = vpop.xlane.xlu0 %648
        %v650 = vadd.f32 %v646, %v649
        %vm651 = vcmask 15368
        %652 = vst.msk [vmem:[#allocation3] sm:$0xff] %vm651, %v650
        %v653 = vld [vmem:[#allocation4] sm:$0xff]
        %655 = vset.pattern.permute.xlu0 1
        %656 = vperm.xlu0 %655, %v636
        %v657 = vpop.permute.xlu0 %656
        %v659 = vmul.f32 %v657, %v653
        %v660 = vpack.c.bf16 %v644, %v644
        %v661 = vld [vmem:[%s302] sm:$0xf]
        %v663 = vunpack.c.l.b16 %v661
        %v664 = vpack.c.b16 %v663, %v663
        %665 = vrot.lane.b32.xlu0 %v664, 64
        %v666 = vpop.permute.xlu0 %665
        %v668 = vsel %vm540, %v660, 0
        %v671 = vsel %vm576, %v666, 0
        %673 = vmatpush.bf16.msra.mxu0 0
        %674 = vmatpush.bf16.msra.mxu0 0
        %675 = vmatpush.bf16.msra.mxu0 0
        %676 = vmatpush.bf16.msra.mxu0 0
        %677 = vmatpush.bf16.msra.mxu0 0
        %678 = vmatpush.bf16.msra.mxu0 0
        %679 = vmatpush.bf16.msra.mxu0 0
        %680 = vmatpush.bf16.msra.mxu0 %v671
        %681 = vmatmul.bf16.gmra.mxu0 %v668
        %v682 = vpop.f32.mrf.mxu0
        %v683 = vadd.f32 0.0, %v682
        %v684 = vpop.f32.mrf.mxu0
        %685 = vdwg.mxu0
        %687 = vrot.lane.b32.xlu0 %v683, 64
        %v688 = vpop.permute.xlu0 %687
        %v690 = vadd.f32 %v659, %v688
        %vm691 = vcmask 1048064
        %692 = vst.msk [vmem:[#allocation4] sm:$0xff] %vm691, %v690
        %693 = vst.msk [vmem:[#allocation2] sm:$0xff] %vm651, %v633
      $region44: #{_lambda_.12} parent=31 // pred_fallthru
        _
      // Predicated region
      $region45: #{_lambda_.12} parent=31 // pred_check
        %p694 = pneg %p313
      $region46: #{_lambda_.12} parent=31 // pred_check_branch
        %696 = sbr.rel (%p694) target = $region48
      $region47: #{_lambda_.12} parent=31 // pred_region
        %v697 = vld [vmem:[#allocation3] sm:$0xff]
        %v698 = vrcp.pop %v697
        %v699 = vld [vmem:[#allocation4] sm:$0xff]
        %701 = vset.pattern.permute.xlu0 0
        %702 = vperm.xlu0 %701, %v698
        %v703 = vpop.permute.xlu0 %702
        %v705 = vmul.f32 %v699, %v703
        %vm706 = vcmask 523264
        %707 = vst.msk [vmem:[#allocation4] sm:$0xff] %vm706, %v705
        %v708 = vld [vmem:[#allocation3] sm:$0xff]
        %v709 = vrcp.pop %v708
        %v710 = vld [vmem:[#allocation4] sm:$0xff]
        %712 = vset.pattern.permute.xlu0 1
        %713 = vperm.xlu0 %712, %v709
        %v714 = vpop.permute.xlu0 %713
        %v716 = vmul.f32 %v710, %v714
        %vm717 = vcmask 1048064
        %718 = vst.msk [vmem:[#allocation4] sm:$0xff] %vm717, %v716
        %v719 = vld [vmem:[#allocation4] sm:$0xff]
        %v720 = vpack.c.bf16 %v719, %v719
        %721 = vst [vmem:[%s311] sm:$0xf] %v720
      $region48: #{_lambda_.12} parent=31 // pred_fallthru
        _
      %p722 = scmp.lt.s32.totalorder %s19, 1
      %s723 = scalar_select %p722, %s19, 1
      %p724 = scmp.lt.s32.totalorder %s20, 0
      %s725 = scalar_select %p724, %s20, 0
      %s726 = sadd.s32 %s725, %s723
      %s727 = smul.addr %s726, 4
      %s728 = scalar_lea.vmem %s3, %s727
      // Predicated region
      $region49: #{_lambda_.12} parent=31 // pred_check
        %p729 = pneg %p145
      $region50: #{_lambda_.12} parent=31 // pred_check_branch
        %731 = sbr.rel (%p729) target = $region52
      $region51: #{_lambda_.12} parent=31 // pred_region
        _
      $region52: #{_lambda_.12} parent=31 // pred_fallthru
        _
    $region32: #{_lambda_.12} parent=5 // pred_fallthru
      _
    %p732 = scmp.le.s32.totalorder 2, %s9
    // Predicated region
    $region53: #{_lambda_.12} parent=5 // pred_check
      %p733 = pneg %p732
    $region54: #{_lambda_.12} parent=5 // pred_check_branch
      %735 = sbr.rel (%p733) target = $region56
    $region55: #{_lambda_.12} parent=5 // pred_region
      %s736 = ssub.s32 %s9, 2
      // Predicated region
      $region57: #{_lambda_.12} parent=55 // pred_check
        %p737 = pneg %p151
      $region58: #{_lambda_.12} parent=55 // pred_check_branch
        %739 = sbr.rel (%p737) target = $region60
      $region59: #{_lambda_.12} parent=55 // pred_region
        %p740 = scmp.lt.s32.totalorder %s22, 1
        %s741 = scalar_select %p740, %s22, 1
        %p742 = scmp.lt.s32.totalorder %s23, 0
        %s743 = scalar_select %p742, %s23, 0
        %s744 = sadd.s32 %s743, %s741
        %s745 = smul.addr %s744, 4
        %s746 = scalar_lea.vmem %s3, %s745
      $region60: #{_lambda_.12} parent=55 // pred_fallthru
        _
    $region56: #{_lambda_.12} parent=5 // pred_fallthru
      _
  $region6: #{_lambda_.12} parent=0 // loop_footer
    %s13 = sadd.s32 1, %s9
  $region7: #{_lambda_.12} parent=0 // loop_footer_branch
    %8 = sbr.rel target = $region3
  $region8: #{_lambda_.12} parent=0 // loop_exit
    _

// kernel: _lambda_.15
$region0: #{_lambda_.15}
  #allocation0 [shape = 'u32[]', space=smem, size = 0x4, offset = 0x4, fixed_abs, tag = 'smem constant byte address 0x4 - core index']
  #allocation1 [shape = 'u32[72,128]{1,0:T(1,128)}', space=vmem, size = 0x9000, scoped, tag = 'internal scratch']
  #allocation2 [shape = 'f32[16,128]{1,0:T(8,128)}', space=vmem, size = 0x2000, scoped, tag = 'scratch operand']
  %s0 = inlined_call_operand.vmem [shape: bf16[16,512], index: 0, kind: input, shape index: {}]
  %s1 = inlined_call_operand.hbm [shape: bf16[512,128], index: 1, kind: input, shape index: {}]
  %s2 = inlined_call_operand.vmem [shape: f32[1,128], index: 2, kind: input, shape index: {}]
  %s3 = inlined_call_operand.vmem [shape: f32[16,128], index: 3, kind: input, shape index: {}]
  %s4 = inlined_call_operand.vmem [shape: f32[16,128], index: 4, kind: output, shape index: {}]
  %s5 = sld [smem:[#allocation0]]
  $region38: #{_lambda_.15} parent=0
    _
  %s7 = ssub.s32 1, %s5
  %s8 = scalar_select 0, %s7, %s5
  $region1: #{_lambda_.15} parent=0
    #allocation3 [shape = 'u8[131072]{0}', space=vmem, size = 0x20000, scoped, tag = 'input window, operand 1, single buffered']
    #allocation4 [shape = 's32[1]{0}', space=sflag, size = 0x4, scoped, tag = 'scoped memory for _lambda_.15']
    %9 = vsyncpa [#allocation4], 0
    // Predicated region
    $region2: #{_lambda_.15} parent=1 // pred_check
      _
    $region3: #{_lambda_.15} parent=1 // pred_check_branch
      %11 = sbr.rel (0) target = $region5
    $region4: #{_lambda_.15} parent=1 // pred_region
      _
    $region5: #{_lambda_.15} parent=1 // pred_fallthru
      _
    // Predicated region
    $region6: #{_lambda_.15} parent=1 // pred_check
      _
    $region7: #{_lambda_.15} parent=1 // pred_check_branch
      %13 = sbr.rel (0) target = $region9
    $region8: #{_lambda_.15} parent=1 // pred_region
      %15 = vsyncadd [#allocation4], 0
      %s16 = sshll.u32 %s1, 4
      %s17 = int_to_ptr.hbm [resolvable:$true] %s16
      %s18 = sshll.u32 [#allocation3], 4
      %s19 = int_to_ptr.vmem [resolvable:$true] %s18
      %24 = dma.hbm_to_vmem [thread:$0]  %s17, 4096, %s19, [#allocation4], 64, 64, 4
    $region9: #{_lambda_.15} parent=1 // pred_fallthru
      _
    // Predicated region
    $region10: #{_lambda_.15} parent=1 // pred_check
      _
    $region11: #{_lambda_.15} parent=1 // pred_check_branch
      %26 = sbr.rel (0) target = $region13
    $region12: #{_lambda_.15} parent=1 // pred_region
      _
    $region13: #{_lambda_.15} parent=1 // pred_fallthru
      _
    // Predicated region
    $region14: #{_lambda_.15} parent=1 // pred_check
      _
    $region15: #{_lambda_.15} parent=1 // pred_check_branch
      %28 = sbr.rel (0) target = $region17
    $region16: #{_lambda_.15} parent=1 // pred_region
      _
    $region17: #{_lambda_.15} parent=1 // pred_fallthru
      _
    // Predicated region
    $region18: #{_lambda_.15} parent=1 // pred_check
      _
    $region19: #{_lambda_.15} parent=1 // pred_check_branch
      %30 = sbr.rel (0) target = $region21
    $region20: #{_lambda_.15} parent=1 // pred_region
      %32 = dma.done [#allocation4], 4096
    $region21: #{_lambda_.15} parent=1 // pred_fallthru
      _
    %p33 = scmp.eq.s32.totalorder 0, 0
    // Predicated region
    $region22: #{_lambda_.15} parent=1 // pred_check
      %p34 = pneg %p33
    $region23: #{_lambda_.15} parent=1 // pred_check_branch
      %36 = sbr.rel (%p34) target = $region25
    $region24: #{_lambda_.15} parent=1 // pred_region
      %37 = vst [vmem:[#allocation2] sm:$0xff] 0.0
      %38 = vst [vmem:[#allocation2 + $0x8] sm:$0xff] 0.0
    $region25: #{_lambda_.15} parent=1 // pred_fallthru
      _
    %v39 = vld [vmem:[#allocation2] sm:$0xff]
    %v40 = vld [vmem:[#allocation2 + $0x8] sm:$0xff]
    %v41 = vld [vmem:[%s0] sm:$0xff]
    %v42 = vld [vmem:[%s0 + $0x8] sm:$0xff]
    %v43 = vld [vmem:[%s0 + $0x10] sm:$0xff]
    %v44 = vld [vmem:[%s0 + $0x18] sm:$0xff]
    %v45 = vld [vmem:[#allocation3] sm:$0xf]
    %v46 = vld [vmem:[#allocation3 + $0x4] sm:$0xf]
    %v47 = vld [vmem:[#allocation3 + $0x8] sm:$0xf]
    %v48 = vld [vmem:[#allocation3 + $0xc] sm:$0xf]
    %v49 = vld [vmem:[#allocation3 + $0x10] sm:$0xf]
    %v50 = vld [vmem:[#allocation3 + $0x14] sm:$0xf]
    %v51 = vld [vmem:[#allocation3 + $0x18] sm:$0xf]
    %v52 = vld [vmem:[#allocation3 + $0x1c] sm:$0xf]
    %v53 = vld [vmem:[#allocation3 + $0x20] sm:$0xf]
    %v54 = vld [vmem:[#allocation3 + $0x24] sm:$0xf]
    %v55 = vld [vmem:[#allocation3 + $0x28] sm:$0xf]
    %v56 = vld [vmem:[#allocation3 + $0x2c] sm:$0xf]
    %v57 = vld [vmem:[#allocation3 + $0x30] sm:$0xf]
    %v58 = vld [vmem:[#allocation3 + $0x34] sm:$0xf]
    %v59 = vld [vmem:[#allocation3 + $0x38] sm:$0xf]
    %v60 = vld [vmem:[#allocation3 + $0x3c] sm:$0xf]
    %v61 = vld [vmem:[#allocation3 + $0x40] sm:$0xf]
    %v62 = vld [vmem:[#allocation3 + $0x44] sm:$0xf]
    %v63 = vld [vmem:[#allocation3 + $0x48] sm:$0xf]
    %v64 = vld [vmem:[#allocation3 + $0x4c] sm:$0xf]
    %v65 = vld [vmem:[#allocation3 + $0x50] sm:$0xf]
    %v66 = vld [vmem:[#allocation3 + $0x54] sm:$0xf]
    %v67 = vld [vmem:[#allocation3 + $0x58] sm:$0xf]
    %v68 = vld [vmem:[#allocation3 + $0x5c] sm:$0xf]
    %v69 = vld [vmem:[#allocation3 + $0x60] sm:$0xf]
    %v70 = vld [vmem:[#allocation3 + $0x64] sm:$0xf]
    %v71 = vld [vmem:[#allocation3 + $0x68] sm:$0xf]
    %v72 = vld [vmem:[#allocation3 + $0x6c] sm:$0xf]
    %v73 = vld [vmem:[#allocation3 + $0x70] sm:$0xf]
    %v74 = vld [vmem:[#allocation3 + $0x74] sm:$0xf]
    %v75 = vld [vmem:[#allocation3 + $0x78] sm:$0xf]
    %v76 = vld [vmem:[#allocation3 + $0x7c] sm:$0xf]
    %v77 = vld [vmem:[#allocation3 + $0x80] sm:$0xf]
    %v78 = vld [vmem:[#allocation3 + $0x84] sm:$0xf]
    %v79 = vld [vmem:[#allocation3 + $0x88] sm:$0xf]
    %v80 = vld [vmem:[#allocation3 + $0x8c] sm:$0xf]
    %v81 = vld [vmem:[#allocation3 + $0x90] sm:$0xf]
    %v82 = vld [vmem:[#allocation3 + $0x94] sm:$0xf]
    %v83 = vld [vmem:[#allocation3 + $0x98] sm:$0xf]
    %v84 = vld [vmem:[#allocation3 + $0x9c] sm:$0xf]
    %v85 = vld [vmem:[#allocation3 + $0xa0] sm:$0xf]
    %v86 = vld [vmem:[#allocation3 + $0xa4] sm:$0xf]
    %v87 = vld [vmem:[#allocation3 + $0xa8] sm:$0xf]
    %v88 = vld [vmem:[#allocation3 + $0xac] sm:$0xf]
    %v89 = vld [vmem:[#allocation3 + $0xb0] sm:$0xf]
    %v90 = vld [vmem:[#allocation3 + $0xb4] sm:$0xf]
    %v91 = vld [vmem:[#allocation3 + $0xb8] sm:$0xf]
    %v92 = vld [vmem:[#allocation3 + $0xbc] sm:$0xf]
    %v93 = vld [vmem:[#allocation3 + $0xc0] sm:$0xf]
    %v94 = vld [vmem:[#allocation3 + $0xc4] sm:$0xf]
    %v95 = vld [vmem:[#allocation3 + $0xc8] sm:$0xf]
    %v96 = vld [vmem:[#allocation3 + $0xcc] sm:$0xf]
    %v97 = vld [vmem:[#allocation3 + $0xd0] sm:$0xf]
    %v98 = vld [vmem:[#allocation3 + $0xd4] sm:$0xf]
    %v99 = vld [vmem:[#allocation3 + $0xd8] sm:$0xf]
    %v100 = vld [vmem:[#allocation3 + $0xdc] sm:$0xf]
    %v101 = vld [vmem:[#allocation3 + $0xe0] sm:$0xf]
    %v102 = vld [vmem:[#allocation3 + $0xe4] sm:$0xf]
    %v103 = vld [vmem:[#allocation3 + $0xe8] sm:$0xf]
    %v104 = vld [vmem:[#allocation3 + $0xec] sm:$0xf]
    %v105 = vld [vmem:[#allocation3 + $0xf0] sm:$0xf]
    %v106 = vld [vmem:[#allocation3 + $0xf4] sm:$0xf]
    %v107 = vld [vmem:[#allocation3 + $0xf8] sm:$0xf]
    %v108 = vld [vmem:[#allocation3 + $0xfc] sm:$0xf]
    %v113 = vunpack.c.l.b16 %v41
    %v114 = vunpack.c.h.b16 %v41
    %v115 = vunpack.c.l.b16 %v42
    %v116 = vunpack.c.h.b16 %v42
    %v117 = vunpack.c.l.b16 %v43
    %v118 = vunpack.c.h.b16 %v43
    %v119 = vunpack.c.l.b16 %v44
    %v120 = vunpack.c.h.b16 %v44
    %v121 = vpack.c.b16 %v117, %v113
    %v122 = vpack.c.b16 %v118, %v114
    %v123 = vpack.c.b16 %v119, %v115
    %v124 = vpack.c.b16 %v120, %v116
    %v193 = vunpack.c.l.b16 %v45
    %v194 = vunpack.c.l.b16 %v46
    %v195 = vunpack.c.l.b16 %v47
    %v196 = vunpack.c.l.b16 %v48
    %v197 = vunpack.c.l.b16 %v49
    %v198 = vunpack.c.l.b16 %v50
    %v199 = vunpack.c.l.b16 %v51
    %v200 = vunpack.c.l.b16 %v52
    %v201 = vunpack.c.l.b16 %v53
    %v202 = vunpack.c.l.b16 %v54
    %v203 = vunpack.c.l.b16 %v55
    %v204 = vunpack.c.l.b16 %v56
    %v205 = vunpack.c.l.b16 %v57
    %v206 = vunpack.c.l.b16 %v58
    %v207 = vunpack.c.l.b16 %v59
    %v208 = vunpack.c.l.b16 %v60
    %v209 = vunpack.c.l.b16 %v61
    %v210 = vunpack.c.l.b16 %v62
    %v211 = vunpack.c.l.b16 %v63
    %v212 = vunpack.c.l.b16 %v64
    %v213 = vunpack.c.l.b16 %v65
    %v214 = vunpack.c.l.b16 %v66
    %v215 = vunpack.c.l.b16 %v67
    %v216 = vunpack.c.l.b16 %v68
    %v217 = vunpack.c.l.b16 %v69
    %v218 = vunpack.c.l.b16 %v70
    %v219 = vunpack.c.l.b16 %v71
    %v220 = vunpack.c.l.b16 %v72
    %v221 = vunpack.c.l.b16 %v73
    %v222 = vunpack.c.l.b16 %v74
    %v223 = vunpack.c.l.b16 %v75
    %v224 = vunpack.c.l.b16 %v76
    %v225 = vunpack.c.l.b16 %v77
    %v226 = vunpack.c.l.b16 %v78
    %v227 = vunpack.c.l.b16 %v79
    %v228 = vunpack.c.l.b16 %v80
    %v229 = vunpack.c.l.b16 %v81
    %v230 = vunpack.c.l.b16 %v82
    %v231 = vunpack.c.l.b16 %v83
    %v232 = vunpack.c.l.b16 %v84
    %v233 = vunpack.c.l.b16 %v85
    %v234 = vunpack.c.l.b16 %v86
    %v235 = vunpack.c.l.b16 %v87
    %v236 = vunpack.c.l.b16 %v88
    %v237 = vunpack.c.l.b16 %v89
    %v238 = vunpack.c.l.b16 %v90
    %v239 = vunpack.c.l.b16 %v91
    %v240 = vunpack.c.l.b16 %v92
    %v241 = vunpack.c.l.b16 %v93
    %v242 = vunpack.c.l.b16 %v94
    %v243 = vunpack.c.l.b16 %v95
    %v244 = vunpack.c.l.b16 %v96
    %v245 = vunpack.c.l.b16 %v97
    %v246 = vunpack.c.l.b16 %v98
    %v247 = vunpack.c.l.b16 %v99
    %v248 = vunpack.c.l.b16 %v100
    %v249 = vunpack.c.l.b16 %v101
    %v250 = vunpack.c.l.b16 %v102
    %v251 = vunpack.c.l.b16 %v103
    %v252 = vunpack.c.l.b16 %v104
    %v253 = vunpack.c.l.b16 %v105
    %v254 = vunpack.c.l.b16 %v106
    %v255 = vunpack.c.l.b16 %v107
    %v256 = vunpack.c.l.b16 %v108
    %v257 = vpack.c.b16 %v194, %v193
    %v258 = vpack.c.b16 %v196, %v195
    %v259 = vpack.c.b16 %v198, %v197
    %v260 = vpack.c.b16 %v200, %v199
    %v261 = vpack.c.b16 %v202, %v201
    %v262 = vpack.c.b16 %v204, %v203
    %v263 = vpack.c.b16 %v206, %v205
    %v264 = vpack.c.b16 %v208, %v207
    %v265 = vpack.c.b16 %v210, %v209
    %v266 = vpack.c.b16 %v212, %v211
    %v267 = vpack.c.b16 %v214, %v213
    %v268 = vpack.c.b16 %v216, %v215
    %v269 = vpack.c.b16 %v218, %v217
    %v270 = vpack.c.b16 %v220, %v219
    %v271 = vpack.c.b16 %v222, %v221
    %v272 = vpack.c.b16 %v224, %v223
    %v273 = vpack.c.b16 %v226, %v225
    %v274 = vpack.c.b16 %v228, %v227
    %v275 = vpack.c.b16 %v230, %v229
    %v276 = vpack.c.b16 %v232, %v231
    %v277 = vpack.c.b16 %v234, %v233
    %v278 = vpack.c.b16 %v236, %v235
    %v279 = vpack.c.b16 %v238, %v237
    %v280 = vpack.c.b16 %v240, %v239
    %v281 = vpack.c.b16 %v242, %v241
    %v282 = vpack.c.b16 %v244, %v243
    %v283 = vpack.c.b16 %v246, %v245
    %v284 = vpack.c.b16 %v248, %v247
    %v285 = vpack.c.b16 %v250, %v249
    %v286 = vpack.c.b16 %v252, %v251
    %v287 = vpack.c.b16 %v254, %v253
    %v288 = vpack.c.b16 %v256, %v255
    %321 = vmatpush.bf16.msra.mxu0 %v264
    %322 = vmatpush.bf16.msra.mxu0 %v263
    %323 = vmatpush.bf16.msra.mxu0 %v262
    %324 = vmatpush.bf16.msra.mxu0 %v261
    %325 = vmatpush.bf16.msra.mxu0 %v260
    %326 = vmatpush.bf16.msra.mxu0 %v259
    %327 = vmatpush.bf16.msra.mxu0 %v258
    %328 = vmatpush.bf16.msra.mxu0 %v257
    %329 = vmatmul.bf16.gmra.mxu0 %v121
    %v330 = vpop.f32.mrf.mxu0
    %v331 = vadd.f32 0.0, %v330
    %v332 = vpop.f32.mrf.mxu0
    %v333 = vadd.f32 0.0, %v332
    %334 = vdwg.mxu0
    %335 = vmatpush.bf16.msra.mxu0 %v272
    %336 = vmatpush.bf16.msra.mxu0 %v271
    %337 = vmatpush.bf16.msra.mxu0 %v270
    %338 = vmatpush.bf16.msra.mxu0 %v269
    %339 = vmatpush.bf16.msra.mxu0 %v268
    %340 = vmatpush.bf16.msra.mxu0 %v267
    %341 = vmatpush.bf16.msra.mxu0 %v266
    %342 = vmatpush.bf16.msra.mxu0 %v265
    %343 = vmatmul.bf16.gmra.mxu0 %v122
    %v344 = vpop.f32.mrf.mxu0
    %v345 = vadd.f32 %v331, %v344
    %v346 = vpop.f32.mrf.mxu0
    %v347 = vadd.f32 %v333, %v346
    %348 = vdwg.mxu0
    %349 = vmatpush.bf16.msra.mxu0 %v280
    %350 = vmatpush.bf16.msra.mxu0 %v279
    %351 = vmatpush.bf16.msra.mxu0 %v278
    %352 = vmatpush.bf16.msra.mxu0 %v277
    %353 = vmatpush.bf16.msra.mxu0 %v276
    %354 = vmatpush.bf16.msra.mxu0 %v275
    %355 = vmatpush.bf16.msra.mxu0 %v274
    %356 = vmatpush.bf16.msra.mxu0 %v273
    %357 = vmatmul.bf16.gmra.mxu0 %v123
    %v358 = vpop.f32.mrf.mxu0
    %v359 = vadd.f32 %v345, %v358
    %v360 = vpop.f32.mrf.mxu0
    %v361 = vadd.f32 %v347, %v360
    %362 = vdwg.mxu0
    %363 = vmatpush.bf16.msra.mxu0 %v288
    %364 = vmatpush.bf16.msra.mxu0 %v287
    %365 = vmatpush.bf16.msra.mxu0 %v286
    %366 = vmatpush.bf16.msra.mxu0 %v285
    %367 = vmatpush.bf16.msra.mxu0 %v284
    %368 = vmatpush.bf16.msra.mxu0 %v283
    %369 = vmatpush.bf16.msra.mxu0 %v282
    %370 = vmatpush.bf16.msra.mxu0 %v281
    %371 = vmatmul.bf16.gmra.mxu0 %v124
    %v372 = vpop.f32.mrf.mxu0
    %v373 = vadd.f32 %v359, %v372
    %v374 = vpop.f32.mrf.mxu0
    %v375 = vadd.f32 %v361, %v374
    %376 = vdwg.mxu0
    %v377 = vadd.f32 %v39, %v373
    %v378 = vadd.f32 %v40, %v375
    %379 = vst [vmem:[#allocation2] sm:$0xff] %v377
    %380 = vst [vmem:[#allocation2 + $0x8] sm:$0xff] %v378
    // Predicated region
    $region26: #{_lambda_.15} parent=1 // pred_check
      %p381 = pneg %p33
    $region27: #{_lambda_.15} parent=1 // pred_check_branch
      %383 = sbr.rel (%p381) target = $region29
    $region28: #{_lambda_.15} parent=1 // pred_region
      %v384 = vld [vmem:[#allocation2] sm:$0xff]
      %v385 = vld [vmem:[#allocation2 + $0x8] sm:$0xff]
      %v386 = vld [vmem:[%s2] sm:$0x1]
      %v388 = vperm.slane %v386, 0
      %v390 = vadd.f32 %v384, %v388
      %v391 = vadd.f32 %v385, %v388
      %v392 = vld [vmem:[%s3] sm:$0xff]
      %v393 = vld [vmem:[%s3 + $0x8] sm:$0xff]
      %v394 = vadd.f32 %v390, %v392
      %v395 = vadd.f32 %v391, %v393
      %396 = vst [vmem:[%s4] sm:$0xff] %v394
      %397 = vst [vmem:[%s4 + $0x8] sm:$0xff] %v395
    $region29: #{_lambda_.15} parent=1 // pred_fallthru
      _
    // Predicated region
    $region30: #{_lambda_.15} parent=1 // pred_check
      _
    $region31: #{_lambda_.15} parent=1 // pred_check_branch
      %399 = sbr.rel (0) target = $region33
    $region32: #{_lambda_.15} parent=1 // pred_region
      _
    $region33: #{_lambda_.15} parent=1 // pred_fallthru
      _
    // Predicated region
    $region34: #{_lambda_.15} parent=1 // pred_check
      _
    $region35: #{_lambda_.15} parent=1 // pred_check_branch
      %401 = sbr.rel (0) target = $region37
    $region36: #{_lambda_.15} parent=1 // pred_region
      _
    $region37: #{_lambda_.15} parent=1 // pred_fallthru
      _
    %402 = vsyncpa [#allocation4], 1

// kernel: _lambda_.21
$region0: #{_lambda_.21}
  #allocation0 [shape = 'u32[]', space=smem, size = 0x4, offset = 0x4, fixed_abs, tag = 'smem constant byte address 0x4 - core index']
  #allocation1 [shape = 'u32[72,128]{1,0:T(1,128)}', space=vmem, size = 0x9000, scoped, tag = 'internal scratch']
  #allocation2 [shape = 'bf16[16,128]{1,0:T(8,128)(2,1)}', space=vmem, size = 0x1000, scoped, tag = 'scratch operand']
  %s0 = inlined_call_operand.vmem [shape: f32[16,128], index: 0, kind: input, shape index: {}]
  %s1 = inlined_call_operand.vmem [shape: f32[1,128], index: 1, kind: input, shape index: {}]
  %s2 = inlined_call_operand.vmem [shape: f32[1,128], index: 2, kind: input, shape index: {}]
  %s3 = inlined_call_operand.vmem [shape: bf16[256,128], index: 3, kind: input, shape index: {}]
  %s4 = inlined_call_operand.hbm [shape: f32[16,256], index: 4, kind: output, shape index: {}]
  %s5 = sld [smem:[#allocation0]]
  $region30: #{_lambda_.21} parent=0
    _
  %s7 = ssub.s32 1, %s5
  %s8 = scalar_select 0, %s7, %s5
  $region1: #{_lambda_.21} parent=0
    #allocation3 [shape = 'u8[16384]{0}', space=vmem, size = 0x4000, scoped, tag = 'output window, operand 0, single buffered']
    #allocation4 [shape = 's32[1]{0}', space=sflag, size = 0x4, scoped, tag = 'scoped memory for _lambda_.21']
    %9 = vsyncpa [#allocation4], 0
    // Predicated region
    $region2: #{_lambda_.21} parent=1 // pred_check
      _
    $region3: #{_lambda_.21} parent=1 // pred_check_branch
      %11 = sbr.rel (0) target = $region5
    $region4: #{_lambda_.21} parent=1 // pred_region
      _
    $region5: #{_lambda_.21} parent=1 // pred_fallthru
      _
    // Predicated region
    $region6: #{_lambda_.21} parent=1 // pred_check
      _
    $region7: #{_lambda_.21} parent=1 // pred_check_branch
      %13 = sbr.rel (0) target = $region9
    $region8: #{_lambda_.21} parent=1 // pred_region
      _
    $region9: #{_lambda_.21} parent=1 // pred_fallthru
      _
    // Predicated region
    $region10: #{_lambda_.21} parent=1 // pred_check
      _
    $region11: #{_lambda_.21} parent=1 // pred_check_branch
      %15 = sbr.rel (0) target = $region13
    $region12: #{_lambda_.21} parent=1 // pred_region
      _
    $region13: #{_lambda_.21} parent=1 // pred_fallthru
      _
    // Predicated region
    $region14: #{_lambda_.21} parent=1 // pred_check
      _
    $region15: #{_lambda_.21} parent=1 // pred_check_branch
      %17 = sbr.rel (0) target = $region17
    $region16: #{_lambda_.21} parent=1 // pred_region
      _
    $region17: #{_lambda_.21} parent=1 // pred_fallthru
      _
    %p18 = scmp.eq.s32.totalorder 0, 0
    // Predicated region
    $region18: #{_lambda_.21} parent=1 // pred_check
      %p19 = pneg %p18
    $region19: #{_lambda_.21} parent=1 // pred_check_branch
      %21 = sbr.rel (%p19) target = $region21
    $region20: #{_lambda_.21} parent=1 // pred_region
      %v22 = vld [vmem:[%s0] sm:$0xff]
      %v23 = vld [vmem:[%s0 + $0x8] sm:$0xff]
      %24 = vadd.xlane.f32.xlu0 %v22
      %v25 = vpop.xlane.xlu0 %24
      %26 = vadd.xlane.f32.xlu0 %v23
      %v27 = vpop.xlane.xlu0 %26
      %v28 = vrcp.pop 128.0
      %v29 = vmul.f32 128.0, %v28
      %v30 = vsub.f32 1.0, %v29
      %v31 = vmul.f32 %v28, %v30
      %v32 = vadd.f32 %v28, %v31
      %vm33 = vweird.f32 %v28
      %v34 = vsel %vm33, %v28, %v32
      %v35 = vmul.f32 %v25, %v34
      %v36 = vmul.f32 %v27, %v34
      %v37 = vsub.f32 %v22, %v35
      %v38 = vsub.f32 %v23, %v36
      %v39 = vmul.f32 %v37, %v37
      %v40 = vmul.f32 %v38, %v38
      %41 = vadd.xlane.f32.xlu0 %v39
      %v42 = vpop.xlane.xlu0 %41
      %43 = vadd.xlane.f32.xlu0 %v40
      %v44 = vpop.xlane.xlu0 %43
      %v45 = vmul.f32 %v42, %v34
      %v46 = vmul.f32 %v44, %v34
      %v47 = vadd.f32 %v45, 1e-05
      %v48 = vadd.f32 %v46, 1e-05
      %v49 = vrsqrt.pop %v47
      %v50 = vmul.f32 %v49, %v47
      %v51 = vmul.f32 %v50, %v49
      %v52 = vmul.f32 0.5, %v51
      %v53 = vsub.f32 1.5, %v52
      %v54 = vmul.f32 %v49, %v53
      %vm55 = vweird.f32 %v47
      %vm56 = vweird.f32 %v49
      %vm57 = vmor %vm55, %vm56
      %v58 = vsel %vm57, %v49, %v54
      %v59 = vrsqrt.pop %v48
      %v60 = vmul.f32 %v59, %v48
      %v61 = vmul.f32 %v60, %v59
      %v62 = vmul.f32 0.5, %v61
      %v63 = vsub.f32 1.5, %v62
      %v64 = vmul.f32 %v59, %v63
      %vm65 = vweird.f32 %v48
      %vm66 = vweird.f32 %v59
      %vm67 = vmor %vm65, %vm66
      %v68 = vsel %vm67, %v59, %v64
      %v69 = vmul.f32 %v37, %v58
      %v70 = vmul.f32 %v38, %v68
      %v71 = vld [vmem:[%s1] sm:$0x1]
      %v73 = vperm.slane %v71, 0
      %v75 = vmul.f32 %v69, %v73
      %v76 = vmul.f32 %v70, %v73
      %v77 = vld [vmem:[%s2] sm:$0x1]
      %v79 = vperm.slane %v77, 0
      %v81 = vadd.f32 %v75, %v79
      %v82 = vadd.f32 %v76, %v79
      %v83 = vpack.c.bf16 %v81, %v81
      %v84 = vpack.c.bf16 %v82, %v82
      %85 = vst [vmem:[#allocation2] sm:$0xf] %v83
      %86 = vst [vmem:[#allocation2 + $0x4] sm:$0xf] %v84
    $region21: #{_lambda_.21} parent=1 // pred_fallthru
      _
    %v87 = vld [vmem:[#allocation2] sm:$0xf]
    %v88 = vld [vmem:[#allocation2 + $0x4] sm:$0xf]
    %v89 = vld [vmem:[%s3] sm:$0xf]
    %v90 = vld [vmem:[%s3 + $0x4] sm:$0xf]
    %v91 = vld [vmem:[%s3 + $0x8] sm:$0xf]
    %v92 = vld [vmem:[%s3 + $0xc] sm:$0xf]
    %v93 = vld [vmem:[%s3 + $0x10] sm:$0xf]
    %v94 = vld [vmem:[%s3 + $0x14] sm:$0xf]
    %v95 = vld [vmem:[%s3 + $0x18] sm:$0xf]
    %v96 = vld [vmem:[%s3 + $0x1c] sm:$0xf]
    %v97 = vld [vmem:[%s3 + $0x20] sm:$0xf]
    %v98 = vld [vmem:[%s3 + $0x24] sm:$0xf]
    %v99 = vld [vmem:[%s3 + $0x28] sm:$0xf]
    %v100 = vld [vmem:[%s3 + $0x2c] sm:$0xf]
    %v101 = vld [vmem:[%s3 + $0x30] sm:$0xf]
    %v102 = vld [vmem:[%s3 + $0x34] sm:$0xf]
    %v103 = vld [vmem:[%s3 + $0x38] sm:$0xf]
    %v104 = vld [vmem:[%s3 + $0x3c] sm:$0xf]
    %v105 = vld [vmem:[%s3 + $0x40] sm:$0xf]
    %v106 = vld [vmem:[%s3 + $0x44] sm:$0xf]
    %v107 = vld [vmem:[%s3 + $0x48] sm:$0xf]
    %v108 = vld [vmem:[%s3 + $0x4c] sm:$0xf]
    %v109 = vld [vmem:[%s3 + $0x50] sm:$0xf]
    %v110 = vld [vmem:[%s3 + $0x54] sm:$0xf]
    %v111 = vld [vmem:[%s3 + $0x58] sm:$0xf]
    %v112 = vld [vmem:[%s3 + $0x5c] sm:$0xf]
    %v113 = vld [vmem:[%s3 + $0x60] sm:$0xf]
    %v114 = vld [vmem:[%s3 + $0x64] sm:$0xf]
    %v115 = vld [vmem:[%s3 + $0x68] sm:$0xf]
    %v116 = vld [vmem:[%s3 + $0x6c] sm:$0xf]
    %v117 = vld [vmem:[%s3 + $0x70] sm:$0xf]
    %v118 = vld [vmem:[%s3 + $0x74] sm:$0xf]
    %v119 = vld [vmem:[%s3 + $0x78] sm:$0xf]
    %v120 = vld [vmem:[%s3 + $0x7c] sm:$0xf]
    %v123 = vunpack.c.l.b16 %v87
    %v124 = vunpack.c.l.b16 %v88
    %v125 = vpack.c.b16 %v124, %v123
    %v159 = vunpack.c.l.b16 %v89
    %v160 = vunpack.c.l.b16 %v90
    %v161 = vunpack.c.l.b16 %v91
    %v162 = vunpack.c.l.b16 %v92
    %v163 = vunpack.c.l.b16 %v93
    %v164 = vunpack.c.l.b16 %v94
    %v165 = vunpack.c.l.b16 %v95
    %v166 = vunpack.c.l.b16 %v96
    %v167 = vunpack.c.l.b16 %v97
    %v168 = vunpack.c.l.b16 %v98
    %v169 = vunpack.c.l.b16 %v99
    %v170 = vunpack.c.l.b16 %v100
    %v171 = vunpack.c.l.b16 %v101
    %v172 = vunpack.c.l.b16 %v102
    %v173 = vunpack.c.l.b16 %v103
    %v174 = vunpack.c.l.b16 %v104
    %v175 = vunpack.c.l.b16 %v105
    %v176 = vunpack.c.l.b16 %v106
    %v177 = vunpack.c.l.b16 %v107
    %v178 = vunpack.c.l.b16 %v108
    %v179 = vunpack.c.l.b16 %v109
    %v180 = vunpack.c.l.b16 %v110
    %v181 = vunpack.c.l.b16 %v111
    %v182 = vunpack.c.l.b16 %v112
    %v183 = vunpack.c.l.b16 %v113
    %v184 = vunpack.c.l.b16 %v114
    %v185 = vunpack.c.l.b16 %v115
    %v186 = vunpack.c.l.b16 %v116
    %v187 = vunpack.c.l.b16 %v117
    %v188 = vunpack.c.l.b16 %v118
    %v189 = vunpack.c.l.b16 %v119
    %v190 = vunpack.c.l.b16 %v120
    %v191 = vpack.c.b16 %v160, %v159
    %v192 = vpack.c.b16 %v162, %v161
    %v193 = vpack.c.b16 %v164, %v163
    %v194 = vpack.c.b16 %v166, %v165
    %v195 = vpack.c.b16 %v168, %v167
    %v196 = vpack.c.b16 %v170, %v169
    %v197 = vpack.c.b16 %v172, %v171
    %v198 = vpack.c.b16 %v174, %v173
    %v199 = vpack.c.b16 %v176, %v175
    %v200 = vpack.c.b16 %v178, %v177
    %v201 = vpack.c.b16 %v180, %v179
    %v202 = vpack.c.b16 %v182, %v181
    %v203 = vpack.c.b16 %v184, %v183
    %v204 = vpack.c.b16 %v186, %v185
    %v205 = vpack.c.b16 %v188, %v187
    %v206 = vpack.c.b16 %v190, %v189
    %223 = vmatpush.bf16.xpose.msra.mxu0 %v198
    %224 = vmatpush.bf16.xpose.msra.mxu0 %v197
    %225 = vmatpush.bf16.xpose.msra.mxu0 %v196
    %226 = vmatpush.bf16.xpose.msra.mxu0 %v195
    %227 = vmatpush.bf16.xpose.msra.mxu0 %v194
    %228 = vmatpush.bf16.xpose.msra.mxu0 %v193
    %229 = vmatpush.bf16.xpose.msra.mxu0 %v192
    %230 = vmatpush.bf16.xpose.msra.mxu0 %v191
    %231 = vmatmul.bf16.gmra.mxu0 %v125
    %v232 = vpop.f32.mrf.mxu0
    %v233 = vadd.f32 0.0, %v232
    %v234 = vpop.f32.mrf.mxu0
    %v235 = vadd.f32 0.0, %v234
    %236 = vdwg.mxu0
    %237 = vmatpush.bf16.xpose.msra.mxu0 %v206
    %238 = vmatpush.bf16.xpose.msra.mxu0 %v205
    %239 = vmatpush.bf16.xpose.msra.mxu0 %v204
    %240 = vmatpush.bf16.xpose.msra.mxu0 %v203
    %241 = vmatpush.bf16.xpose.msra.mxu0 %v202
    %242 = vmatpush.bf16.xpose.msra.mxu0 %v201
    %243 = vmatpush.bf16.xpose.msra.mxu0 %v200
    %244 = vmatpush.bf16.xpose.msra.mxu0 %v199
    %245 = vmatmul.bf16.gmra.mxu0 %v125
    %v246 = vpop.f32.mrf.mxu0
    %v247 = vadd.f32 0.0, %v246
    %v248 = vpop.f32.mrf.mxu0
    %v249 = vadd.f32 0.0, %v248
    %250 = vdwg.mxu0
    %251 = vst [vmem:[#allocation3] sm:$0xff] %v233
    %252 = vst [vmem:[#allocation3 + $0x8] sm:$0xff] %v247
    %253 = vst [vmem:[#allocation3 + $0x10] sm:$0xff] %v235
    %254 = vst [vmem:[#allocation3 + $0x18] sm:$0xff] %v249
    // Predicated region
    $region22: #{_lambda_.21} parent=1 // pred_check
      _
    $region23: #{_lambda_.21} parent=1 // pred_check_branch
      %256 = sbr.rel (0) target = $region25
    $region24: #{_lambda_.21} parent=1 // pred_region
      %258 = vsyncadd [#allocation4], 0
      %s259 = sshll.u32 [#allocation3], 4
      %s260 = int_to_ptr.vmem [resolvable:$true] %s259
      %s261 = sshll.u32 %s4, 4
      %s262 = int_to_ptr.hbm [resolvable:$true] %s261
      %267 = dma.vmem_to_hbm [thread:$0]  %s260, 512, %s262, [#allocation4], 256, 256, 16
    $region25: #{_lambda_.21} parent=1 // pred_fallthru
      _
    // Predicated region
    $region26: #{_lambda_.21} parent=1 // pred_check
      _
    $region27: #{_lambda_.21} parent=1 // pred_check_branch
      %269 = sbr.rel (0) target = $region29
    $region28: #{_lambda_.21} parent=1 // pred_region
      %271 = dma.done [#allocation4], 512
    $region29: #{_lambda_.21} parent=1 // pred_fallthru
      _
    %272 = vsyncpa [#allocation4], 1

</llo_original>
